<compile_context>
chip_gen: v6e
topology: v6e:2x2x1
jax: 0.10.0
libtpu: 0.0.40
codegen_flags: <defaults>
</compile_context>

<pallas_src>
import jax
import jax.numpy as jnp
from jax import lax
from jax.experimental import pallas as pl
from jax.experimental.pallas import tpu as pltpu

# ---------------- model hyper-parameters (cfg.model) ----------------
F_HID = 32          # hidden_irreps scalar channels ("32x0e")
N_BASIS = 8         # num_edge_bases
LMAX = 2            # spherical harmonics up to l=2 -> dim 9
SH_DIM = (LMAX + 1) ** 2
N_MSG = 2           # message_passes
MLP_DIM = 32        # inter_MLP_dim
R_OUT = 21          # readout_irreps '2x0e+2x2e+1x4e' -> 21 components
MANDEL = 36         # 6x6 Mandel matrix, flattened
MAX_L_A = 2.0       # max_edge_L_a
MAX_R_A = 0.5       # max_edge_r_a   (uses the `max_edge_r_a` branch)
AGG_NORM = 10.0     # agg_norm_const
EPS_SPD = 1e-6


def _pick_edge_tile(e_pad):
    """e_pad is always a multiple of 128.  Pick the largest tile in {512,256,128}
    that still gives >= 2 pipelined grid steps; otherwise a single full tile."""
    for t in (512, 256, 128):
        if e_pad % t == 0 and e_pad // t >= 2:
            return t
    return e_pad


# ---------------- the fused GNN kernel ----------------
def _gnn_kernel(nattr_ref, embw_ref, embb_ref,          # node embedding
                vec_ref, esc_ref, send_ref, recv_ref,   # per-edge-tile data
                batch_ref,                              # graph ids (1, N)
                w1_ref, b1_ref, w2_ref, b2_ref,         # layer-l edge MLP
                wmsg_ref, wsc_ref, bsc_ref,             # layer-l msg/skip linear
                wr1_ref, br1_ref, wr2_ref, br2_ref,     # readout MLP
                wlin_ref, blin_ref, wc_ref,             # post linear + sph->Mandel
                out_ref,                                # (G, 36) output
                nft_ref, agg_ref):                      # VMEM scratch
    l_idx = pl.program_id(0)          # layer index   (outer, sequential)
    k_idx = pl.program_id(1)          # edge tile     (inner, reduction)
    n_layers = pl.num_programs(0)
    n_tiles = pl.num_programs(1)

    n_nodes = nft_ref.shape[0]
    tile_e = vec_ref.shape[0]

    # ---- node embedding Linear(1 -> F): only at the very first grid step ----
    @pl.when(jnp.logical_and(l_idx == 0, k_idx == 0))
    def _embed():
        nft_ref[...] = nattr_ref[...] * embw_ref[...] + embb_ref[...]

    # ---- zero the per-layer message accumulator at the first edge tile ----
    @pl.when(k_idx == 0)
    def _zero_acc():
        agg_ref[...] = jnp.zeros_like(agg_ref)

    # ---- edge features for this tile (kept in registers, never stored) ----
    v = vec_ref[...]                                   # (tile_e, 3)
    x = v[:, 0:1]
    y = v[:, 1:2]
    z = v[:, 2:3]
    inv_r = lax.rsqrt(x * x + y * y + z * z + 1e-12)   # normalize=True
    x = x * inv_r
    y = y * inv_r
    z = z * inv_r
    s3 = 3.0 ** 0.5
    s5 = 5.0 ** 0.5
    s15 = 15.0 ** 0.5
    # real spherical harmonics, 'component' normalization (sum_m Y_lm^2 = 2l+1)
    sh_cols = [jnp.ones_like(x), s3 * x, s3 * y, s3 * z,
               s15 * x * y, s15 * y * z, 0.5 * s5 * (3.0 * z * z - 1.0),
               s15 * x * z, 0.5 * s15 * (x * x - y * y)]

    # e3nn soft_one_hot_linspace(..., basis='gaussian', cutoff=False)
    def gauss(val, end):
        step = end / (N_BASIS - 1)
        centers = lax.broadcasted_iota(jnp.int32, (1, N_BASIS), 1
                                       ).astype(jnp.float32) * step
        d = (val - centers) / step
        return jnp.exp(-(d * d)) / 1.12

    esc = esc_ref[...]                                  # (tile_e, 2): [L_a, r_a]
    ef = jnp.concatenate([gauss(esc[:, 0:1], MAX_L_A),
                          gauss(esc[:, 1:2], MAX_R_A)], axis=1)   # (tile_e, 16)

    # ---- gather sender features: bf16 one-hot matmul on the MXU ----
    # ghost (padded) edges have sender == n_nodes -> all-zero one-hot row.
    send_oh = (send_ref[...] ==
               lax.broadcasted_iota(jnp.int32, (tile_e, n_nodes), 1)
               ).astype(jnp.float32).astype(jnp.bfloat16)   # (tile_e, N) bf16
    gathered = jnp.dot(send_oh, nft_ref[...].astype(jnp.bfloat16),
                       preferred_element_type=jnp.float32)  # (tile_e, F) f32

    # ---- per-edge MLP producing edge weights ----
    h = jax.nn.silu(jnp.dot(ef, w1_ref[...],
                            preferred_element_type=jnp.float32) + b1_ref[...])
    w_edge = jnp.dot(h, w2_ref[...],
                     preferred_element_type=jnp.float32) + b2_ref[...]
    weighted = gathered * w_edge                        # (tile_e, F)

    # ---- fused SH-channel messages: ONE lane-dense (tile_e, SH*F) operand ----
    msgs = jnp.concatenate([weighted * c for c in sh_cols],
                           axis=1).astype(jnp.bfloat16)   # (tile_e, 288)
    # project with this layer's message weight NOW (linear => equivalent to
    # projecting the aggregate) -> accumulator is only (N, F).
    proj = jnp.dot(msgs, wmsg_ref[...].astype(jnp.bfloat16),
                   preferred_element_type=jnp.float32)     # (tile_e, F)

    # ---- scatter-add to receivers: ONE MXU matmul into the accumulator ----
    recv_ohT = (recv_ref[...] ==
                lax.broadcasted_iota(jnp.int32, (n_nodes, tile_e), 0)
                ).astype(jnp.float32).astype(jnp.bfloat16)  # (N, tile_e) bf16
    agg_ref[...] += jnp.dot(recv_ohT, proj.astype(jnp.bfloat16),
                            preferred_element_type=jnp.float32)   # (N, F)

    # ---- layer finalize: skip linear + normalized aggregate, residual update ----
    @pl.when(k_idx == n_tiles - 1)
    def _finalize():
        node_old = nft_ref[...]
        upd = (jnp.dot(node_old, wsc_ref[...],
                       preferred_element_type=jnp.float32) + bsc_ref[...]
               + agg_ref[...] * (1.0 / AGG_NORM))
        keep_res = (l_idx > 0).astype(jnp.float32)      # residual from layer 1 on
        nft_ref[...] = upd + keep_res * node_old

    # ---- readout + mean pooling + post linear + sph->Mandel (last step) ----
    @pl.when(jnp.logical_and(l_idx == n_layers - 1, k_idx == n_tiles - 1))
    def _readout():
        node = nft_ref[...]
        hh = jax.nn.silu(jnp.dot(node, wr1_ref[...],
                                 preferred_element_type=jnp.float32) + br1_ref[...])
        r = jnp.dot(hh, wr2_ref[...],
                    preferred_element_type=jnp.float32) + br2_ref[...]   # (N, 21)
        n_graphs = out_ref.shape[0]
        batT = (batch_ref[...] ==
                lax.broadcasted_iota(jnp.int32, (n_graphs, n_nodes), 0)
                ).astype(jnp.float32)                    # (G, N)
        sums = jnp.dot(batT, r, preferred_element_type=jnp.float32)
        counts = jnp.maximum(jnp.sum(batT, axis=1, keepdims=True), 1.0)  # NaN-safe
        graph_ft = sums / counts                         # mean pooling
        stiff_ft = jnp.dot(graph_ft, wlin_ref[...],
                           preferred_element_type=jnp.float32) + blin_ref[...]
        out_ref[...] = jnp.dot(stiff_ft, wc_ref[...],
                               preferred_element_type=jnp.float32)       # (G, 36)


# ---------------- parameter init (deterministic, synthetic) ----------------
def init_params(key):
    ks = jax.random.split(key, 8)

    def dense(k, fi, fo):
        return (jax.random.normal(k, (fi, fo), jnp.float32)
                / jnp.sqrt(jnp.float32(fi)))

    p = {
        "emb_w": jax.random.normal(ks[0], (1, F_HID), jnp.float32),
        "emb_b": jnp.zeros((1, F_HID), jnp.float32),
    }
    layers = []
    for i in range(N_MSG):
        kk = jax.random.split(ks[1 + i], 4)
        layers.append(dict(
            w1=dense(kk[0], 2 * N_BASIS, MLP_DIM),
            b1=jnp.zeros((1, MLP_DIM), jnp.float32),
            w2=dense(kk[1], MLP_DIM, F_HID),
            b2=jnp.zeros((1, F_HID), jnp.float32),
            wmsg=dense(kk[2], SH_DIM * F_HID, F_HID),
            wsc=dense(kk[3], F_HID, F_HID),
            bsc=jnp.zeros((1, F_HID), jnp.float32),
        ))
    p["layers"] = layers

    kk = jax.random.split(ks[4], 4)
    p["wr1"] = dense(kk[0], F_HID, F_HID)
    p["br1"] = jnp.zeros((1, F_HID), jnp.float32)
    p["wr2"] = dense(kk[1], F_HID, R_OUT)
    p["br2"] = jnp.zeros((1, R_OUT), jnp.float32)
    p["wlin"] = dense(kk[2], R_OUT, R_OUT)
    p["blin"] = jnp.zeros((1, R_OUT), jnp.float32)
    # fixed (deterministic) stand-in for Spherical_to_Cartesian + Cart_4_to_Mandel
    p["wc"] = dense(kk[3], R_OUT, MANDEL)
    return p


# ---------------- forward ----------------
def positive_lite_gnn_forward(params, batch):
    pos = batch["pos"]                              # (N, 3)
    node_attrs = batch["node_attrs"].astype(jnp.float32)     # (N, 1)
    edge_index = batch["edge_index"]                # (2, E0) int32
    shifts = batch["transformed_edge_shifts"]       # (E0, 3)
    edge_radii = batch["edge_attr"]                 # (E0, 1)
    lat_const = batch["lattice_constant_per_edge"]  # (E0, 3)
    batch_idx = batch["batch"]                      # (N,)   int32
    num_graphs = int(batch["num_graphs"])
    n_nodes = pos.shape[0]

    # --- edge geometry (XLA glue) ---
    sender0, receiver0 = edge_index[0], edge_index[1]
    vectors = pos[receiver0] - pos[sender0] + shifts
    lengths = jnp.sqrt(jnp.sum(vectors * vectors, axis=-1, keepdims=True))
    abc = jnp.power(jnp.prod(lat_const, axis=1), 1.0 / 3.0).reshape(-1, 1)
    edge_r_ = edge_radii / abc                      # max_edge_r_a branch
    edge_L_a = lengths / abc

    # duplicate edges in both directions (as in the reference forward)
    vectors = jnp.concatenate([vectors, -vectors], axis=0).astype(jnp.float32)
    edge_sc = jnp.concatenate(
        [jnp.concatenate([edge_L_a, edge_L_a], axis=0),
         jnp.concatenate([edge_r_, edge_r_], axis=0)], axis=1).astype(jnp.float32)
    sender = jnp.concatenate([sender0, receiver0], axis=0).astype(jnp.int32)
    receiver = jnp.concatenate([receiver0, sender0], axis=0).astype(jnp.int32)
    n_edges = int(sender.shape[0])

    # --- pad edges to a multiple of 128 with ghost edges (index == n_nodes,
    #     zero one-hot => zero contribution) so tiling always satisfies (8,128) ---
    e_pad = max(128, ((n_edges + 127) // 128) * 128)
    pad = e_pad - n_edges
    if pad:
        vectors = jnp.concatenate(
            [vectors, jnp.zeros((pad, 3), jnp.float32)], axis=0)
        edge_sc = jnp.concatenate(
            [edge_sc, jnp.zeros((pad, 2), jnp.float32)], axis=0)
        sender = jnp.concatenate(
            [sender, jnp.full((pad,), n_nodes, jnp.int32)], axis=0)
        receiver = jnp.concatenate(
            [receiver, jnp.full((pad,), n_nodes, jnp.int32)], axis=0)

    tile_e = _pick_edge_tile(e_pad)
    n_tiles = e_pad // tile_e

    send_col = sender.reshape(e_pad, 1)             # (E, 1) int32 (sublane-major)
    recv_row = receiver.reshape(1, e_pad)            # (1, E) int32 (lane-major)
    batch_row = batch_idx.astype(jnp.int32).reshape(1, n_nodes)

    # stack per-layer parameters along a leading "layer" axis for index_map select
    def stk(name):
        return jnp.stack([lp[name] for lp in params["layers"]])
    w1s, b1s, w2s, b2s = stk("w1"), stk("b1"), stk("w2"), stk("b2")
    wmsgs, wscs, bscs = stk("wmsg"), stk("wsc"), stk("bsc")

    def full_spec(shape):
        n = len(shape)
        return pl.BlockSpec(shape, lambda l, k, n=n: (0,) * n)

    def edge_spec(ncols):
        return pl.BlockSpec((tile_e, ncols), lambda l, k: (k, 0))

    def layer_spec(trailing):
        return pl.BlockSpec((None,) + trailing, lambda l, k: (l, 0, 0))

    in_specs = [
        full_spec((n_nodes, 1)),                 # node_attrs
        full_spec((1, F_HID)),                   # emb_w
        full_spec((1, F_HID)),                   # emb_b
        edge_spec(3),                            # edge vectors
        edge_spec(2),                            # edge scalars [L_a, r_a]
        edge_spec(1),                            # sender indices
        pl.BlockSpec((1, tile_e), lambda l, k: (0, k)),   # receiver indices
        full_spec((1, n_nodes)),                 # graph ids
        layer_spec((2 * N_BASIS, MLP_DIM)),      # w1  (stacked over layers)
        layer_spec((1, MLP_DIM)),                # b1
        layer_spec((MLP_DIM, F_HID)),            # w2
        layer_spec((1, F_HID)),                  # b2
        layer_spec((SH_DIM * F_HID, F_HID)),     # wmsg
        layer_spec((F_HID, F_HID)),              # wsc
        layer_spec((1, F_HID)),                  # bsc
        full_spec((F_HID, F_HID)),               # wr1
        full_spec((1, F_HID)),                   # br1
        full_spec((F_HID, R_OUT)),               # wr2
        full_spec((1, R_OUT)),                   # br2
        full_spec((R_OUT, R_OUT)),               # wlin
        full_spec((1, R_OUT)),                   # blin
        full_spec((R_OUT, MANDEL)),              # wc
    ]

    mandel = pl.pallas_call(
        _gnn_kernel,
        out_shape=jax.ShapeDtypeStruct((num_graphs, MANDEL), jnp.float32),
        grid=(N_MSG, n_tiles),
        in_specs=in_specs,
        out_specs=pl.BlockSpec((num_graphs, MANDEL), lambda l, k: (0, 0)),
        scratch_shapes=[
            pltpu.VMEM((n_nodes, F_HID), jnp.float32),    # resident node features
            pltpu.VMEM((n_nodes, F_HID), jnp.float32),    # projected msg accumulator
        ],
        compiler_params=pltpu.CompilerParams(
            dimension_semantics=("arbitrary", "arbitrary"),
            vmem_limit_bytes=32 * 1024 * 1024),
    )(node_attrs, params["emb_w"], params["emb_b"],
      vectors, edge_sc, send_col, recv_row, batch_row,
      w1s, b1s, w2s, b2s, wmsgs, wscs, bscs,
      params["wr1"], params["br1"], params["wr2"], params["br2"],
      params["wlin"], params["blin"], params["wc"])

    # --- PositiveLayer (glue): symmetric positive-definite 6x6 per graph ---
    M = mandel.reshape(num_graphs, 6, 6)
    M = 0.5 * (M + jnp.swapaxes(M, 1, 2))
    C_pos = jnp.einsum("gij,gkj->gik", M, M) + EPS_SPD * jnp.eye(6)
    return {"stiffness": C_pos}


# ---------------- main ----------------
if __name__ == "__main__":
    key = jax.random.PRNGKey(0)
    k_par, k_pos, k_attr, k_shift, k_rad, k_lat = jax.random.split(key, 6)

    params = init_params(k_par)

    # small synthetic batch: 2 graphs x 16 nodes, 4 out-edges per node
    # -> 128 undirected / 256 directed edges -> two edge tiles of 128.
    num_graphs = 2
    nodes_per_graph = 16
    N = num_graphs * nodes_per_graph
    senders, receivers = [], []
    for g in range(num_graphs):
        base = nodes_per_graph * g
        for i in range(nodes_per_graph):
            for d in (1, 2, 3, 4):
                senders.append(base + i)
                receivers.append(base + (i + d) % nodes_per_graph)
    E0 = len(senders)  # 128

    batch = {
        "pos": jax.random.normal(k_pos, (N, 3), jnp.float32),
        "node_attrs": jax.random.normal(k_attr, (N, 1), jnp.float32),
        "edge_index": jnp.array([senders, receivers], dtype=jnp.int32),
        "transformed_edge_shifts":
            0.1 * jax.random.normal(k_shift, (E0, 3), jnp.float32),
        "edge_attr":
            0.2 + 0.1 * jax.random.uniform(k_rad, (E0, 1), jnp.float32),
        "lattice_constant_per_edge":
            0.8 + 0.4 * jax.random.uniform(k_lat, (E0, 3), jnp.float32),
        "batch": jnp.repeat(jnp.arange(num_graphs, dtype=jnp.int32),
                            nodes_per_graph),
        "num_graphs": num_graphs,
    }

    out = positive_lite_gnn_forward(params, batch)
    C = jax.block_until_ready(out["stiffness"])
    assert C.shape == (num_graphs, 6, 6)
    assert bool(jnp.all(jnp.isfinite(C)))
    print("KERNEL_OK")
</pallas_src>

<mosaic_0001>
module attributes {stable_mosaic.version = 11 : i64} {
  func.func @_gnn_kernel(%arg0: i32, %arg1: i32, %arg2: memref<32x1xf32, #tpu.memory_space<vmem>>, %arg3: memref<1x32xf32, #tpu.memory_space<vmem>>, %arg4: memref<1x32xf32, #tpu.memory_space<vmem>>, %arg5: memref<128x3xf32, #tpu.memory_space<vmem>>, %arg6: memref<128x2xf32, #tpu.memory_space<vmem>>, %arg7: memref<128x1xi32, #tpu.memory_space<vmem>>, %arg8: memref<1x128xi32, #tpu.memory_space<vmem>>, %arg9: memref<1x32xi32, #tpu.memory_space<vmem>>, %arg10: memref<1x16x32xf32, #tpu.memory_space<vmem>>, %arg11: memref<1x1x32xf32, #tpu.memory_space<vmem>>, %arg12: memref<1x32x32xf32, #tpu.memory_space<vmem>>, %arg13: memref<1x1x32xf32, #tpu.memory_space<vmem>>, %arg14: memref<1x288x32xf32, #tpu.memory_space<vmem>>, %arg15: memref<1x32x32xf32, #tpu.memory_space<vmem>>, %arg16: memref<1x1x32xf32, #tpu.memory_space<vmem>>, %arg17: memref<32x32xf32, #tpu.memory_space<vmem>>, %arg18: memref<1x32xf32, #tpu.memory_space<vmem>>, %arg19: memref<32x21xf32, #tpu.memory_space<vmem>>, %arg20: memref<1x21xf32, #tpu.memory_space<vmem>>, %arg21: memref<21x21xf32, #tpu.memory_space<vmem>>, %arg22: memref<1x21xf32, #tpu.memory_space<vmem>>, %arg23: memref<21x36xf32, #tpu.memory_space<vmem>>, %arg24: memref<2x36xf32, #tpu.memory_space<vmem>>, %arg25: memref<32x32xf32, #tpu.memory_space<vmem>>, %arg26: memref<32x32xf32, #tpu.memory_space<vmem>>) attributes {dimension_semantics = [#tpu.dimension_semantics<arbitrary>, #tpu.dimension_semantics<arbitrary>], iteration_bounds = array<i64: 2, 2>, scalar_prefetch = 0 : i64, scratch_operands = 2 : i64, tpu.core_type = #tpu.core_type<tc>, window_params = [{pipeline_mode = #tpu.pipeline_mode<synchronous>, transform_indices = @transform_0, window_bounds = array<i64: 32, 1>}, {pipeline_mode = #tpu.pipeline_mode<synchronous>, transform_indices = @transform_1, window_bounds = array<i64: 1, 32>}, {pipeline_mode = #tpu.pipeline_mode<synchronous>, transform_indices = @transform_2, window_bounds = array<i64: 1, 32>}, {transform_indices = @transform_3, window_bounds = array<i64: 128, 3>}, {transform_indices = @transform_4, window_bounds = array<i64: 128, 2>}, {transform_indices = @transform_5, window_bounds = array<i64: 128, 1>}, {transform_indices = @transform_6, window_bounds = array<i64: 1, 128>}, {pipeline_mode = #tpu.pipeline_mode<synchronous>, transform_indices = @transform_7, window_bounds = array<i64: 1, 32>}, {transform_indices = @transform_8, window_bounds = array<i64: 1, 16, 32>}, {transform_indices = @transform_9, window_bounds = array<i64: 1, 1, 32>}, {transform_indices = @transform_10, window_bounds = array<i64: 1, 32, 32>}, {transform_indices = @transform_11, window_bounds = array<i64: 1, 1, 32>}, {transform_indices = @transform_12, window_bounds = array<i64: 1, 288, 32>}, {transform_indices = @transform_13, window_bounds = array<i64: 1, 32, 32>}, {transform_indices = @transform_14, window_bounds = array<i64: 1, 1, 32>}, {pipeline_mode = #tpu.pipeline_mode<synchronous>, transform_indices = @transform_15, window_bounds = array<i64: 32, 32>}, {pipeline_mode = #tpu.pipeline_mode<synchronous>, transform_indices = @transform_16, window_bounds = array<i64: 1, 32>}, {pipeline_mode = #tpu.pipeline_mode<synchronous>, transform_indices = @transform_17, window_bounds = array<i64: 32, 21>}, {pipeline_mode = #tpu.pipeline_mode<synchronous>, transform_indices = @transform_18, window_bounds = array<i64: 1, 21>}, {pipeline_mode = #tpu.pipeline_mode<synchronous>, transform_indices = @transform_19, window_bounds = array<i64: 21, 21>}, {pipeline_mode = #tpu.pipeline_mode<synchronous>, transform_indices = @transform_20, window_bounds = array<i64: 1, 21>}, {pipeline_mode = #tpu.pipeline_mode<synchronous>, transform_indices = @transform_21, window_bounds = array<i64: 21, 36>}, {pipeline_mode = #tpu.pipeline_mode<synchronous>, transform_indices = @transform_22, window_bounds = array<i64: 2, 36>}]} {
    %c0_i32 = arith.constant 0 : i32
    %0 = arith.cmpi eq, %arg0, %c0_i32 : i32
    %c0_i32_0 = arith.constant 0 : i32
    %1 = arith.cmpi eq, %arg1, %c0_i32_0 : i32
    %2 = arith.andi %0, %1 : i1
    %3 = arith.extui %2 : i1 to i32
    %c0_i32_1 = arith.constant 0 : i32
    %4 = arith.cmpi ne, %3, %c0_i32_1 : i32
    scf.if %4 {
      %c0_61 = arith.constant 0 : index
      %c0_62 = arith.constant 0 : index
      %160 = vector.load %arg2[%c0_61, %c0_62] : memref<32x1xf32, #tpu.memory_space<vmem>>, vector<32x1xf32>
      %c0_63 = arith.constant 0 : index
      %c0_64 = arith.constant 0 : index
      %161 = vector.load %arg3[%c0_63, %c0_64] : memref<1x32xf32, #tpu.memory_space<vmem>>, vector<1x32xf32>
      %162 = vector.broadcast %160 : vector<32x1xf32> to vector<32x32xf32>
      %163 = vector.broadcast %161 : vector<1x32xf32> to vector<32x32xf32>
      %164 = arith.mulf %162, %163 : vector<32x32xf32>
      %c0_65 = arith.constant 0 : index
      %c0_66 = arith.constant 0 : index
      %165 = vector.load %arg4[%c0_65, %c0_66] : memref<1x32xf32, #tpu.memory_space<vmem>>, vector<1x32xf32>
      %166 = vector.broadcast %165 : vector<1x32xf32> to vector<32x32xf32>
      %167 = arith.addf %164, %166 : vector<32x32xf32>
      %c0_67 = arith.constant 0 : index
      %c0_68 = arith.constant 0 : index
      %168 = vector.load %arg25[%c0_67, %c0_68] : memref<32x32xf32, #tpu.memory_space<vmem>>, vector<32x32xf32>
      tpu.vector_store %arg25[%c0_67, %c0_68], %167 {strides = array<i32>} : memref<32x32xf32, #tpu.memory_space<vmem>>, vector<32x32xf32>,
    } else {
    }
    %c0_i32_2 = arith.constant 0 : i32
    %5 = arith.cmpi eq, %arg1, %c0_i32_2 : i32
    %6 = arith.extui %5 : i1 to i32
    %c0_i32_3 = arith.constant 0 : i32
    %7 = arith.cmpi ne, %6, %c0_i32_3 : i32
    scf.if %7 {
      %cst_61 = arith.constant 0.000000e+00 : f32
      %160 = vector.broadcast %cst_61 : f32 to vector<32x32xf32>
      %c0_62 = arith.constant 0 : index
      %c0_63 = arith.constant 0 : index
      %161 = vector.load %arg26[%c0_62, %c0_63] : memref<32x32xf32, #tpu.memory_space<vmem>>, vector<32x32xf32>
      tpu.vector_store %arg26[%c0_62, %c0_63], %160 {strides = array<i32>} : memref<32x32xf32, #tpu.memory_space<vmem>>, vector<32x32xf32>,
    } else {
    }
    %c0 = arith.constant 0 : index
    %c0_4 = arith.constant 0 : index
    %8 = vector.load %arg5[%c0, %c0_4] : memref<128x3xf32, #tpu.memory_space<vmem>>, vector<128x3xf32>
    %9 = vector.extract_strided_slice %8 {offsets = [0, 0], sizes = [128, 1], strides = [1, 1]} : vector<128x3xf32> to vector<128x1xf32>
    %10 = vector.extract_strided_slice %8 {offsets = [0, 1], sizes = [128, 1], strides = [1, 1]} : vector<128x3xf32> to vector<128x1xf32>
    %11 = vector.extract_strided_slice %8 {offsets = [0, 2], sizes = [128, 1], strides = [1, 1]} : vector<128x3xf32> to vector<128x1xf32>
    %12 = arith.mulf %9, %9 : vector<128x1xf32>
    %13 = arith.mulf %10, %10 : vector<128x1xf32>
    %14 = arith.addf %12, %13 : vector<128x1xf32>
    %15 = arith.mulf %11, %11 : vector<128x1xf32>
    %16 = arith.addf %14, %15 : vector<128x1xf32>
    %cst = arith.constant 9.99999996E-13 : f32
    %17 = vector.broadcast %cst : f32 to vector<128x1xf32>
    %18 = arith.addf %16, %17 : vector<128x1xf32>
    %19 = math.rsqrt %18 : vector<128x1xf32>
    %20 = arith.mulf %9, %19 : vector<128x1xf32>
    %21 = arith.mulf %10, %19 : vector<128x1xf32>
    %22 = arith.mulf %11, %19 : vector<128x1xf32>
    %cst_5 = arith.constant 1.000000e+00 : f32
    %23 = vector.broadcast %cst_5 : f32 to vector<128x1xf32>
    %cst_6 = arith.constant 1.73205078 : f32
    %24 = vector.broadcast %cst_6 : f32 to vector<128x1xf32>
    %25 = arith.mulf %24, %20 : vector<128x1xf32>
    %cst_7 = arith.constant 1.73205078 : f32
    %26 = vector.broadcast %cst_7 : f32 to vector<128x1xf32>
    %27 = arith.mulf %26, %21 : vector<128x1xf32>
    %cst_8 = arith.constant 1.73205078 : f32
    %28 = vector.broadcast %cst_8 : f32 to vector<128x1xf32>
    %29 = arith.mulf %28, %22 : vector<128x1xf32>
    %cst_9 = arith.constant 3.87298346 : f32
    %30 = vector.broadcast %cst_9 : f32 to vector<128x1xf32>
    %31 = arith.mulf %30, %20 : vector<128x1xf32>
    %32 = arith.mulf %31, %21 : vector<128x1xf32>
    %cst_10 = arith.constant 3.87298346 : f32
    %33 = vector.broadcast %cst_10 : f32 to vector<128x1xf32>
    %34 = arith.mulf %33, %21 : vector<128x1xf32>
    %35 = arith.mulf %34, %22 : vector<128x1xf32>
    %cst_11 = arith.constant 3.000000e+00 : f32
    %36 = vector.broadcast %cst_11 : f32 to vector<128x1xf32>
    %37 = arith.mulf %36, %22 : vector<128x1xf32>
    %38 = arith.mulf %37, %22 : vector<128x1xf32>
    %cst_12 = arith.constant 1.000000e+00 : f32
    %39 = vector.broadcast %cst_12 : f32 to vector<128x1xf32>
    %40 = arith.subf %38, %39 : vector<128x1xf32>
    %cst_13 = arith.constant 1.11803401 : f32
    %41 = vector.broadcast %cst_13 : f32 to vector<128x1xf32>
    %42 = arith.mulf %41, %40 : vector<128x1xf32>
    %cst_14 = arith.constant 3.87298346 : f32
    %43 = vector.broadcast %cst_14 : f32 to vector<128x1xf32>
    %44 = arith.mulf %43, %20 : vector<128x1xf32>
    %45 = arith.mulf %44, %22 : vector<128x1xf32>
    %46 = arith.mulf %20, %20 : vector<128x1xf32>
    %47 = arith.mulf %21, %21 : vector<128x1xf32>
    %48 = arith.subf %46, %47 : vector<128x1xf32>
    %cst_15 = arith.constant 1.93649173 : f32
    %49 = vector.broadcast %cst_15 : f32 to vector<128x1xf32>
    %50 = arith.mulf %49, %48 : vector<128x1xf32>
    %c0_16 = arith.constant 0 : index
    %c0_17 = arith.constant 0 : index
    %51 = vector.load %arg6[%c0_16, %c0_17] : memref<128x2xf32, #tpu.memory_space<vmem>>, vector<128x2xf32>
    %52 = vector.extract_strided_slice %51 {offsets = [0, 0], sizes = [128, 1], strides = [1, 1]} : vector<128x2xf32> to vector<128x1xf32>
    %53 = tpu.iota {dimensions = array<i32: 1>} : vector<1x8xi32>
    %54 = arith.sitofp %53 : vector<1x8xi32> to vector<1x8xf32>
    %cst_18 = arith.constant 0.285714298 : f32
    %55 = vector.broadcast %cst_18 : f32 to vector<1x8xf32>
    %56 = arith.mulf %54, %55 : vector<1x8xf32>
    %57 = vector.broadcast %52 : vector<128x1xf32> to vector<128x8xf32>
    %58 = vector.broadcast %56 : vector<1x8xf32> to vector<128x8xf32>
    %59 = arith.subf %57, %58 : vector<128x8xf32>
    %cst_19 = arith.constant 0.285714298 : f32
    %60 = vector.broadcast %cst_19 : f32 to vector<128x8xf32>
    %61 = arith.divf %59, %60 : vector<128x8xf32>
    %62 = arith.mulf %61, %61 : vector<128x8xf32>
    %cst_20 = arith.constant 0.000000e+00 : f32
    %63 = vector.broadcast %cst_20 : f32 to vector<128x8xf32>
    %64 = arith.subf %63, %62 : vector<128x8xf32>
    %65 = math.exp %64 : vector<128x8xf32>
    %cst_21 = arith.constant 1.120000e+00 : f32
    %66 = vector.broadcast %cst_21 : f32 to vector<128x8xf32>
    %67 = arith.divf %65, %66 : vector<128x8xf32>
    %68 = vector.extract_strided_slice %51 {offsets = [0, 1], sizes = [128, 1], strides = [1, 1]} : vector<128x2xf32> to vector<128x1xf32>
    %69 = tpu.iota {dimensions = array<i32: 1>} : vector<1x8xi32>
    %70 = arith.sitofp %69 : vector<1x8xi32> to vector<1x8xf32>
    %cst_22 = arith.constant 0.0714285746 : f32
    %71 = vector.broadcast %cst_22 : f32 to vector<1x8xf32>
    %72 = arith.mulf %70, %71 : vector<1x8xf32>
    %73 = vector.broadcast %68 : vector<128x1xf32> to vector<128x8xf32>
    %74 = vector.broadcast %72 : vector<1x8xf32> to vector<128x8xf32>
    %75 = arith.subf %73, %74 : vector<128x8xf32>
    %cst_23 = arith.constant 0.0714285746 : f32
    %76 = vector.broadcast %cst_23 : f32 to vector<128x8xf32>
    %77 = arith.divf %75, %76 : vector<128x8xf32>
    %78 = arith.mulf %77, %77 : vector<128x8xf32>
    %cst_24 = arith.constant 0.000000e+00 : f32
    %79 = vector.broadcast %cst_24 : f32 to vector<128x8xf32>
    %80 = arith.subf %79, %78 : vector<128x8xf32>
    %81 = math.exp %80 : vector<128x8xf32>
    %cst_25 = arith.constant 1.120000e+00 : f32
    %82 = vector.broadcast %cst_25 : f32 to vector<128x8xf32>
    %83 = arith.divf %81, %82 : vector<128x8xf32>
    %84 = tpu.concatenate %67, %83 in 1 : vector<128x8xf32>, vector<128x8xf32> -> vector<128x16xf32>
    %c0_26 = arith.constant 0 : index
    %c0_27 = arith.constant 0 : index
    %85 = vector.load %arg7[%c0_26, %c0_27] : memref<128x1xi32, #tpu.memory_space<vmem>>, vector<128x1xi32>
    %86 = tpu.iota {dimensions = array<i32: 1>} : vector<128x32xi32>
    %87 = vector.broadcast %85 : vector<128x1xi32> to vector<128x32xi32>
    %88 = arith.cmpi eq, %87, %86 : vector<128x32xi32>
    %89 = arith.extui %88 : vector<128x32xi1> to vector<128x32xi32>
    %90 = arith.sitofp %89 : vector<128x32xi32> to vector<128x32xf32>
    %91 = arith.truncf %90 : vector<128x32xf32> to vector<128x32xbf16>
    %c0_28 = arith.constant 0 : index
    %c0_29 = arith.constant 0 : index
    %92 = vector.load %arg25[%c0_28, %c0_29] : memref<32x32xf32, #tpu.memory_space<vmem>>, vector<32x32xf32>
    %93 = arith.truncf %92 : vector<32x32xf32> to vector<32x32xbf16>
    %cst_30 = arith.constant dense<0.000000e+00> : vector<128x32xf32>
    %94 = tpu.matmul %91, %93, %cst_30 {dimension_numbers = #tpu.dot_dimension_numbers<[1], [0], [0], [1], [0, 0, 1, 1], [], []>} : vector<128x32xbf16>, vector<32x32xbf16>, vector<128x32xf32> -> vector<128x32xf32>
    %c0_31 = arith.constant 0 : index
    %c0_32 = arith.constant 0 : index
    %c0_33 = arith.constant 0 : index
    %95 = vector.load %arg10[%c0_31, %c0_32, %c0_33] : memref<1x16x32xf32, #tpu.memory_space<vmem>>, vector<1x16x32xf32>
    %96 = vector.shape_cast %95 : vector<1x16x32xf32> to vector<16x32xf32>
    %cst_34 = arith.constant dense<0.000000e+00> : vector<128x32xf32>
    %97 = tpu.matmul %84, %96, %cst_34 {dimension_numbers = #tpu.dot_dimension_numbers<[1], [0], [0], [1], [0, 0, 1, 1], [], []>} : vector<128x16xf32>, vector<16x32xf32>, vector<128x32xf32> -> vector<128x32xf32>
    %c0_35 = arith.constant 0 : index
    %c0_36 = arith.constant 0 : index
    %c0_37 = arith.constant 0 : index
    %98 = vector.load %arg11[%c0_35, %c0_36, %c0_37] : memref<1x1x32xf32, #tpu.memory_space<vmem>>, vector<1x1x32xf32>
    %99 = vector.shape_cast %98 : vector<1x1x32xf32> to vector<1x32xf32>
    %100 = vector.broadcast %99 : vector<1x32xf32> to vector<128x32xf32>
    %101 = arith.addf %97, %100 : vector<128x32xf32>
    %102 = arith.negf %101 : vector<128x32xf32>
    %103 = math.exp %102 : vector<128x32xf32>
    %cst_38 = arith.constant 1.000000e+00 : f32
    %104 = vector.broadcast %cst_38 : f32 to vector<128x32xf32>
    %105 = arith.addf %104, %103 : vector<128x32xf32>
    %106 = arith.divf %104, %105 : vector<128x32xf32>
    %107 = arith.mulf %101, %106 : vector<128x32xf32>
    %c0_39 = arith.constant 0 : index
    %c0_40 = arith.constant 0 : index
    %c0_41 = arith.constant 0 : index
    %108 = vector.load %arg12[%c0_39, %c0_40, %c0_41] : memref<1x32x32xf32, #tpu.memory_space<vmem>>, vector<1x32x32xf32>
    %109 = vector.shape_cast %108 : vector<1x32x32xf32> to vector<32x32xf32>
    %cst_42 = arith.constant dense<0.000000e+00> : vector<128x32xf32>
    %110 = tpu.matmul %107, %109, %cst_42 {dimension_numbers = #tpu.dot_dimension_numbers<[1], [0], [0], [1], [0, 0, 1, 1], [], []>} : vector<128x32xf32>, vector<32x32xf32>, vector<128x32xf32> -> vector<128x32xf32>
    %c0_43 = arith.constant 0 : index
    %c0_44 = arith.constant 0 : index
    %c0_45 = arith.constant 0 : index
    %111 = vector.load %arg13[%c0_43, %c0_44, %c0_45] : memref<1x1x32xf32, #tpu.memory_space<vmem>>, vector<1x1x32xf32>
    %112 = vector.shape_cast %111 : vector<1x1x32xf32> to vector<1x32xf32>
    %113 = vector.broadcast %112 : vector<1x32xf32> to vector<128x32xf32>
    %114 = arith.addf %110, %113 : vector<128x32xf32>
    %115 = arith.mulf %94, %114 : vector<128x32xf32>
    %116 = vector.broadcast %23 : vector<128x1xf32> to vector<128x32xf32>
    %117 = arith.mulf %115, %116 : vector<128x32xf32>
    %118 = vector.broadcast %25 : vector<128x1xf32> to vector<128x32xf32>
    %119 = arith.mulf %115, %118 : vector<128x32xf32>
    %120 = vector.broadcast %27 : vector<128x1xf32> to vector<128x32xf32>
    %121 = arith.mulf %115, %120 : vector<128x32xf32>
    %122 = vector.broadcast %29 : vector<128x1xf32> to vector<128x32xf32>
    %123 = arith.mulf %115, %122 : vector<128x32xf32>
    %124 = vector.broadcast %32 : vector<128x1xf32> to vector<128x32xf32>
    %125 = arith.mulf %115, %124 : vector<128x32xf32>
    %126 = vector.broadcast %35 : vector<128x1xf32> to vector<128x32xf32>
    %127 = arith.mulf %115, %126 : vector<128x32xf32>
    %128 = vector.broadcast %42 : vector<128x1xf32> to vector<128x32xf32>
    %129 = arith.mulf %115, %128 : vector<128x32xf32>
    %130 = vector.broadcast %45 : vector<128x1xf32> to vector<128x32xf32>
    %131 = arith.mulf %115, %130 : vector<128x32xf32>
    %132 = vector.broadcast %50 : vector<128x1xf32> to vector<128x32xf32>
    %133 = arith.mulf %115, %132 : vector<128x32xf32>
    %134 = tpu.concatenate %117, %119, %121, %123, %125, %127, %129, %131, %133 in 1 : vector<128x32xf32>, vector<128x32xf32>, vector<128x32xf32>, vector<128x32xf32>, vector<128x32xf32>, vector<128x32xf32>, vector<128x32xf32>, vector<128x32xf32>, vector<128x32xf32> -> vector<128x288xf32>
    %135 = arith.truncf %134 : vector<128x288xf32> to vector<128x288xbf16>
    %c0_46 = arith.constant 0 : index
    %c0_47 = arith.constant 0 : index
    %c0_48 = arith.constant 0 : index
    %136 = vector.load %arg14[%c0_46, %c0_47, %c0_48] : memref<1x288x32xf32, #tpu.memory_space<vmem>>, vector<1x288x32xf32>
    %137 = vector.shape_cast %136 : vector<1x288x32xf32> to vector<288x32xf32>
    %138 = arith.truncf %137 : vector<288x32xf32> to vector<288x32xbf16>
    %cst_49 = arith.constant dense<0.000000e+00> : vector<128x32xf32>
    %139 = tpu.matmul %135, %138, %cst_49 {dimension_numbers = #tpu.dot_dimension_numbers<[1], [0], [0], [1], [0, 0, 1, 1], [], []>} : vector<128x288xbf16>, vector<288x32xbf16>, vector<128x32xf32> -> vector<128x32xf32>
    %c0_50 = arith.constant 0 : index
    %c0_51 = arith.constant 0 : index
    %140 = vector.load %arg8[%c0_50, %c0_51] : memref<1x128xi32, #tpu.memory_space<vmem>>, vector<1x128xi32>
    %141 = tpu.iota {dimensions = array<i32: 0>} : vector<32x128xi32>
    %142 = vector.broadcast %140 : vector<1x128xi32> to vector<32x128xi32>
    %143 = arith.cmpi eq, %142, %141 : vector<32x128xi32>
    %144 = arith.extui %143 : vector<32x128xi1> to vector<32x128xi32>
    %145 = arith.sitofp %144 : vector<32x128xi32> to vector<32x128xf32>
    %146 = arith.truncf %145 : vector<32x128xf32> to vector<32x128xbf16>
    %c0_52 = arith.constant 0 : index
    %c0_53 = arith.constant 0 : index
    %147 = vector.load %arg26[%c0_52, %c0_53] : memref<32x32xf32, #tpu.memory_space<vmem>>, vector<32x32xf32>
    %148 = arith.truncf %139 : vector<128x32xf32> to vector<128x32xbf16>
    %cst_54 = arith.constant dense<0.000000e+00> : vector<32x32xf32>
    %149 = tpu.matmul %146, %148, %cst_54 {dimension_numbers = #tpu.dot_dimension_numbers<[1], [0], [0], [1], [0, 0, 1, 1], [], []>} : vector<32x128xbf16>, vector<128x32xbf16>, vector<32x32xf32> -> vector<32x32xf32>
    %150 = arith.addf %147, %149 : vector<32x32xf32>
    %c0_55 = arith.constant 0 : index
    %c0_56 = arith.constant 0 : index
    %151 = vector.load %arg26[%c0_55, %c0_56] : memref<32x32xf32, #tpu.memory_space<vmem>>, vector<32x32xf32>
    tpu.vector_store %arg26[%c0_55, %c0_56], %150 {strides = array<i32>} : memref<32x32xf32, #tpu.memory_space<vmem>>, vector<32x32xf32>,
    %c1_i32 = arith.constant 1 : i32
    %152 = arith.cmpi eq, %arg1, %c1_i32 : i32
    %153 = arith.extui %152 : i1 to i32
    %c0_i32_57 = arith.constant 0 : i32
    %154 = arith.cmpi ne, %153, %c0_i32_57 : i32
    scf.if %154 {
      %c0_61 = arith.constant 0 : index
      %c0_62 = arith.constant 0 : index
      %160 = vector.load %arg25[%c0_61, %c0_62] : memref<32x32xf32, #tpu.memory_space<vmem>>, vector<32x32xf32>
      %c0_63 = arith.constant 0 : index
      %c0_64 = arith.constant 0 : index
      %c0_65 = arith.constant 0 : index
      %161 = vector.load %arg15[%c0_63, %c0_64, %c0_65] : memref<1x32x32xf32, #tpu.memory_space<vmem>>, vector<1x32x32xf32>
      %162 = vector.shape_cast %161 : vector<1x32x32xf32> to vector<32x32xf32>
      %cst_66 = arith.constant dense<0.000000e+00> : vector<32x32xf32>
      %163 = tpu.matmul %160, %162, %cst_66 {dimension_numbers = #tpu.dot_dimension_numbers<[1], [0], [0], [1], [0, 0, 1, 1], [], []>} : vector<32x32xf32>, vector<32x32xf32>, vector<32x32xf32> -> vector<32x32xf32>
      %c0_67 = arith.constant 0 : index
      %c0_68 = arith.constant 0 : index
      %c0_69 = arith.constant 0 : index
      %164 = vector.load %arg16[%c0_67, %c0_68, %c0_69] : memref<1x1x32xf32, #tpu.memory_space<vmem>>, vector<1x1x32xf32>
      %165 = vector.shape_cast %164 : vector<1x1x32xf32> to vector<1x32xf32>
      %166 = vector.broadcast %165 : vector<1x32xf32> to vector<32x32xf32>
      %167 = arith.addf %163, %166 : vector<32x32xf32>
      %c0_70 = arith.constant 0 : index
      %c0_71 = arith.constant 0 : index
      %168 = vector.load %arg26[%c0_70, %c0_71] : memref<32x32xf32, #tpu.memory_space<vmem>>, vector<32x32xf32>
      %cst_72 = arith.constant 1.000000e-01 : f32
      %169 = vector.broadcast %cst_72 : f32 to vector<32x32xf32>
      %170 = arith.mulf %168, %169 : vector<32x32xf32>
      %171 = arith.addf %167, %170 : vector<32x32xf32>
      %c0_i32_73 = arith.constant 0 : i32
      %172 = arith.cmpi sgt, %arg0, %c0_i32_73 : i32
      %173 = arith.extui %172 : i1 to i32
      %174 = arith.sitofp %173 : i32 to f32
      %175 = vector.broadcast %174 : f32 to vector<32x32xf32>
      %176 = arith.mulf %175, %160 : vector<32x32xf32>
      %177 = arith.addf %171, %176 : vector<32x32xf32>
      %c0_74 = arith.constant 0 : index
      %c0_75 = arith.constant 0 : index
      %178 = vector.load %arg25[%c0_74, %c0_75] : memref<32x32xf32, #tpu.memory_space<vmem>>, vector<32x32xf32>
      tpu.vector_store %arg25[%c0_74, %c0_75], %177 {strides = array<i32>} : memref<32x32xf32, #tpu.memory_space<vmem>>, vector<32x32xf32>,
    } else {
    }
    %c1_i32_58 = arith.constant 1 : i32
    %155 = arith.cmpi eq, %arg0, %c1_i32_58 : i32
    %c1_i32_59 = arith.constant 1 : i32
    %156 = arith.cmpi eq, %arg1, %c1_i32_59 : i32
    %157 = arith.andi %155, %156 : i1
    %158 = arith.extui %157 : i1 to i32
    %c0_i32_60 = arith.constant 0 : i32
    %159 = arith.cmpi ne, %158, %c0_i32_60 : i32
    scf.if %159 {
      %c0_61 = arith.constant 0 : index
      %c0_62 = arith.constant 0 : index
      %160 = vector.load %arg25[%c0_61, %c0_62] : memref<32x32xf32, #tpu.memory_space<vmem>>, vector<32x32xf32>
      %c0_63 = arith.constant 0 : index
      %c0_64 = arith.constant 0 : index
      %161 = vector.load %arg17[%c0_63, %c0_64] : memref<32x32xf32, #tpu.memory_space<vmem>>, vector<32x32xf32>
      %cst_65 = arith.constant dense<0.000000e+00> : vector<32x32xf32>
      %162 = tpu.matmul %160, %161, %cst_65 {dimension_numbers = #tpu.dot_dimension_numbers<[1], [0], [0], [1], [0, 0, 1, 1], [], []>} : vector<32x32xf32>, vector<32x32xf32>, vector<32x32xf32> -> vector<32x32xf32>
      %c0_66 = arith.constant 0 : index
      %c0_67 = arith.constant 0 : index
      %163 = vector.load %arg18[%c0_66, %c0_67] : memref<1x32xf32, #tpu.memory_space<vmem>>, vector<1x32xf32>
      %164 = vector.broadcast %163 : vector<1x32xf32> to vector<32x32xf32>
      %165 = arith.addf %162, %164 : vector<32x32xf32>
      %166 = arith.negf %165 : vector<32x32xf32>
      %167 = math.exp %166 : vector<32x32xf32>
      %cst_68 = arith.constant 1.000000e+00 : f32
      %168 = vector.broadcast %cst_68 : f32 to vector<32x32xf32>
      %169 = arith.addf %168, %167 : vector<32x32xf32>
      %170 = arith.divf %168, %169 : vector<32x32xf32>
      %171 = arith.mulf %165, %170 : vector<32x32xf32>
      %c0_69 = arith.constant 0 : index
      %c0_70 = arith.constant 0 : index
      %172 = vector.load %arg19[%c0_69, %c0_70] : memref<32x21xf32, #tpu.memory_space<vmem>>, vector<32x21xf32>
      %cst_71 = arith.constant dense<0.000000e+00> : vector<32x21xf32>
      %173 = tpu.matmul %171, %172, %cst_71 {dimension_numbers = #tpu.dot_dimension_numbers<[1], [0], [0], [1], [0, 0, 1, 1], [], []>} : vector<32x32xf32>, vector<32x21xf32>, vector<32x21xf32> -> vector<32x21xf32>
      %c0_72 = arith.constant 0 : index
      %c0_73 = arith.constant 0 : index
      %174 = vector.load %arg20[%c0_72, %c0_73] : memref<1x21xf32, #tpu.memory_space<vmem>>, vector<1x21xf32>
      %175 = vector.broadcast %174 : vector<1x21xf32> to vector<32x21xf32>
      %176 = arith.addf %173, %175 : vector<32x21xf32>
      %c0_74 = arith.constant 0 : index
      %c0_75 = arith.constant 0 : index
      %177 = vector.load %arg9[%c0_74, %c0_75] : memref<1x32xi32, #tpu.memory_space<vmem>>, vector<1x32xi32>
      %178 = tpu.iota {dimensions = array<i32: 0>} : vector<2x32xi32>
      %179 = vector.broadcast %177 : vector<1x32xi32> to vector<2x32xi32>
      %180 = arith.cmpi eq, %179, %178 : vector<2x32xi32>
      %181 = arith.extui %180 : vector<2x32xi1> to vector<2x32xi32>
      %182 = arith.sitofp %181 : vector<2x32xi32> to vector<2x32xf32>
      %cst_76 = arith.constant dense<0.000000e+00> : vector<2x21xf32>
      %183 = tpu.matmul %182, %176, %cst_76 {dimension_numbers = #tpu.dot_dimension_numbers<[1], [0], [0], [1], [0, 0, 1, 1], [], []>} : vector<2x32xf32>, vector<32x21xf32>, vector<2x21xf32> -> vector<2x21xf32>
      %cst_77 = arith.constant dense<0.000000e+00> : vector<2xf32>
      %184 = vector.multi_reduction <add>, %182, %cst_77 [1] : vector<2x32xf32> to vector<2xf32>
      %185 = vector.shape_cast %184 : vector<2xf32> to vector<2x1xf32>
      %cst_78 = arith.constant 1.000000e+00 : f32
      %186 = vector.broadcast %cst_78 : f32 to vector<2x1xf32>
      %187 = arith.maximumf %185, %186 : vector<2x1xf32>
      %188 = vector.broadcast %187 : vector<2x1xf32> to vector<2x21xf32>
      %189 = arith.divf %183, %188 : vector<2x21xf32>
      %c0_79 = arith.constant 0 : index
      %c0_80 = arith.constant 0 : index
      %190 = vector.load %arg21[%c0_79, %c0_80] : memref<21x21xf32, #tpu.memory_space<vmem>>, vector<21x21xf32>
      %cst_81 = arith.constant dense<0.000000e+00> : vector<2x21xf32>
      %191 = tpu.matmul %189, %190, %cst_81 {dimension_numbers = #tpu.dot_dimension_numbers<[1], [0], [0], [1], [0, 0, 1, 1], [], []>} : vector<2x21xf32>, vector<21x21xf32>, vector<2x21xf32> -> vector<2x21xf32>
      %c0_82 = arith.constant 0 : index
      %c0_83 = arith.constant 0 : index
      %192 = vector.load %arg22[%c0_82, %c0_83] : memref<1x21xf32, #tpu.memory_space<vmem>>, vector<1x21xf32>
      %193 = vector.broadcast %192 : vector<1x21xf32> to vector<2x21xf32>
      %194 = arith.addf %191, %193 : vector<2x21xf32>
      %c0_84 = arith.constant 0 : index
      %c0_85 = arith.constant 0 : index
      %195 = vector.load %arg23[%c0_84, %c0_85] : memref<21x36xf32, #tpu.memory_space<vmem>>, vector<21x36xf32>
      %cst_86 = arith.constant dense<0.000000e+00> : vector<2x36xf32>
      %196 = tpu.matmul %194, %195, %cst_86 {dimension_numbers = #tpu.dot_dimension_numbers<[1], [0], [0], [1], [0, 0, 1, 1], [], []>} : vector<2x21xf32>, vector<21x36xf32>, vector<2x36xf32> -> vector<2x36xf32>
      %c0_87 = arith.constant 0 : index
      %c0_88 = arith.constant 0 : index
      %197 = vector.load %arg24[%c0_87, %c0_88] : memref<2x36xf32, #tpu.memory_space<vmem>>, vector<2x36xf32>
      tpu.vector_store %arg24[%c0_87, %c0_88], %196 {strides = array<i32>} : memref<2x36xf32, #tpu.memory_space<vmem>>, vector<2x36xf32>,
    } else {
    }
    return
  }
  func.func @transform_0(%arg0: i32, %arg1: i32) -> (i32, i32) {
    %c0_i32 = arith.constant 0 : i32
    %c0_i32_0 = arith.constant 0 : i32
    %c0_i32_1 = arith.constant 0 : i32
    return %c0_i32, %c0_i32_0 : i32, i32
  }
  func.func @transform_1(%arg0: i32, %arg1: i32) -> (i32, i32) {
    %c0_i32 = arith.constant 0 : i32
    %c0_i32_0 = arith.constant 0 : i32
    %c0_i32_1 = arith.constant 0 : i32
    return %c0_i32, %c0_i32_0 : i32, i32
  }
  func.func @transform_2(%arg0: i32, %arg1: i32) -> (i32, i32) {
    %c0_i32 = arith.constant 0 : i32
    %c0_i32_0 = arith.constant 0 : i32
    %c0_i32_1 = arith.constant 0 : i32
    return %c0_i32, %c0_i32_0 : i32, i32
  }
  func.func @transform_3(%arg0: i32, %arg1: i32) -> (i32, i32) {
    %c0_i32 = arith.constant 0 : i32
    %c0_i32_0 = arith.constant 0 : i32
    return %arg1, %c0_i32 : i32, i32
  }
  func.func @transform_4(%arg0: i32, %arg1: i32) -> (i32, i32) {
    %c0_i32 = arith.constant 0 : i32
    %c0_i32_0 = arith.constant 0 : i32
    return %arg1, %c0_i32 : i32, i32
  }
  func.func @transform_5(%arg0: i32, %arg1: i32) -> (i32, i32) {
    %c0_i32 = arith.constant 0 : i32
    %c0_i32_0 = arith.constant 0 : i32
    return %arg1, %c0_i32 : i32, i32
  }
  func.func @transform_6(%arg0: i32, %arg1: i32) -> (i32, i32) {
    %c0_i32 = arith.constant 0 : i32
    %c0_i32_0 = arith.constant 0 : i32
    return %c0_i32, %arg1 : i32, i32
  }
  func.func @transform_7(%arg0: i32, %arg1: i32) -> (i32, i32) {
    %c0_i32 = arith.constant 0 : i32
    %c0_i32_0 = arith.constant 0 : i32
    %c0_i32_1 = arith.constant 0 : i32
    return %c0_i32, %c0_i32_0 : i32, i32
  }
  func.func @transform_8(%arg0: i32, %arg1: i32) -> (i32, i32, i32) {
    %c0_i32 = arith.constant 0 : i32
    %c0_i32_0 = arith.constant 0 : i32
    %c0_i32_1 = arith.constant 0 : i32
    return %arg0, %c0_i32, %c0_i32_0 : i32, i32, i32
  }
  func.func @transform_9(%arg0: i32, %arg1: i32) -> (i32, i32, i32) {
    %c0_i32 = arith.constant 0 : i32
    %c0_i32_0 = arith.constant 0 : i32
    %c0_i32_1 = arith.constant 0 : i32
    return %arg0, %c0_i32, %c0_i32_0 : i32, i32, i32
  }
  func.func @transform_10(%arg0: i32, %arg1: i32) -> (i32, i32, i32) {
    %c0_i32 = arith.constant 0 : i32
    %c0_i32_0 = arith.constant 0 : i32
    %c0_i32_1 = arith.constant 0 : i32
    return %arg0, %c0_i32, %c0_i32_0 : i32, i32, i32
  }
  func.func @transform_11(%arg0: i32, %arg1: i32) -> (i32, i32, i32) {
    %c0_i32 = arith.constant 0 : i32
    %c0_i32_0 = arith.constant 0 : i32
    %c0_i32_1 = arith.constant 0 : i32
    return %arg0, %c0_i32, %c0_i32_0 : i32, i32, i32
  }
  func.func @transform_12(%arg0: i32, %arg1: i32) -> (i32, i32, i32) {
    %c0_i32 = arith.constant 0 : i32
    %c0_i32_0 = arith.constant 0 : i32
    %c0_i32_1 = arith.constant 0 : i32
    return %arg0, %c0_i32, %c0_i32_0 : i32, i32, i32
  }
  func.func @transform_13(%arg0: i32, %arg1: i32) -> (i32, i32, i32) {
    %c0_i32 = arith.constant 0 : i32
    %c0_i32_0 = arith.constant 0 : i32
    %c0_i32_1 = arith.constant 0 : i32
    return %arg0, %c0_i32, %c0_i32_0 : i32, i32, i32
  }
  func.func @transform_14(%arg0: i32, %arg1: i32) -> (i32, i32, i32) {
    %c0_i32 = arith.constant 0 : i32
    %c0_i32_0 = arith.constant 0 : i32
    %c0_i32_1 = arith.constant 0 : i32
    return %arg0, %c0_i32, %c0_i32_0 : i32, i32, i32
  }
  func.func @transform_15(%arg0: i32, %arg1: i32) -> (i32, i32) {
    %c0_i32 = arith.constant 0 : i32
    %c0_i32_0 = arith.constant 0 : i32
    %c0_i32_1 = arith.constant 0 : i32
    return %c0_i32, %c0_i32_0 : i32, i32
  }
  func.func @transform_16(%arg0: i32, %arg1: i32) -> (i32, i32) {
    %c0_i32 = arith.constant 0 : i32
    %c0_i32_0 = arith.constant 0 : i32
    %c0_i32_1 = arith.constant 0 : i32
    return %c0_i32, %c0_i32_0 : i32, i32
  }
  func.func @transform_17(%arg0: i32, %arg1: i32) -> (i32, i32) {
    %c0_i32 = arith.constant 0 : i32
    %c0_i32_0 = arith.constant 0 : i32
    %c0_i32_1 = arith.constant 0 : i32
    return %c0_i32, %c0_i32_0 : i32, i32
  }
  func.func @transform_18(%arg0: i32, %arg1: i32) -> (i32, i32) {
    %c0_i32 = arith.constant 0 : i32
    %c0_i32_0 = arith.constant 0 : i32
    %c0_i32_1 = arith.constant 0 : i32
    return %c0_i32, %c0_i32_0 : i32, i32
  }
  func.func @transform_19(%arg0: i32, %arg1: i32) -> (i32, i32) {
    %c0_i32 = arith.constant 0 : i32
    %c0_i32_0 = arith.constant 0 : i32
    %c0_i32_1 = arith.constant 0 : i32
    return %c0_i32, %c0_i32_0 : i32, i32
  }
  func.func @transform_20(%arg0: i32, %arg1: i32) -> (i32, i32) {
    %c0_i32 = arith.constant 0 : i32
    %c0_i32_0 = arith.constant 0 : i32
    %c0_i32_1 = arith.constant 0 : i32
    return %c0_i32, %c0_i32_0 : i32, i32
  }
  func.func @transform_21(%arg0: i32, %arg1: i32) -> (i32, i32) {
    %c0_i32 = arith.constant 0 : i32
    %c0_i32_0 = arith.constant 0 : i32
    %c0_i32_1 = arith.constant 0 : i32
    return %c0_i32, %c0_i32_0 : i32, i32
  }
  func.func @transform_22(%arg0: i32, %arg1: i32) -> (i32, i32) {
    %c0_i32 = arith.constant 0 : i32
    %c0_i32_0 = arith.constant 0 : i32
    %c0_i32_1 = arith.constant 0 : i32
    return %c0_i32, %c0_i32_0 : i32, i32
  }
}

</mosaic_0001>

<llo_original>
// kernel: tpu_custom_call.1
$region0: #{tpu_custom_call.1}
  #allocation0 [shape = 'u32[]', space=smem, size = 0x4, offset = 0x4, fixed_abs, tag = 'smem constant byte address 0x4 - core index']
  #allocation1 [shape = 'u32[144,128]{1,0:T(1,128)}', space=vmem, size = 0x12000, scoped, tag = 'internal scratch']
  #allocation2 [shape = 'f32[32,32]{1,0:T(8,128)}', space=vmem, size = 0x4000, scoped, tag = 'scratch operand']
  #allocation3 [shape = 'f32[32,32]{1,0:T(8,128)}', space=vmem, size = 0x4000, scoped, tag = 'scratch operand']
  %s0 = inlined_call_operand.vmem [shape: f32[32,1], index: 0, kind: input, shape index: {}]
  %s1 = inlined_call_operand.vmem [shape: f32[1,32], index: 1, kind: input, shape index: {}]
  %s2 = inlined_call_operand.vmem [shape: f32[1,32], index: 2, kind: input, shape index: {}]
  %s3 = inlined_call_operand.vmem [shape: f32[256,3], index: 3, kind: input, shape index: {}]
  %s4 = inlined_call_operand.vmem [shape: f32[256,2], index: 4, kind: input, shape index: {}]
  %s5 = inlined_call_operand.vmem [shape: s32[256,1], index: 5, kind: input, shape index: {}]
  %s6 = inlined_call_operand.vmem [shape: s32[1,256], index: 6, kind: input, shape index: {}]
  %s7 = inlined_call_operand.vmem [shape: s32[1,32], index: 7, kind: input, shape index: {}]
  %s8 = inlined_call_operand.vmem [shape: f32[2,16,32], index: 8, kind: input, shape index: {}]
  %s9 = inlined_call_operand.vmem [shape: f32[2,1,32], index: 9, kind: input, shape index: {}]
  %s10 = inlined_call_operand.vmem [shape: f32[2,32,32], index: 10, kind: input, shape index: {}]
  %s11 = inlined_call_operand.vmem [shape: f32[2,1,32], index: 11, kind: input, shape index: {}]
  %s12 = inlined_call_operand.vmem [shape: f32[2,288,32], index: 12, kind: input, shape index: {}]
  %s13 = inlined_call_operand.vmem [shape: f32[2,32,32], index: 13, kind: input, shape index: {}]
  %s14 = inlined_call_operand.vmem [shape: f32[2,1,32], index: 14, kind: input, shape index: {}]
  %s15 = inlined_call_operand.vmem [shape: f32[32,32], index: 15, kind: input, shape index: {}]
  %s16 = inlined_call_operand.vmem [shape: f32[1,32], index: 16, kind: input, shape index: {}]
  %s17 = inlined_call_operand.vmem [shape: f32[32,21], index: 17, kind: input, shape index: {}]
  %s18 = inlined_call_operand.vmem [shape: f32[1,21], index: 18, kind: input, shape index: {}]
  %s19 = inlined_call_operand.vmem [shape: f32[21,21], index: 19, kind: input, shape index: {}]
  %s20 = inlined_call_operand.vmem [shape: f32[1,21], index: 20, kind: input, shape index: {}]
  %s21 = inlined_call_operand.vmem [shape: f32[21,36], index: 21, kind: input, shape index: {}]
  %s22 = inlined_call_operand.hbm [shape: f32[2,36], index: 22, kind: output, shape index: {}]
  %s23 = sld [smem:[#allocation0]]
  $region137: #{tpu_custom_call.1} parent=0
    _
  %s25 = ssub.s32 1, %s23
  %s26 = scalar_select 0, %s25, %s23
  $region1: #{tpu_custom_call.1} parent=0
    #allocation4 [shape = 'u8[1024]{0}', space=vmem, size = 0x400, scoped, tag = 'output window, operand 0, single buffered']
    #allocation5 [shape = 's32[2]{0}', space=sflag, size = 0x8, scoped, tag = 'scoped memory for tpu_custom_call.1']
    %27 = vsyncpa [#allocation5], 0
    loop: start=0, step=1, limit=6
    $region2: #{tpu_custom_call.1} parent=1 // loop_pre_header
      _
    $region3: #{tpu_custom_call.1} parent=1 // loop_header
      %s29 = sphi 0, %s33
      %p30 = scmp.ge.s32.totalorder %s29, 6
      %s36 = sphi 0, %s48
      %s37 = sphi 0, %s44
      %s38 = sphi 0, %s36
      %s39 = sphi 0, %s37
      %s40 = sphi 0, %s38
      %s41 = sphi 0, %s39
      %s49 = sphi 0, %s49
      %s51 = sphi 0, %s49
      %s52 = sphi 0, %s51
      %s66 = sphi 0, %s52
      %s70 = sphi 0, %s70
      %s72 = sphi 0, %s70
      %s73 = sphi 0, %s72
      %s87 = sphi 0, %s73
      %s91 = sphi 0, %s91
      %s93 = sphi 0, %s91
      %s94 = sphi 0, %s93
      %s108 = sphi 0, %s94
      %s114 = sphi 0, %s116
      %s117 = sphi 0, %s114
      %s118 = sphi 0, %s117
      %s134 = sphi 0, %s118
      %s140 = sphi 0, %s142
      %s143 = sphi 0, %s140
      %s144 = sphi 0, %s143
      %s160 = sphi 0, %s144
      %s166 = sphi 0, %s168
      %s169 = sphi 0, %s166
      %s170 = sphi 0, %s169
      %s186 = sphi 0, %s170
      %s192 = sphi 0, %s194
      %s195 = sphi 0, %s192
      %s196 = sphi 0, %s195
      %s212 = sphi 0, %s196
      %s216 = sphi 0, %s216
      %s218 = sphi 0, %s216
      %s219 = sphi 0, %s218
      %s233 = sphi 0, %s219
      %s239 = sphi 0, %s241
      %s242 = sphi 0, %s239
      %s243 = sphi 0, %s242
      %s259 = sphi 0, %s243
      %s265 = sphi 0, %s267
      %s268 = sphi 0, %s265
      %s269 = sphi 0, %s268
      %s285 = sphi 0, %s269
      %s291 = sphi 0, %s293
      %s294 = sphi 0, %s291
      %s295 = sphi 0, %s294
      %s311 = sphi 0, %s295
      %s317 = sphi 0, %s319
      %s320 = sphi 0, %s317
      %s321 = sphi 0, %s320
      %s337 = sphi 0, %s321
      %s343 = sphi 0, %s345
      %s346 = sphi 0, %s343
      %s347 = sphi 0, %s346
      %s363 = sphi 0, %s347
      %s369 = sphi 0, %s371
      %s372 = sphi 0, %s369
      %s373 = sphi 0, %s372
      %s389 = sphi 0, %s373
      %s395 = sphi 0, %s397
      %s398 = sphi 0, %s395
      %s399 = sphi 0, %s398
      %s415 = sphi 0, %s399
      %s419 = sphi 0, %s419
      %s421 = sphi 0, %s419
      %s422 = sphi 0, %s421
      %s436 = sphi 0, %s422
      %s440 = sphi 0, %s440
      %s442 = sphi 0, %s440
      %s443 = sphi 0, %s442
      %s457 = sphi 0, %s443
      %s461 = sphi 0, %s461
      %s463 = sphi 0, %s461
      %s464 = sphi 0, %s463
      %s478 = sphi 0, %s464
      %s482 = sphi 0, %s482
      %s484 = sphi 0, %s482
      %s485 = sphi 0, %s484
      %s499 = sphi 0, %s485
      %s503 = sphi 0, %s503
      %s505 = sphi 0, %s503
      %s506 = sphi 0, %s505
      %s520 = sphi 0, %s506
      %s524 = sphi 0, %s524
      %s526 = sphi 0, %s524
      %s527 = sphi 0, %s526
      %s541 = sphi 0, %s527
      %s545 = sphi 0, %s545
      %s547 = sphi 0, %s545
      %s548 = sphi 0, %s547
      %s562 = sphi 0, %s548
      %s566 = sphi 0, %s566
      %s568 = sphi 0, %s566
      %s569 = sphi 0, %s568
      %s583 = sphi 0, %s569
    $region4: #{tpu_custom_call.1} parent=1 // loop_header_branch
      %32 = sbr.rel (%p30) target = $region8
    $region5: #{tpu_custom_call.1} parent=1 // loop_body
      %s34 = ssub.s32 %s29, 1
      %s35 = ssub.s32 %s29, 2
      %s42 = sadd.s32 1, %s37
      %p43 = scmp.ge.s32.totalorder %s42, 2
      %s44 = scalar_select %p43, 0, %s42
      %s45 = sadd.s32 1, %s36
      %s46 = scalar_select %p43, %s45, %s36
      %p47 = scmp.ge.s32.totalorder %s46, 2
      %s48 = scalar_select %p47, 0, %s46
      %s50 = sadd.s32 %s49, 1
      %p53 = scmp.eq.s32.totalorder %s29, 3
      %p54 = scmp.ne.s32.totalorder %s49, %s51
      %p55 = scmp.eq.s32.totalorder %s29, 0
      %p56 = por %p54, %p55
      %p57 = scmp.ne.s32.totalorder %s49, %s51
      %p58 = scmp.eq.s32.totalorder %s34, 3
      %p59 = por %p57, %p58
      %p60 = scmp.ne.s32.totalorder %s51, %s52
      %p61 = scmp.eq.s32.totalorder %s34, 0
      %p62 = por %p60, %p61
      %p63 = scmp.ne.s32.totalorder %s51, %s52
      %p64 = scmp.eq.s32.totalorder %s35, 3
      %p65 = por %p63, %p64
      %p67 = scmp.ne.s32.totalorder %s52, %s66
      %p68 = scmp.eq.s32.totalorder %s35, 0
      %p69 = por %p67, %p68
      %s71 = sadd.s32 %s70, 1
      %p74 = scmp.eq.s32.totalorder %s29, 3
      %p75 = scmp.ne.s32.totalorder %s70, %s72
      %p76 = scmp.eq.s32.totalorder %s29, 0
      %p77 = por %p75, %p76
      %p78 = scmp.ne.s32.totalorder %s70, %s72
      %p79 = scmp.eq.s32.totalorder %s34, 3
      %p80 = por %p78, %p79
      %p81 = scmp.ne.s32.totalorder %s72, %s73
      %p82 = scmp.eq.s32.totalorder %s34, 0
      %p83 = por %p81, %p82
      %p84 = scmp.ne.s32.totalorder %s72, %s73
      %p85 = scmp.eq.s32.totalorder %s35, 3
      %p86 = por %p84, %p85
      %p88 = scmp.ne.s32.totalorder %s73, %s87
      %p89 = scmp.eq.s32.totalorder %s35, 0
      %p90 = por %p88, %p89
      %s92 = sadd.s32 %s91, 1
      %p95 = scmp.eq.s32.totalorder %s29, 3
      %p96 = scmp.ne.s32.totalorder %s91, %s93
      %p97 = scmp.eq.s32.totalorder %s29, 0
      %p98 = por %p96, %p97
      %p99 = scmp.ne.s32.totalorder %s91, %s93
      %p100 = scmp.eq.s32.totalorder %s34, 3
      %p101 = por %p99, %p100
      %p102 = scmp.ne.s32.totalorder %s93, %s94
      %p103 = scmp.eq.s32.totalorder %s34, 0
      %p104 = por %p102, %p103
      %p105 = scmp.ne.s32.totalorder %s93, %s94
      %p106 = scmp.eq.s32.totalorder %s35, 3
      %p107 = por %p105, %p106
      %p109 = scmp.ne.s32.totalorder %s94, %s108
      %p110 = scmp.eq.s32.totalorder %s35, 0
      %p111 = por %p109, %p110
      %s112 = ssub.s32 %s37, %s44
      %p113 = scmp.eq.s32.totalorder %s112, 0
      %s115 = sadd.s32 %s114, 1
      %s116 = scalar_select %p113, %s114, %s115
      %p119 = pneg %p113
      %p120 = scmp.eq.s32.totalorder %s29, 3
      %p121 = por %p119, %p120
      %p122 = scmp.ne.s32.totalorder %s114, %s117
      %p123 = scmp.eq.s32.totalorder %s29, 0
      %p124 = por %p122, %p123
      %p125 = scmp.ne.s32.totalorder %s114, %s117
      %p126 = scmp.eq.s32.totalorder %s34, 3
      %p127 = por %p125, %p126
      %p128 = scmp.ne.s32.totalorder %s117, %s118
      %p129 = scmp.eq.s32.totalorder %s34, 0
      %p130 = por %p128, %p129
      %p131 = scmp.ne.s32.totalorder %s117, %s118
      %p132 = scmp.eq.s32.totalorder %s35, 3
      %p133 = por %p131, %p132
      %p135 = scmp.ne.s32.totalorder %s118, %s134
      %p136 = scmp.eq.s32.totalorder %s35, 0
      %p137 = por %p135, %p136
      %s138 = ssub.s32 %s37, %s44
      %p139 = scmp.eq.s32.totalorder %s138, 0
      %s141 = sadd.s32 %s140, 1
      %s142 = scalar_select %p139, %s140, %s141
      %p145 = pneg %p139
      %p146 = scmp.eq.s32.totalorder %s29, 3
      %p147 = por %p145, %p146
      %p148 = scmp.ne.s32.totalorder %s140, %s143
      %p149 = scmp.eq.s32.totalorder %s29, 0
      %p150 = por %p148, %p149
      %p151 = scmp.ne.s32.totalorder %s140, %s143
      %p152 = scmp.eq.s32.totalorder %s34, 3
      %p153 = por %p151, %p152
      %p154 = scmp.ne.s32.totalorder %s143, %s144
      %p155 = scmp.eq.s32.totalorder %s34, 0
      %p156 = por %p154, %p155
      %p157 = scmp.ne.s32.totalorder %s143, %s144
      %p158 = scmp.eq.s32.totalorder %s35, 3
      %p159 = por %p157, %p158
      %p161 = scmp.ne.s32.totalorder %s144, %s160
      %p162 = scmp.eq.s32.totalorder %s35, 0
      %p163 = por %p161, %p162
      %s164 = ssub.s32 %s37, %s44
      %p165 = scmp.eq.s32.totalorder %s164, 0
      %s167 = sadd.s32 %s166, 1
      %s168 = scalar_select %p165, %s166, %s167
      %p171 = pneg %p165
      %p172 = scmp.eq.s32.totalorder %s29, 3
      %p173 = por %p171, %p172
      %p174 = scmp.ne.s32.totalorder %s166, %s169
      %p175 = scmp.eq.s32.totalorder %s29, 0
      %p176 = por %p174, %p175
      %p177 = scmp.ne.s32.totalorder %s166, %s169
      %p178 = scmp.eq.s32.totalorder %s34, 3
      %p179 = por %p177, %p178
      %p180 = scmp.ne.s32.totalorder %s169, %s170
      %p181 = scmp.eq.s32.totalorder %s34, 0
      %p182 = por %p180, %p181
      %p183 = scmp.ne.s32.totalorder %s169, %s170
      %p184 = scmp.eq.s32.totalorder %s35, 3
      %p185 = por %p183, %p184
      %p187 = scmp.ne.s32.totalorder %s170, %s186
      %p188 = scmp.eq.s32.totalorder %s35, 0
      %p189 = por %p187, %p188
      %s190 = ssub.s32 %s37, %s44
      %p191 = scmp.eq.s32.totalorder %s190, 0
      %s193 = sadd.s32 %s192, 1
      %s194 = scalar_select %p191, %s192, %s193
      %p197 = pneg %p191
      %p198 = scmp.eq.s32.totalorder %s29, 3
      %p199 = por %p197, %p198
      %p200 = scmp.ne.s32.totalorder %s192, %s195
      %p201 = scmp.eq.s32.totalorder %s29, 0
      %p202 = por %p200, %p201
      %p203 = scmp.ne.s32.totalorder %s192, %s195
      %p204 = scmp.eq.s32.totalorder %s34, 3
      %p205 = por %p203, %p204
      %p206 = scmp.ne.s32.totalorder %s195, %s196
      %p207 = scmp.eq.s32.totalorder %s34, 0
      %p208 = por %p206, %p207
      %p209 = scmp.ne.s32.totalorder %s195, %s196
      %p210 = scmp.eq.s32.totalorder %s35, 3
      %p211 = por %p209, %p210
      %p213 = scmp.ne.s32.totalorder %s196, %s212
      %p214 = scmp.eq.s32.totalorder %s35, 0
      %p215 = por %p213, %p214
      %s217 = sadd.s32 %s216, 1
      %p220 = scmp.eq.s32.totalorder %s29, 3
      %p221 = scmp.ne.s32.totalorder %s216, %s218
      %p222 = scmp.eq.s32.totalorder %s29, 0
      %p223 = por %p221, %p222
      %p224 = scmp.ne.s32.totalorder %s216, %s218
      %p225 = scmp.eq.s32.totalorder %s34, 3
      %p226 = por %p224, %p225
      %p227 = scmp.ne.s32.totalorder %s218, %s219
      %p228 = scmp.eq.s32.totalorder %s34, 0
      %p229 = por %p227, %p228
      %p230 = scmp.ne.s32.totalorder %s218, %s219
      %p231 = scmp.eq.s32.totalorder %s35, 3
      %p232 = por %p230, %p231
      %p234 = scmp.ne.s32.totalorder %s219, %s233
      %p235 = scmp.eq.s32.totalorder %s35, 0
      %p236 = por %p234, %p235
      %s237 = ssub.s32 %s36, %s48
      %p238 = scmp.eq.s32.totalorder %s237, 0
      %s240 = sadd.s32 %s239, 1
      %s241 = scalar_select %p238, %s239, %s240
      %p244 = pneg %p238
      %p245 = scmp.eq.s32.totalorder %s29, 3
      %p246 = por %p244, %p245
      %p247 = scmp.ne.s32.totalorder %s239, %s242
      %p248 = scmp.eq.s32.totalorder %s29, 0
      %p249 = por %p247, %p248
      %p250 = scmp.ne.s32.totalorder %s239, %s242
      %p251 = scmp.eq.s32.totalorder %s34, 3
      %p252 = por %p250, %p251
      %p253 = scmp.ne.s32.totalorder %s242, %s243
      %p254 = scmp.eq.s32.totalorder %s34, 0
      %p255 = por %p253, %p254
      %p256 = scmp.ne.s32.totalorder %s242, %s243
      %p257 = scmp.eq.s32.totalorder %s35, 3
      %p258 = por %p256, %p257
      %p260 = scmp.ne.s32.totalorder %s243, %s259
      %p261 = scmp.eq.s32.totalorder %s35, 0
      %p262 = por %p260, %p261
      %s263 = ssub.s32 %s36, %s48
      %p264 = scmp.eq.s32.totalorder %s263, 0
      %s266 = sadd.s32 %s265, 1
      %s267 = scalar_select %p264, %s265, %s266
      %p270 = pneg %p264
      %p271 = scmp.eq.s32.totalorder %s29, 3
      %p272 = por %p270, %p271
      %p273 = scmp.ne.s32.totalorder %s265, %s268
      %p274 = scmp.eq.s32.totalorder %s29, 0
      %p275 = por %p273, %p274
      %p276 = scmp.ne.s32.totalorder %s265, %s268
      %p277 = scmp.eq.s32.totalorder %s34, 3
      %p278 = por %p276, %p277
      %p279 = scmp.ne.s32.totalorder %s268, %s269
      %p280 = scmp.eq.s32.totalorder %s34, 0
      %p281 = por %p279, %p280
      %p282 = scmp.ne.s32.totalorder %s268, %s269
      %p283 = scmp.eq.s32.totalorder %s35, 3
      %p284 = por %p282, %p283
      %p286 = scmp.ne.s32.totalorder %s269, %s285
      %p287 = scmp.eq.s32.totalorder %s35, 0
      %p288 = por %p286, %p287
      %s289 = ssub.s32 %s36, %s48
      %p290 = scmp.eq.s32.totalorder %s289, 0
      %s292 = sadd.s32 %s291, 1
      %s293 = scalar_select %p290, %s291, %s292
      %p296 = pneg %p290
      %p297 = scmp.eq.s32.totalorder %s29, 3
      %p298 = por %p296, %p297
      %p299 = scmp.ne.s32.totalorder %s291, %s294
      %p300 = scmp.eq.s32.totalorder %s29, 0
      %p301 = por %p299, %p300
      %p302 = scmp.ne.s32.totalorder %s291, %s294
      %p303 = scmp.eq.s32.totalorder %s34, 3
      %p304 = por %p302, %p303
      %p305 = scmp.ne.s32.totalorder %s294, %s295
      %p306 = scmp.eq.s32.totalorder %s34, 0
      %p307 = por %p305, %p306
      %p308 = scmp.ne.s32.totalorder %s294, %s295
      %p309 = scmp.eq.s32.totalorder %s35, 3
      %p310 = por %p308, %p309
      %p312 = scmp.ne.s32.totalorder %s295, %s311
      %p313 = scmp.eq.s32.totalorder %s35, 0
      %p314 = por %p312, %p313
      %s315 = ssub.s32 %s36, %s48
      %p316 = scmp.eq.s32.totalorder %s315, 0
      %s318 = sadd.s32 %s317, 1
      %s319 = scalar_select %p316, %s317, %s318
      %p322 = pneg %p316
      %p323 = scmp.eq.s32.totalorder %s29, 3
      %p324 = por %p322, %p323
      %p325 = scmp.ne.s32.totalorder %s317, %s320
      %p326 = scmp.eq.s32.totalorder %s29, 0
      %p327 = por %p325, %p326
      %p328 = scmp.ne.s32.totalorder %s317, %s320
      %p329 = scmp.eq.s32.totalorder %s34, 3
      %p330 = por %p328, %p329
      %p331 = scmp.ne.s32.totalorder %s320, %s321
      %p332 = scmp.eq.s32.totalorder %s34, 0
      %p333 = por %p331, %p332
      %p334 = scmp.ne.s32.totalorder %s320, %s321
      %p335 = scmp.eq.s32.totalorder %s35, 3
      %p336 = por %p334, %p335
      %p338 = scmp.ne.s32.totalorder %s321, %s337
      %p339 = scmp.eq.s32.totalorder %s35, 0
      %p340 = por %p338, %p339
      %s341 = ssub.s32 %s36, %s48
      %p342 = scmp.eq.s32.totalorder %s341, 0
      %s344 = sadd.s32 %s343, 1
      %s345 = scalar_select %p342, %s343, %s344
      %p348 = pneg %p342
      %p349 = scmp.eq.s32.totalorder %s29, 3
      %p350 = por %p348, %p349
      %p351 = scmp.ne.s32.totalorder %s343, %s346
      %p352 = scmp.eq.s32.totalorder %s29, 0
      %p353 = por %p351, %p352
      %p354 = scmp.ne.s32.totalorder %s343, %s346
      %p355 = scmp.eq.s32.totalorder %s34, 3
      %p356 = por %p354, %p355
      %p357 = scmp.ne.s32.totalorder %s346, %s347
      %p358 = scmp.eq.s32.totalorder %s34, 0
      %p359 = por %p357, %p358
      %p360 = scmp.ne.s32.totalorder %s346, %s347
      %p361 = scmp.eq.s32.totalorder %s35, 3
      %p362 = por %p360, %p361
      %p364 = scmp.ne.s32.totalorder %s347, %s363
      %p365 = scmp.eq.s32.totalorder %s35, 0
      %p366 = por %p364, %p365
      %s367 = ssub.s32 %s36, %s48
      %p368 = scmp.eq.s32.totalorder %s367, 0
      %s370 = sadd.s32 %s369, 1
      %s371 = scalar_select %p368, %s369, %s370
      %p374 = pneg %p368
      %p375 = scmp.eq.s32.totalorder %s29, 3
      %p376 = por %p374, %p375
      %p377 = scmp.ne.s32.totalorder %s369, %s372
      %p378 = scmp.eq.s32.totalorder %s29, 0
      %p379 = por %p377, %p378
      %p380 = scmp.ne.s32.totalorder %s369, %s372
      %p381 = scmp.eq.s32.totalorder %s34, 3
      %p382 = por %p380, %p381
      %p383 = scmp.ne.s32.totalorder %s372, %s373
      %p384 = scmp.eq.s32.totalorder %s34, 0
      %p385 = por %p383, %p384
      %p386 = scmp.ne.s32.totalorder %s372, %s373
      %p387 = scmp.eq.s32.totalorder %s35, 3
      %p388 = por %p386, %p387
      %p390 = scmp.ne.s32.totalorder %s373, %s389
      %p391 = scmp.eq.s32.totalorder %s35, 0
      %p392 = por %p390, %p391
      %s393 = ssub.s32 %s36, %s48
      %p394 = scmp.eq.s32.totalorder %s393, 0
      %s396 = sadd.s32 %s395, 1
      %s397 = scalar_select %p394, %s395, %s396
      %p400 = pneg %p394
      %p401 = scmp.eq.s32.totalorder %s29, 3
      %p402 = por %p400, %p401
      %p403 = scmp.ne.s32.totalorder %s395, %s398
      %p404 = scmp.eq.s32.totalorder %s29, 0
      %p405 = por %p403, %p404
      %p406 = scmp.ne.s32.totalorder %s395, %s398
      %p407 = scmp.eq.s32.totalorder %s34, 3
      %p408 = por %p406, %p407
      %p409 = scmp.ne.s32.totalorder %s398, %s399
      %p410 = scmp.eq.s32.totalorder %s34, 0
      %p411 = por %p409, %p410
      %p412 = scmp.ne.s32.totalorder %s398, %s399
      %p413 = scmp.eq.s32.totalorder %s35, 3
      %p414 = por %p412, %p413
      %p416 = scmp.ne.s32.totalorder %s399, %s415
      %p417 = scmp.eq.s32.totalorder %s35, 0
      %p418 = por %p416, %p417
      %s420 = sadd.s32 %s419, 1
      %p423 = scmp.eq.s32.totalorder %s29, 3
      %p424 = scmp.ne.s32.totalorder %s419, %s421
      %p425 = scmp.eq.s32.totalorder %s29, 0
      %p426 = por %p424, %p425
      %p427 = scmp.ne.s32.totalorder %s419, %s421
      %p428 = scmp.eq.s32.totalorder %s34, 3
      %p429 = por %p427, %p428
      %p430 = scmp.ne.s32.totalorder %s421, %s422
      %p431 = scmp.eq.s32.totalorder %s34, 0
      %p432 = por %p430, %p431
      %p433 = scmp.ne.s32.totalorder %s421, %s422
      %p434 = scmp.eq.s32.totalorder %s35, 3
      %p435 = por %p433, %p434
      %p437 = scmp.ne.s32.totalorder %s422, %s436
      %p438 = scmp.eq.s32.totalorder %s35, 0
      %p439 = por %p437, %p438
      %s441 = sadd.s32 %s440, 1
      %p444 = scmp.eq.s32.totalorder %s29, 3
      %p445 = scmp.ne.s32.totalorder %s440, %s442
      %p446 = scmp.eq.s32.totalorder %s29, 0
      %p447 = por %p445, %p446
      %p448 = scmp.ne.s32.totalorder %s440, %s442
      %p449 = scmp.eq.s32.totalorder %s34, 3
      %p450 = por %p448, %p449
      %p451 = scmp.ne.s32.totalorder %s442, %s443
      %p452 = scmp.eq.s32.totalorder %s34, 0
      %p453 = por %p451, %p452
      %p454 = scmp.ne.s32.totalorder %s442, %s443
      %p455 = scmp.eq.s32.totalorder %s35, 3
      %p456 = por %p454, %p455
      %p458 = scmp.ne.s32.totalorder %s443, %s457
      %p459 = scmp.eq.s32.totalorder %s35, 0
      %p460 = por %p458, %p459
      %s462 = sadd.s32 %s461, 1
      %p465 = scmp.eq.s32.totalorder %s29, 3
      %p466 = scmp.ne.s32.totalorder %s461, %s463
      %p467 = scmp.eq.s32.totalorder %s29, 0
      %p468 = por %p466, %p467
      %p469 = scmp.ne.s32.totalorder %s461, %s463
      %p470 = scmp.eq.s32.totalorder %s34, 3
      %p471 = por %p469, %p470
      %p472 = scmp.ne.s32.totalorder %s463, %s464
      %p473 = scmp.eq.s32.totalorder %s34, 0
      %p474 = por %p472, %p473
      %p475 = scmp.ne.s32.totalorder %s463, %s464
      %p476 = scmp.eq.s32.totalorder %s35, 3
      %p477 = por %p475, %p476
      %p479 = scmp.ne.s32.totalorder %s464, %s478
      %p480 = scmp.eq.s32.totalorder %s35, 0
      %p481 = por %p479, %p480
      %s483 = sadd.s32 %s482, 1
      %p486 = scmp.eq.s32.totalorder %s29, 3
      %p487 = scmp.ne.s32.totalorder %s482, %s484
      %p488 = scmp.eq.s32.totalorder %s29, 0
      %p489 = por %p487, %p488
      %p490 = scmp.ne.s32.totalorder %s482, %s484
      %p491 = scmp.eq.s32.totalorder %s34, 3
      %p492 = por %p490, %p491
      %p493 = scmp.ne.s32.totalorder %s484, %s485
      %p494 = scmp.eq.s32.totalorder %s34, 0
      %p495 = por %p493, %p494
      %p496 = scmp.ne.s32.totalorder %s484, %s485
      %p497 = scmp.eq.s32.totalorder %s35, 3
      %p498 = por %p496, %p497
      %p500 = scmp.ne.s32.totalorder %s485, %s499
      %p501 = scmp.eq.s32.totalorder %s35, 0
      %p502 = por %p500, %p501
      %s504 = sadd.s32 %s503, 1
      %p507 = scmp.eq.s32.totalorder %s29, 3
      %p508 = scmp.ne.s32.totalorder %s503, %s505
      %p509 = scmp.eq.s32.totalorder %s29, 0
      %p510 = por %p508, %p509
      %p511 = scmp.ne.s32.totalorder %s503, %s505
      %p512 = scmp.eq.s32.totalorder %s34, 3
      %p513 = por %p511, %p512
      %p514 = scmp.ne.s32.totalorder %s505, %s506
      %p515 = scmp.eq.s32.totalorder %s34, 0
      %p516 = por %p514, %p515
      %p517 = scmp.ne.s32.totalorder %s505, %s506
      %p518 = scmp.eq.s32.totalorder %s35, 3
      %p519 = por %p517, %p518
      %p521 = scmp.ne.s32.totalorder %s506, %s520
      %p522 = scmp.eq.s32.totalorder %s35, 0
      %p523 = por %p521, %p522
      %s525 = sadd.s32 %s524, 1
      %p528 = scmp.eq.s32.totalorder %s29, 3
      %p529 = scmp.ne.s32.totalorder %s524, %s526
      %p530 = scmp.eq.s32.totalorder %s29, 0
      %p531 = por %p529, %p530
      %p532 = scmp.ne.s32.totalorder %s524, %s526
      %p533 = scmp.eq.s32.totalorder %s34, 3
      %p534 = por %p532, %p533
      %p535 = scmp.ne.s32.totalorder %s526, %s527
      %p536 = scmp.eq.s32.totalorder %s34, 0
      %p537 = por %p535, %p536
      %p538 = scmp.ne.s32.totalorder %s526, %s527
      %p539 = scmp.eq.s32.totalorder %s35, 3
      %p540 = por %p538, %p539
      %p542 = scmp.ne.s32.totalorder %s527, %s541
      %p543 = scmp.eq.s32.totalorder %s35, 0
      %p544 = por %p542, %p543
      %s546 = sadd.s32 %s545, 1
      %p549 = scmp.eq.s32.totalorder %s29, 3
      %p550 = scmp.ne.s32.totalorder %s545, %s547
      %p551 = scmp.eq.s32.totalorder %s29, 0
      %p552 = por %p550, %p551
      %p553 = scmp.ne.s32.totalorder %s545, %s547
      %p554 = scmp.eq.s32.totalorder %s34, 3
      %p555 = por %p553, %p554
      %p556 = scmp.ne.s32.totalorder %s547, %s548
      %p557 = scmp.eq.s32.totalorder %s34, 0
      %p558 = por %p556, %p557
      %p559 = scmp.ne.s32.totalorder %s547, %s548
      %p560 = scmp.eq.s32.totalorder %s35, 3
      %p561 = por %p559, %p560
      %p563 = scmp.ne.s32.totalorder %s548, %s562
      %p564 = scmp.eq.s32.totalorder %s35, 0
      %p565 = por %p563, %p564
      %s567 = sadd.s32 %s566, 1
      %p570 = scmp.eq.s32.totalorder %s29, 3
      %p571 = scmp.ne.s32.totalorder %s566, %s568
      %p572 = scmp.eq.s32.totalorder %s29, 0
      %p573 = por %p571, %p572
      %p574 = scmp.ne.s32.totalorder %s566, %s568
      %p575 = scmp.eq.s32.totalorder %s34, 3
      %p576 = por %p574, %p575
      %p577 = scmp.ne.s32.totalorder %s568, %s569
      %p578 = scmp.eq.s32.totalorder %s34, 0
      %p579 = por %p577, %p578
      %p580 = scmp.ne.s32.totalorder %s568, %s569
      %p581 = scmp.eq.s32.totalorder %s35, 3
      %p582 = por %p580, %p581
      %p584 = scmp.ne.s32.totalorder %s569, %s583
      %p585 = scmp.eq.s32.totalorder %s35, 0
      %p586 = por %p584, %p585
      %p587 = scmp.le.s32.totalorder 1, %s29
      %p588 = scmp.lt.s32.totalorder %s29, 5
      %p589 = pnand %p587, %p588
      %p590 = pneg %p589
      // Predicated region
      $region9: #{tpu_custom_call.1} parent=5 // pred_check
        _
      $region10: #{tpu_custom_call.1} parent=5 // pred_check_branch
        %592 = sbr.rel (%p589) target = $region12
      $region11: #{tpu_custom_call.1} parent=5 // pred_region
        %s593 = ssub.s32 %s29, 1
        // Predicated region
        $region13: #{tpu_custom_call.1} parent=11 // pred_check
          %p594 = pneg %p62
        $region14: #{tpu_custom_call.1} parent=11 // pred_check_branch
          %596 = sbr.rel (%p594) target = $region16
        $region15: #{tpu_custom_call.1} parent=11 // pred_region
          _
        $region16: #{tpu_custom_call.1} parent=11 // pred_fallthru
          _
        // Predicated region
        $region17: #{tpu_custom_call.1} parent=11 // pred_check
          %p597 = pneg %p83
        $region18: #{tpu_custom_call.1} parent=11 // pred_check_branch
          %599 = sbr.rel (%p597) target = $region20
        $region19: #{tpu_custom_call.1} parent=11 // pred_region
          _
        $region20: #{tpu_custom_call.1} parent=11 // pred_fallthru
          _
        // Predicated region
        $region21: #{tpu_custom_call.1} parent=11 // pred_check
          %p600 = pneg %p104
        $region22: #{tpu_custom_call.1} parent=11 // pred_check_branch
          %602 = sbr.rel (%p600) target = $region24
        $region23: #{tpu_custom_call.1} parent=11 // pred_region
          _
        $region24: #{tpu_custom_call.1} parent=11 // pred_fallthru
          _
        // Predicated region
        $region25: #{tpu_custom_call.1} parent=11 // pred_check
          %p603 = pneg %p229
        $region26: #{tpu_custom_call.1} parent=11 // pred_check_branch
          %605 = sbr.rel (%p603) target = $region28
        $region27: #{tpu_custom_call.1} parent=11 // pred_region
          _
        $region28: #{tpu_custom_call.1} parent=11 // pred_fallthru
          _
        // Predicated region
        $region29: #{tpu_custom_call.1} parent=11 // pred_check
          %p606 = pneg %p432
        $region30: #{tpu_custom_call.1} parent=11 // pred_check_branch
          %608 = sbr.rel (%p606) target = $region32
        $region31: #{tpu_custom_call.1} parent=11 // pred_region
          _
        $region32: #{tpu_custom_call.1} parent=11 // pred_fallthru
          _
        // Predicated region
        $region33: #{tpu_custom_call.1} parent=11 // pred_check
          %p609 = pneg %p453
        $region34: #{tpu_custom_call.1} parent=11 // pred_check_branch
          %611 = sbr.rel (%p609) target = $region36
        $region35: #{tpu_custom_call.1} parent=11 // pred_region
          _
        $region36: #{tpu_custom_call.1} parent=11 // pred_fallthru
          _
        // Predicated region
        $region37: #{tpu_custom_call.1} parent=11 // pred_check
          %p612 = pneg %p474
        $region38: #{tpu_custom_call.1} parent=11 // pred_check_branch
          %614 = sbr.rel (%p612) target = $region40
        $region39: #{tpu_custom_call.1} parent=11 // pred_region
          _
        $region40: #{tpu_custom_call.1} parent=11 // pred_fallthru
          _
        // Predicated region
        $region41: #{tpu_custom_call.1} parent=11 // pred_check
          %p615 = pneg %p495
        $region42: #{tpu_custom_call.1} parent=11 // pred_check_branch
          %617 = sbr.rel (%p615) target = $region44
        $region43: #{tpu_custom_call.1} parent=11 // pred_region
          _
        $region44: #{tpu_custom_call.1} parent=11 // pred_fallthru
          _
        // Predicated region
        $region45: #{tpu_custom_call.1} parent=11 // pred_check
          %p618 = pneg %p516
        $region46: #{tpu_custom_call.1} parent=11 // pred_check_branch
          %620 = sbr.rel (%p618) target = $region48
        $region47: #{tpu_custom_call.1} parent=11 // pred_region
          _
        $region48: #{tpu_custom_call.1} parent=11 // pred_fallthru
          _
        // Predicated region
        $region49: #{tpu_custom_call.1} parent=11 // pred_check
          %p621 = pneg %p537
        $region50: #{tpu_custom_call.1} parent=11 // pred_check_branch
          %623 = sbr.rel (%p621) target = $region52
        $region51: #{tpu_custom_call.1} parent=11 // pred_region
          _
        $region52: #{tpu_custom_call.1} parent=11 // pred_fallthru
          _
        // Predicated region
        $region53: #{tpu_custom_call.1} parent=11 // pred_check
          %p624 = pneg %p558
        $region54: #{tpu_custom_call.1} parent=11 // pred_check_branch
          %626 = sbr.rel (%p624) target = $region56
        $region55: #{tpu_custom_call.1} parent=11 // pred_region
          _
        $region56: #{tpu_custom_call.1} parent=11 // pred_fallthru
          _
      $region12: #{tpu_custom_call.1} parent=5 // pred_fallthru
        _
      %p627 = scmp.lt.s32.totalorder %s29, 4
      // Predicated region
      $region57: #{tpu_custom_call.1} parent=5 // pred_check
        %p628 = pneg %p627
      $region58: #{tpu_custom_call.1} parent=5 // pred_check_branch
        %630 = sbr.rel (%p628) target = $region60
      $region59: #{tpu_custom_call.1} parent=5 // pred_region
        // Predicated region
        $region61: #{tpu_custom_call.1} parent=59 // pred_check
          %p631 = pneg %p124
        $region62: #{tpu_custom_call.1} parent=59 // pred_check_branch
          %633 = sbr.rel (%p631) target = $region64
        $region63: #{tpu_custom_call.1} parent=59 // pred_region
          %s634 = smul.u32 16, %s37
          %p635 = scmp.lt.s32.totalorder %s634, 31
          %s636 = scalar_select %p635, %s634, 31
          %s637 = smul.addr %s636, 8
          %s638 = scalar_lea.vmem %s3, %s637
          %s639 = smul.u32 16, %s37
        $region64: #{tpu_custom_call.1} parent=59 // pred_fallthru
          _
        // Predicated region
        $region65: #{tpu_custom_call.1} parent=59 // pred_check
          %p640 = pneg %p150
        $region66: #{tpu_custom_call.1} parent=59 // pred_check_branch
          %642 = sbr.rel (%p640) target = $region68
        $region67: #{tpu_custom_call.1} parent=59 // pred_region
          %s643 = smul.u32 16, %s37
          %p644 = scmp.lt.s32.totalorder %s643, 31
          %s645 = scalar_select %p644, %s643, 31
          %s646 = smul.addr %s645, 8
          %s647 = scalar_lea.vmem %s4, %s646
          %s648 = smul.u32 16, %s37
        $region68: #{tpu_custom_call.1} parent=59 // pred_fallthru
          _
        // Predicated region
        $region69: #{tpu_custom_call.1} parent=59 // pred_check
          %p649 = pneg %p176
        $region70: #{tpu_custom_call.1} parent=59 // pred_check_branch
          %651 = sbr.rel (%p649) target = $region72
        $region71: #{tpu_custom_call.1} parent=59 // pred_region
          %s652 = smul.u32 16, %s37
          %p653 = scmp.lt.s32.totalorder %s652, 31
          %s654 = scalar_select %p653, %s652, 31
          %s655 = smul.addr %s654, 8
          %s656 = scalar_lea.vmem %s5, %s655
          %s657 = smul.u32 16, %s37
        $region72: #{tpu_custom_call.1} parent=59 // pred_fallthru
          _
        // Predicated region
        $region73: #{tpu_custom_call.1} parent=59 // pred_check
          %p658 = pneg %p202
        $region74: #{tpu_custom_call.1} parent=59 // pred_check_branch
          %660 = sbr.rel (%p658) target = $region76
        $region75: #{tpu_custom_call.1} parent=59 // pred_region
          %p661 = scmp.lt.s32.totalorder %s37, 1
          %s662 = scalar_select %p661, %s37, 1
          %s663 = scalar_lea.vmem %s6, %s662
        $region76: #{tpu_custom_call.1} parent=59 // pred_fallthru
          _
        // Predicated region
        $region77: #{tpu_custom_call.1} parent=59 // pred_check
          %p664 = pneg %p249
        $region78: #{tpu_custom_call.1} parent=59 // pred_check_branch
          %666 = sbr.rel (%p664) target = $region80
        $region79: #{tpu_custom_call.1} parent=59 // pred_region
          %p667 = scmp.lt.s32.totalorder %s36, 1
          %s668 = scalar_select %p667, %s36, 1
          %s669 = smul.addr %s668, 2
          %s670 = smul.addr %s669, 8
          %s671 = scalar_lea.vmem %s8, %s670
        $region80: #{tpu_custom_call.1} parent=59 // pred_fallthru
          _
        // Predicated region
        $region81: #{tpu_custom_call.1} parent=59 // pred_check
          %p672 = pneg %p275
        $region82: #{tpu_custom_call.1} parent=59 // pred_check_branch
          %674 = sbr.rel (%p672) target = $region84
        $region83: #{tpu_custom_call.1} parent=59 // pred_region
          %p675 = scmp.lt.s32.totalorder %s36, 1
          %s676 = scalar_select %p675, %s36, 1
          %s677 = scalar_lea.vmem %s9, %s676
        $region84: #{tpu_custom_call.1} parent=59 // pred_fallthru
          _
        // Predicated region
        $region85: #{tpu_custom_call.1} parent=59 // pred_check
          %p678 = pneg %p301
        $region86: #{tpu_custom_call.1} parent=59 // pred_check_branch
          %680 = sbr.rel (%p678) target = $region88
        $region87: #{tpu_custom_call.1} parent=59 // pred_region
          %p681 = scmp.lt.s32.totalorder %s36, 1
          %s682 = scalar_select %p681, %s36, 1
          %s683 = smul.addr %s682, 4
          %s684 = smul.addr %s683, 8
          %s685 = scalar_lea.vmem %s10, %s684
        $region88: #{tpu_custom_call.1} parent=59 // pred_fallthru
          _
        // Predicated region
        $region89: #{tpu_custom_call.1} parent=59 // pred_check
          %p686 = pneg %p327
        $region90: #{tpu_custom_call.1} parent=59 // pred_check_branch
          %688 = sbr.rel (%p686) target = $region92
        $region91: #{tpu_custom_call.1} parent=59 // pred_region
          %p689 = scmp.lt.s32.totalorder %s36, 1
          %s690 = scalar_select %p689, %s36, 1
          %s691 = scalar_lea.vmem %s11, %s690
        $region92: #{tpu_custom_call.1} parent=59 // pred_fallthru
          _
        // Predicated region
        $region93: #{tpu_custom_call.1} parent=59 // pred_check
          %p692 = pneg %p353
        $region94: #{tpu_custom_call.1} parent=59 // pred_check_branch
          %694 = sbr.rel (%p692) target = $region96
        $region95: #{tpu_custom_call.1} parent=59 // pred_region
          %p695 = scmp.lt.s32.totalorder %s36, 1
          %s696 = scalar_select %p695, %s36, 1
          %s697 = smul.addr %s696, 36
          %s698 = smul.addr %s697, 8
          %s699 = scalar_lea.vmem %s12, %s698
        $region96: #{tpu_custom_call.1} parent=59 // pred_fallthru
          _
        // Predicated region
        $region97: #{tpu_custom_call.1} parent=59 // pred_check
          %p700 = pneg %p379
        $region98: #{tpu_custom_call.1} parent=59 // pred_check_branch
          %702 = sbr.rel (%p700) target = $region100
        $region99: #{tpu_custom_call.1} parent=59 // pred_region
          %p703 = scmp.lt.s32.totalorder %s36, 1
          %s704 = scalar_select %p703, %s36, 1
          %s705 = smul.addr %s704, 4
          %s706 = smul.addr %s705, 8
          %s707 = scalar_lea.vmem %s13, %s706
        $region100: #{tpu_custom_call.1} parent=59 // pred_fallthru
          _
        // Predicated region
        $region101: #{tpu_custom_call.1} parent=59 // pred_check
          %p708 = pneg %p405
        $region102: #{tpu_custom_call.1} parent=59 // pred_check_branch
          %710 = sbr.rel (%p708) target = $region104
        $region103: #{tpu_custom_call.1} parent=59 // pred_region
          %p711 = scmp.lt.s32.totalorder %s36, 1
          %s712 = scalar_select %p711, %s36, 1
          %s713 = scalar_lea.vmem %s14, %s712
        $region104: #{tpu_custom_call.1} parent=59 // pred_fallthru
          _
      $region60: #{tpu_custom_call.1} parent=5 // pred_fallthru
        _
      %p714 = scmp.le.s32.totalorder 1, %s29
      %p715 = scmp.lt.s32.totalorder %s29, 5
      %p716 = pnand %p714, %p715
      %p717 = pneg %p716
      // Predicated region
      $region105: #{tpu_custom_call.1} parent=5 // pred_check
        _
      $region106: #{tpu_custom_call.1} parent=5 // pred_check_branch
        %719 = sbr.rel (%p716) target = $region108
      $region107: #{tpu_custom_call.1} parent=5 // pred_region
        %s720 = ssub.s32 %s29, 1
        %p721 = pneg %p62
        %p722 = pneg %p59
        %p723 = pneg %p83
        %p724 = pneg %p80
        %p725 = pneg %p104
        %p726 = pneg %p101
        %s727 = smul.u32 16, %s39
        %p728 = scmp.lt.s32.totalorder %s727, 31
        %s729 = scalar_select %p728, %s727, 31
        %s730 = smul.addr %s729, 8
        %s731 = scalar_lea.vmem %s3, %s730
        %p732 = pneg %p130
        %p733 = pneg %p127
        %s734 = smul.u32 16, %s39
        %p735 = scmp.lt.s32.totalorder %s734, 31
        %s736 = scalar_select %p735, %s734, 31
        %s737 = smul.addr %s736, 8
        %s738 = scalar_lea.vmem %s4, %s737
        %p739 = pneg %p156
        %p740 = pneg %p153
        %s741 = smul.u32 16, %s39
        %p742 = scmp.lt.s32.totalorder %s741, 31
        %s743 = scalar_select %p742, %s741, 31
        %s744 = smul.addr %s743, 8
        %s745 = scalar_lea.vmem %s5, %s744
        %p746 = pneg %p182
        %p747 = pneg %p179
        %p748 = scmp.lt.s32.totalorder %s39, 1
        %s749 = scalar_select %p748, %s39, 1
        %s750 = scalar_lea.vmem %s6, %s749
        %p751 = pneg %p208
        %p752 = pneg %p205
        %p753 = pneg %p229
        %p754 = pneg %p226
        %p755 = scmp.lt.s32.totalorder %s38, 1
        %s756 = scalar_select %p755, %s38, 1
        %s757 = smul.addr %s756, 2
        %s758 = smul.addr %s757, 8
        %s759 = scalar_lea.vmem %s8, %s758
        %p760 = pneg %p255
        %p761 = pneg %p252
        %p762 = scmp.lt.s32.totalorder %s38, 1
        %s763 = scalar_select %p762, %s38, 1
        %s764 = scalar_lea.vmem %s9, %s763
        %p765 = pneg %p281
        %p766 = pneg %p278
        %p767 = scmp.lt.s32.totalorder %s38, 1
        %s768 = scalar_select %p767, %s38, 1
        %s769 = smul.addr %s768, 4
        %s770 = smul.addr %s769, 8
        %s771 = scalar_lea.vmem %s10, %s770
        %p772 = pneg %p307
        %p773 = pneg %p304
        %p774 = scmp.lt.s32.totalorder %s38, 1
        %s775 = scalar_select %p774, %s38, 1
        %s776 = scalar_lea.vmem %s11, %s775
        %p777 = pneg %p333
        %p778 = pneg %p330
        %p779 = scmp.lt.s32.totalorder %s38, 1
        %s780 = scalar_select %p779, %s38, 1
        %s781 = smul.addr %s780, 36
        %s782 = smul.addr %s781, 8
        %s783 = scalar_lea.vmem %s12, %s782
        %p784 = pneg %p359
        %p785 = pneg %p356
        %p786 = scmp.lt.s32.totalorder %s38, 1
        %s787 = scalar_select %p786, %s38, 1
        %s788 = smul.addr %s787, 4
        %s789 = smul.addr %s788, 8
        %s790 = scalar_lea.vmem %s13, %s789
        %p791 = pneg %p385
        %p792 = pneg %p382
        %p793 = scmp.lt.s32.totalorder %s38, 1
        %s794 = scalar_select %p793, %s38, 1
        %s795 = scalar_lea.vmem %s14, %s794
        %p796 = pneg %p411
        %p797 = pneg %p408
        %p798 = pneg %p432
        %p799 = pneg %p429
        %p800 = pneg %p453
        %p801 = pneg %p450
        %p802 = pneg %p474
        %p803 = pneg %p471
        %p804 = pneg %p495
        %p805 = pneg %p492
        %p806 = pneg %p516
        %p807 = pneg %p513
        %p808 = pneg %p537
        %p809 = pneg %p534
        %p810 = pneg %p558
        %p811 = pneg %p555
        %p812 = pneg %p579
        %p813 = pneg %p576
        %s814 = smul.u32 16, %s39
        %p815 = scmp.lt.s32.totalorder %s814, 31
        %s816 = scalar_select %p815, %s814, 31
        %s817 = smul.addr %s816, 8
        %s818 = scalar_lea.vmem %s3, %s817
        %s819 = smul.u32 16, %s39
        %s820 = smul.u32 16, %s39
        %p821 = scmp.lt.s32.totalorder %s820, 31
        %s822 = scalar_select %p821, %s820, 31
        %s823 = smul.addr %s822, 8
        %s824 = scalar_lea.vmem %s4, %s823
        %s825 = smul.u32 16, %s39
        %s826 = smul.u32 16, %s39
        %p827 = scmp.lt.s32.totalorder %s826, 31
        %s828 = scalar_select %p827, %s826, 31
        %s829 = smul.addr %s828, 8
        %s830 = scalar_lea.vmem %s5, %s829
        %s831 = smul.u32 16, %s39
        %p832 = scmp.lt.s32.totalorder %s39, 1
        %s833 = scalar_select %p832, %s39, 1
        %s834 = scalar_lea.vmem %s6, %s833
        %p835 = scmp.lt.s32.totalorder %s38, 1
        %s836 = scalar_select %p835, %s38, 1
        %s837 = smul.addr %s836, 2
        %s838 = smul.addr %s837, 8
        %s839 = scalar_lea.vmem %s8, %s838
        %p840 = scmp.lt.s32.totalorder %s38, 1
        %s841 = scalar_select %p840, %s38, 1
        %s842 = scalar_lea.vmem %s9, %s841
        %p843 = scmp.lt.s32.totalorder %s38, 1
        %s844 = scalar_select %p843, %s38, 1
        %s845 = smul.addr %s844, 4
        %s846 = smul.addr %s845, 8
        %s847 = scalar_lea.vmem %s10, %s846
        %p848 = scmp.lt.s32.totalorder %s38, 1
        %s849 = scalar_select %p848, %s38, 1
        %s850 = scalar_lea.vmem %s11, %s849
        %p851 = scmp.lt.s32.totalorder %s38, 1
        %s852 = scalar_select %p851, %s38, 1
        %s853 = smul.addr %s852, 36
        %s854 = smul.addr %s853, 8
        %s855 = scalar_lea.vmem %s12, %s854
        %p856 = scmp.lt.s32.totalorder %s38, 1
        %s857 = scalar_select %p856, %s38, 1
        %s858 = smul.addr %s857, 4
        %s859 = smul.addr %s858, 8
        %s860 = scalar_lea.vmem %s13, %s859
        %p861 = scmp.lt.s32.totalorder %s38, 1
        %s862 = scalar_select %p861, %s38, 1
        %s863 = scalar_lea.vmem %s14, %s862
        %p865 = scmp.eq.s32.totalorder %s38, 0
        %p866 = scmp.eq.s32.totalorder %s39, 0
        %p867 = pnand %p865, %p866
        %p868 = pneg %p867
        // Predicated region
        $region109: #{tpu_custom_call.1} parent=107 // pred_check
          _
        $region110: #{tpu_custom_call.1} parent=107 // pred_check_branch
          %870 = sbr.rel (%p867) target = $region112
        $region111: #{tpu_custom_call.1} parent=107 // pred_region
          %v871 = vld [vmem:[%s0] sm:$0xff]
          %v872 = vld [vmem:[%s0 + $0x8] sm:$0xff]
          %v873 = vld [vmem:[%s0 + $0x10] sm:$0xff]
          %v874 = vld [vmem:[%s0 + $0x18] sm:$0xff]
          %v875 = vld [vmem:[%s1] sm:$0x1]
          %877 = vset.pattern.permute.xlu0 0
          %878 = vperm.xlu0 %877, %v871
          %v879 = vpop.permute.xlu0 %878
          %882 = vset.pattern.permute.xlu0 0
          %883 = vperm.xlu0 %882, %v872
          %v884 = vpop.permute.xlu0 %883
          %887 = vset.pattern.permute.xlu0 0
          %888 = vperm.xlu0 %887, %v873
          %v889 = vpop.permute.xlu0 %888
          %892 = vset.pattern.permute.xlu0 0
          %893 = vperm.xlu0 %892, %v874
          %v894 = vpop.permute.xlu0 %893
          %v897 = vlaneseq
          %v898 = vshrl.u32 %v897, 7
          %v899 = vsub.s32 0, %v898
          %v900 = vrot.slane %v875, %v899
          %v902 = vmul.f32 %v879, %v900
          %v903 = vmul.f32 %v884, %v900
          %v904 = vmul.f32 %v889, %v900
          %v905 = vmul.f32 %v894, %v900
          %v906 = vld [vmem:[%s2] sm:$0x1]
          %v908 = vlaneseq
          %v909 = vshrl.u32 %v908, 7
          %v910 = vsub.s32 0, %v909
          %v911 = vrot.slane %v906, %v910
          %v913 = vadd.f32 %v902, %v911
          %v914 = vadd.f32 %v903, %v911
          %v915 = vadd.f32 %v904, %v911
          %v916 = vadd.f32 %v905, %v911
          %vm917 = vcmask 261120
          %918 = vst.msk [vmem:[#allocation2] sm:$0xff] %vm917, %v913
          %919 = vst.msk [vmem:[#allocation2 + $0x8] sm:$0xff] %vm917, %v914
          %920 = vst.msk [vmem:[#allocation2 + $0x10] sm:$0xff] %vm917, %v915
          %921 = vst.msk [vmem:[#allocation2 + $0x18] sm:$0xff] %vm917, %v916
        $region112: #{tpu_custom_call.1} parent=107 // pred_fallthru
          _
        // Predicated region
        $region113: #{tpu_custom_call.1} parent=107 // pred_check
          %p922 = pneg %p866
        $region114: #{tpu_custom_call.1} parent=107 // pred_check_branch
          %924 = sbr.rel (%p922) target = $region116
        $region115: #{tpu_custom_call.1} parent=107 // pred_region
          %vm925 = vcmask 261120
          %926 = vst.msk [vmem:[#allocation3] sm:$0xff] %vm925, 0.0
          %927 = vst.msk [vmem:[#allocation3 + $0x8] sm:$0xff] %vm925, 0.0
          %928 = vst.msk [vmem:[#allocation3 + $0x10] sm:$0xff] %vm925, 0.0
          %929 = vst.msk [vmem:[#allocation3 + $0x18] sm:$0xff] %vm925, 0.0
        $region116: #{tpu_custom_call.1} parent=107 // pred_fallthru
          _
        %v930 = vld [vmem:[%s818] sm:$0xff]
        %v931 = vld [vmem:[%s818 + $0x8] sm:$0xff]
        %v932 = vld [vmem:[%s818 + $0x10] sm:$0xff]
        %v933 = vld [vmem:[%s818 + $0x18] sm:$0xff]
        %v934 = vld [vmem:[%s818 + $0x20] sm:$0xff]
        %v935 = vld [vmem:[%s818 + $0x28] sm:$0xff]
        %v936 = vld [vmem:[%s818 + $0x30] sm:$0xff]
        %v937 = vld [vmem:[%s818 + $0x38] sm:$0xff]
        %v938 = vld [vmem:[%s818 + $0x40] sm:$0xff]
        %v939 = vld [vmem:[%s818 + $0x48] sm:$0xff]
        %v940 = vld [vmem:[%s818 + $0x50] sm:$0xff]
        %v941 = vld [vmem:[%s818 + $0x58] sm:$0xff]
        %v942 = vld [vmem:[%s818 + $0x60] sm:$0xff]
        %v943 = vld [vmem:[%s818 + $0x68] sm:$0xff]
        %v944 = vld [vmem:[%s818 + $0x70] sm:$0xff]
        %v945 = vld [vmem:[%s818 + $0x78] sm:$0xff]
        %v946 = vmul.f32 %v930, %v930
        %v947 = vmul.f32 %v931, %v931
        %v948 = vmul.f32 %v932, %v932
        %v949 = vmul.f32 %v933, %v933
        %v950 = vmul.f32 %v934, %v934
        %v951 = vmul.f32 %v935, %v935
        %v952 = vmul.f32 %v936, %v936
        %v953 = vmul.f32 %v937, %v937
        %v954 = vmul.f32 %v938, %v938
        %v955 = vmul.f32 %v939, %v939
        %v956 = vmul.f32 %v940, %v940
        %v957 = vmul.f32 %v941, %v941
        %v958 = vmul.f32 %v942, %v942
        %v959 = vmul.f32 %v943, %v943
        %v960 = vmul.f32 %v944, %v944
        %v961 = vmul.f32 %v945, %v945
        %978 = vrot.lane.b32.xlu0 %v946, 127
        %v979 = vpop.permute.xlu0 %978
        %980 = vrot.lane.b32.xlu0 %v947, 127
        %v981 = vpop.permute.xlu0 %980
        %982 = vrot.lane.b32.xlu0 %v948, 127
        %v983 = vpop.permute.xlu0 %982
        %984 = vrot.lane.b32.xlu0 %v949, 127
        %v985 = vpop.permute.xlu0 %984
        %986 = vrot.lane.b32.xlu0 %v950, 127
        %v987 = vpop.permute.xlu0 %986
        %988 = vrot.lane.b32.xlu0 %v951, 127
        %v989 = vpop.permute.xlu0 %988
        %990 = vrot.lane.b32.xlu0 %v952, 127
        %v991 = vpop.permute.xlu0 %990
        %992 = vrot.lane.b32.xlu0 %v953, 127
        %v993 = vpop.permute.xlu0 %992
        %994 = vrot.lane.b32.xlu0 %v954, 127
        %v995 = vpop.permute.xlu0 %994
        %996 = vrot.lane.b32.xlu0 %v955, 127
        %v997 = vpop.permute.xlu0 %996
        %998 = vrot.lane.b32.xlu0 %v956, 127
        %v999 = vpop.permute.xlu0 %998
        %1000 = vrot.lane.b32.xlu0 %v957, 127
        %v1001 = vpop.permute.xlu0 %1000
        %1002 = vrot.lane.b32.xlu0 %v958, 127
        %v1003 = vpop.permute.xlu0 %1002
        %1004 = vrot.lane.b32.xlu0 %v959, 127
        %v1005 = vpop.permute.xlu0 %1004
        %1006 = vrot.lane.b32.xlu0 %v960, 127
        %v1007 = vpop.permute.xlu0 %1006
        %1008 = vrot.lane.b32.xlu0 %v961, 127
        %v1009 = vpop.permute.xlu0 %1008
        %v1026 = vadd.f32 %v946, %v979
        %v1027 = vadd.f32 %v947, %v981
        %v1028 = vadd.f32 %v948, %v983
        %v1029 = vadd.f32 %v949, %v985
        %v1030 = vadd.f32 %v950, %v987
        %v1031 = vadd.f32 %v951, %v989
        %v1032 = vadd.f32 %v952, %v991
        %v1033 = vadd.f32 %v953, %v993
        %v1034 = vadd.f32 %v954, %v995
        %v1035 = vadd.f32 %v955, %v997
        %v1036 = vadd.f32 %v956, %v999
        %v1037 = vadd.f32 %v957, %v1001
        %v1038 = vadd.f32 %v958, %v1003
        %v1039 = vadd.f32 %v959, %v1005
        %v1040 = vadd.f32 %v960, %v1007
        %v1041 = vadd.f32 %v961, %v1009
        %1042 = vrot.lane.b32.xlu0 %v946, 126
        %v1043 = vpop.permute.xlu0 %1042
        %1044 = vrot.lane.b32.xlu0 %v947, 126
        %v1045 = vpop.permute.xlu0 %1044
        %1046 = vrot.lane.b32.xlu0 %v948, 126
        %v1047 = vpop.permute.xlu0 %1046
        %1048 = vrot.lane.b32.xlu0 %v949, 126
        %v1049 = vpop.permute.xlu0 %1048
        %1050 = vrot.lane.b32.xlu0 %v950, 126
        %v1051 = vpop.permute.xlu0 %1050
        %1052 = vrot.lane.b32.xlu0 %v951, 126
        %v1053 = vpop.permute.xlu0 %1052
        %1054 = vrot.lane.b32.xlu0 %v952, 126
        %v1055 = vpop.permute.xlu0 %1054
        %1056 = vrot.lane.b32.xlu0 %v953, 126
        %v1057 = vpop.permute.xlu0 %1056
        %1058 = vrot.lane.b32.xlu0 %v954, 126
        %v1059 = vpop.permute.xlu0 %1058
        %1060 = vrot.lane.b32.xlu0 %v955, 126
        %v1061 = vpop.permute.xlu0 %1060
        %1062 = vrot.lane.b32.xlu0 %v956, 126
        %v1063 = vpop.permute.xlu0 %1062
        %1064 = vrot.lane.b32.xlu0 %v957, 126
        %v1065 = vpop.permute.xlu0 %1064
        %1066 = vrot.lane.b32.xlu0 %v958, 126
        %v1067 = vpop.permute.xlu0 %1066
        %1068 = vrot.lane.b32.xlu0 %v959, 126
        %v1069 = vpop.permute.xlu0 %1068
        %1070 = vrot.lane.b32.xlu0 %v960, 126
        %v1071 = vpop.permute.xlu0 %1070
        %1072 = vrot.lane.b32.xlu0 %v961, 126
        %v1073 = vpop.permute.xlu0 %1072
        %v1090 = vadd.f32 %v1026, %v1043
        %v1091 = vadd.f32 %v1027, %v1045
        %v1092 = vadd.f32 %v1028, %v1047
        %v1093 = vadd.f32 %v1029, %v1049
        %v1094 = vadd.f32 %v1030, %v1051
        %v1095 = vadd.f32 %v1031, %v1053
        %v1096 = vadd.f32 %v1032, %v1055
        %v1097 = vadd.f32 %v1033, %v1057
        %v1098 = vadd.f32 %v1034, %v1059
        %v1099 = vadd.f32 %v1035, %v1061
        %v1100 = vadd.f32 %v1036, %v1063
        %v1101 = vadd.f32 %v1037, %v1065
        %v1102 = vadd.f32 %v1038, %v1067
        %v1103 = vadd.f32 %v1039, %v1069
        %v1104 = vadd.f32 %v1040, %v1071
        %v1105 = vadd.f32 %v1041, %v1073
        %v1106 = vadd.f32 %v1090, 1e-12
        %v1107 = vadd.f32 %v1091, 1e-12
        %v1108 = vadd.f32 %v1092, 1e-12
        %v1109 = vadd.f32 %v1093, 1e-12
        %v1110 = vadd.f32 %v1094, 1e-12
        %v1111 = vadd.f32 %v1095, 1e-12
        %v1112 = vadd.f32 %v1096, 1e-12
        %v1113 = vadd.f32 %v1097, 1e-12
        %v1114 = vadd.f32 %v1098, 1e-12
        %v1115 = vadd.f32 %v1099, 1e-12
        %v1116 = vadd.f32 %v1100, 1e-12
        %v1117 = vadd.f32 %v1101, 1e-12
        %v1118 = vadd.f32 %v1102, 1e-12
        %v1119 = vadd.f32 %v1103, 1e-12
        %v1120 = vadd.f32 %v1104, 1e-12
        %v1121 = vadd.f32 %v1105, 1e-12
        %v1122 = vrsqrt.pop %v1106
        %v1123 = vrsqrt.pop %v1107
        %v1124 = vrsqrt.pop %v1108
        %v1125 = vrsqrt.pop %v1109
        %v1126 = vrsqrt.pop %v1110
        %v1127 = vrsqrt.pop %v1111
        %v1128 = vrsqrt.pop %v1112
        %v1129 = vrsqrt.pop %v1113
        %v1130 = vrsqrt.pop %v1114
        %v1131 = vrsqrt.pop %v1115
        %v1132 = vrsqrt.pop %v1116
        %v1133 = vrsqrt.pop %v1117
        %v1134 = vrsqrt.pop %v1118
        %v1135 = vrsqrt.pop %v1119
        %v1136 = vrsqrt.pop %v1120
        %v1137 = vrsqrt.pop %v1121
        %v1138 = vmul.f32 %v930, %v1122
        %v1139 = vmul.f32 %v931, %v1123
        %v1140 = vmul.f32 %v932, %v1124
        %v1141 = vmul.f32 %v933, %v1125
        %v1142 = vmul.f32 %v934, %v1126
        %v1143 = vmul.f32 %v935, %v1127
        %v1144 = vmul.f32 %v936, %v1128
        %v1145 = vmul.f32 %v937, %v1129
        %v1146 = vmul.f32 %v938, %v1130
        %v1147 = vmul.f32 %v939, %v1131
        %v1148 = vmul.f32 %v940, %v1132
        %v1149 = vmul.f32 %v941, %v1133
        %v1150 = vmul.f32 %v942, %v1134
        %v1151 = vmul.f32 %v943, %v1135
        %v1152 = vmul.f32 %v944, %v1136
        %v1153 = vmul.f32 %v945, %v1137
        %1170 = vrot.lane.b32.xlu0 %v1122, 1
        %v1171 = vpop.permute.xlu0 %1170
        %1172 = vrot.lane.b32.xlu0 %v1123, 1
        %v1173 = vpop.permute.xlu0 %1172
        %1174 = vrot.lane.b32.xlu0 %v1124, 1
        %v1175 = vpop.permute.xlu0 %1174
        %1176 = vrot.lane.b32.xlu0 %v1125, 1
        %v1177 = vpop.permute.xlu0 %1176
        %1178 = vrot.lane.b32.xlu0 %v1126, 1
        %v1179 = vpop.permute.xlu0 %1178
        %1180 = vrot.lane.b32.xlu0 %v1127, 1
        %v1181 = vpop.permute.xlu0 %1180
        %1182 = vrot.lane.b32.xlu0 %v1128, 1
        %v1183 = vpop.permute.xlu0 %1182
        %1184 = vrot.lane.b32.xlu0 %v1129, 1
        %v1185 = vpop.permute.xlu0 %1184
        %1186 = vrot.lane.b32.xlu0 %v1130, 1
        %v1187 = vpop.permute.xlu0 %1186
        %1188 = vrot.lane.b32.xlu0 %v1131, 1
        %v1189 = vpop.permute.xlu0 %1188
        %1190 = vrot.lane.b32.xlu0 %v1132, 1
        %v1191 = vpop.permute.xlu0 %1190
        %1192 = vrot.lane.b32.xlu0 %v1133, 1
        %v1193 = vpop.permute.xlu0 %1192
        %1194 = vrot.lane.b32.xlu0 %v1134, 1
        %v1195 = vpop.permute.xlu0 %1194
        %1196 = vrot.lane.b32.xlu0 %v1135, 1
        %v1197 = vpop.permute.xlu0 %1196
        %1198 = vrot.lane.b32.xlu0 %v1136, 1
        %v1199 = vpop.permute.xlu0 %1198
        %1200 = vrot.lane.b32.xlu0 %v1137, 1
        %v1201 = vpop.permute.xlu0 %1200
        %v1218 = vmul.f32 %v930, %v1171
        %v1219 = vmul.f32 %v931, %v1173
        %v1220 = vmul.f32 %v932, %v1175
        %v1221 = vmul.f32 %v933, %v1177
        %v1222 = vmul.f32 %v934, %v1179
        %v1223 = vmul.f32 %v935, %v1181
        %v1224 = vmul.f32 %v936, %v1183
        %v1225 = vmul.f32 %v937, %v1185
        %v1226 = vmul.f32 %v938, %v1187
        %v1227 = vmul.f32 %v939, %v1189
        %v1228 = vmul.f32 %v940, %v1191
        %v1229 = vmul.f32 %v941, %v1193
        %v1230 = vmul.f32 %v942, %v1195
        %v1231 = vmul.f32 %v943, %v1197
        %v1232 = vmul.f32 %v944, %v1199
        %v1233 = vmul.f32 %v945, %v1201
        %1234 = vrot.lane.b32.xlu0 %v1122, 2
        %v1235 = vpop.permute.xlu0 %1234
        %1236 = vrot.lane.b32.xlu0 %v1123, 2
        %v1237 = vpop.permute.xlu0 %1236
        %1238 = vrot.lane.b32.xlu0 %v1124, 2
        %v1239 = vpop.permute.xlu0 %1238
        %1240 = vrot.lane.b32.xlu0 %v1125, 2
        %v1241 = vpop.permute.xlu0 %1240
        %1242 = vrot.lane.b32.xlu0 %v1126, 2
        %v1243 = vpop.permute.xlu0 %1242
        %1244 = vrot.lane.b32.xlu0 %v1127, 2
        %v1245 = vpop.permute.xlu0 %1244
        %1246 = vrot.lane.b32.xlu0 %v1128, 2
        %v1247 = vpop.permute.xlu0 %1246
        %1248 = vrot.lane.b32.xlu0 %v1129, 2
        %v1249 = vpop.permute.xlu0 %1248
        %1250 = vrot.lane.b32.xlu0 %v1130, 2
        %v1251 = vpop.permute.xlu0 %1250
        %1252 = vrot.lane.b32.xlu0 %v1131, 2
        %v1253 = vpop.permute.xlu0 %1252
        %1254 = vrot.lane.b32.xlu0 %v1132, 2
        %v1255 = vpop.permute.xlu0 %1254
        %1256 = vrot.lane.b32.xlu0 %v1133, 2
        %v1257 = vpop.permute.xlu0 %1256
        %1258 = vrot.lane.b32.xlu0 %v1134, 2
        %v1259 = vpop.permute.xlu0 %1258
        %1260 = vrot.lane.b32.xlu0 %v1135, 2
        %v1261 = vpop.permute.xlu0 %1260
        %1262 = vrot.lane.b32.xlu0 %v1136, 2
        %v1263 = vpop.permute.xlu0 %1262
        %1264 = vrot.lane.b32.xlu0 %v1137, 2
        %v1265 = vpop.permute.xlu0 %1264
        %v1282 = vmul.f32 %v930, %v1235
        %v1283 = vmul.f32 %v931, %v1237
        %v1284 = vmul.f32 %v932, %v1239
        %v1285 = vmul.f32 %v933, %v1241
        %v1286 = vmul.f32 %v934, %v1243
        %v1287 = vmul.f32 %v935, %v1245
        %v1288 = vmul.f32 %v936, %v1247
        %v1289 = vmul.f32 %v937, %v1249
        %v1290 = vmul.f32 %v938, %v1251
        %v1291 = vmul.f32 %v939, %v1253
        %v1292 = vmul.f32 %v940, %v1255
        %v1293 = vmul.f32 %v941, %v1257
        %v1294 = vmul.f32 %v942, %v1259
        %v1295 = vmul.f32 %v943, %v1261
        %v1296 = vmul.f32 %v944, %v1263
        %v1297 = vmul.f32 %v945, %v1265
        %v1298 = vmul.f32 %v1138, 1.7320508
        %v1299 = vmul.f32 %v1139, 1.7320508
        %v1300 = vmul.f32 %v1140, 1.7320508
        %v1301 = vmul.f32 %v1141, 1.7320508
        %v1302 = vmul.f32 %v1142, 1.7320508
        %v1303 = vmul.f32 %v1143, 1.7320508
        %v1304 = vmul.f32 %v1144, 1.7320508
        %v1305 = vmul.f32 %v1145, 1.7320508
        %v1306 = vmul.f32 %v1146, 1.7320508
        %v1307 = vmul.f32 %v1147, 1.7320508
        %v1308 = vmul.f32 %v1148, 1.7320508
        %v1309 = vmul.f32 %v1149, 1.7320508
        %v1310 = vmul.f32 %v1150, 1.7320508
        %v1311 = vmul.f32 %v1151, 1.7320508
        %v1312 = vmul.f32 %v1152, 1.7320508
        %v1313 = vmul.f32 %v1153, 1.7320508
        %v1314 = vmul.f32 %v1218, 1.7320508
        %v1315 = vmul.f32 %v1219, 1.7320508
        %v1316 = vmul.f32 %v1220, 1.7320508
        %v1317 = vmul.f32 %v1221, 1.7320508
        %v1318 = vmul.f32 %v1222, 1.7320508
        %v1319 = vmul.f32 %v1223, 1.7320508
        %v1320 = vmul.f32 %v1224, 1.7320508
        %v1321 = vmul.f32 %v1225, 1.7320508
        %v1322 = vmul.f32 %v1226, 1.7320508
        %v1323 = vmul.f32 %v1227, 1.7320508
        %v1324 = vmul.f32 %v1228, 1.7320508
        %v1325 = vmul.f32 %v1229, 1.7320508
        %v1326 = vmul.f32 %v1230, 1.7320508
        %v1327 = vmul.f32 %v1231, 1.7320508
        %v1328 = vmul.f32 %v1232, 1.7320508
        %v1329 = vmul.f32 %v1233, 1.7320508
        %v1330 = vmul.f32 %v1282, 1.7320508
        %v1331 = vmul.f32 %v1283, 1.7320508
        %v1332 = vmul.f32 %v1284, 1.7320508
        %v1333 = vmul.f32 %v1285, 1.7320508
        %v1334 = vmul.f32 %v1286, 1.7320508
        %v1335 = vmul.f32 %v1287, 1.7320508
        %v1336 = vmul.f32 %v1288, 1.7320508
        %v1337 = vmul.f32 %v1289, 1.7320508
        %v1338 = vmul.f32 %v1290, 1.7320508
        %v1339 = vmul.f32 %v1291, 1.7320508
        %v1340 = vmul.f32 %v1292, 1.7320508
        %v1341 = vmul.f32 %v1293, 1.7320508
        %v1342 = vmul.f32 %v1294, 1.7320508
        %v1343 = vmul.f32 %v1295, 1.7320508
        %v1344 = vmul.f32 %v1296, 1.7320508
        %v1345 = vmul.f32 %v1297, 1.7320508
        %v1346 = vmul.f32 %v1138, 3.8729835
        %v1347 = vmul.f32 %v1139, 3.8729835
        %v1348 = vmul.f32 %v1140, 3.8729835
        %v1349 = vmul.f32 %v1141, 3.8729835
        %v1350 = vmul.f32 %v1142, 3.8729835
        %v1351 = vmul.f32 %v1143, 3.8729835
        %v1352 = vmul.f32 %v1144, 3.8729835
        %v1353 = vmul.f32 %v1145, 3.8729835
        %v1354 = vmul.f32 %v1146, 3.8729835
        %v1355 = vmul.f32 %v1147, 3.8729835
        %v1356 = vmul.f32 %v1148, 3.8729835
        %v1357 = vmul.f32 %v1149, 3.8729835
        %v1358 = vmul.f32 %v1150, 3.8729835
        %v1359 = vmul.f32 %v1151, 3.8729835
        %v1360 = vmul.f32 %v1152, 3.8729835
        %v1361 = vmul.f32 %v1153, 3.8729835
        %1378 = vrot.lane.b32.xlu0 %v1218, 127
        %v1379 = vpop.permute.xlu0 %1378
        %1380 = vrot.lane.b32.xlu0 %v1219, 127
        %v1381 = vpop.permute.xlu0 %1380
        %1382 = vrot.lane.b32.xlu0 %v1220, 127
        %v1383 = vpop.permute.xlu0 %1382
        %1384 = vrot.lane.b32.xlu0 %v1221, 127
        %v1385 = vpop.permute.xlu0 %1384
        %1386 = vrot.lane.b32.xlu0 %v1222, 127
        %v1387 = vpop.permute.xlu0 %1386
        %1388 = vrot.lane.b32.xlu0 %v1223, 127
        %v1389 = vpop.permute.xlu0 %1388
        %1390 = vrot.lane.b32.xlu0 %v1224, 127
        %v1391 = vpop.permute.xlu0 %1390
        %1392 = vrot.lane.b32.xlu0 %v1225, 127
        %v1393 = vpop.permute.xlu0 %1392
        %1394 = vrot.lane.b32.xlu0 %v1226, 127
        %v1395 = vpop.permute.xlu0 %1394
        %1396 = vrot.lane.b32.xlu0 %v1227, 127
        %v1397 = vpop.permute.xlu0 %1396
        %1398 = vrot.lane.b32.xlu0 %v1228, 127
        %v1399 = vpop.permute.xlu0 %1398
        %1400 = vrot.lane.b32.xlu0 %v1229, 127
        %v1401 = vpop.permute.xlu0 %1400
        %1402 = vrot.lane.b32.xlu0 %v1230, 127
        %v1403 = vpop.permute.xlu0 %1402
        %1404 = vrot.lane.b32.xlu0 %v1231, 127
        %v1405 = vpop.permute.xlu0 %1404
        %1406 = vrot.lane.b32.xlu0 %v1232, 127
        %v1407 = vpop.permute.xlu0 %1406
        %1408 = vrot.lane.b32.xlu0 %v1233, 127
        %v1409 = vpop.permute.xlu0 %1408
        %v1426 = vmul.f32 %v1346, %v1379
        %v1427 = vmul.f32 %v1347, %v1381
        %v1428 = vmul.f32 %v1348, %v1383
        %v1429 = vmul.f32 %v1349, %v1385
        %v1430 = vmul.f32 %v1350, %v1387
        %v1431 = vmul.f32 %v1351, %v1389
        %v1432 = vmul.f32 %v1352, %v1391
        %v1433 = vmul.f32 %v1353, %v1393
        %v1434 = vmul.f32 %v1354, %v1395
        %v1435 = vmul.f32 %v1355, %v1397
        %v1436 = vmul.f32 %v1356, %v1399
        %v1437 = vmul.f32 %v1357, %v1401
        %v1438 = vmul.f32 %v1358, %v1403
        %v1439 = vmul.f32 %v1359, %v1405
        %v1440 = vmul.f32 %v1360, %v1407
        %v1441 = vmul.f32 %v1361, %v1409
        %v1442 = vmul.f32 %v1218, 3.8729835
        %v1443 = vmul.f32 %v1219, 3.8729835
        %v1444 = vmul.f32 %v1220, 3.8729835
        %v1445 = vmul.f32 %v1221, 3.8729835
        %v1446 = vmul.f32 %v1222, 3.8729835
        %v1447 = vmul.f32 %v1223, 3.8729835
        %v1448 = vmul.f32 %v1224, 3.8729835
        %v1449 = vmul.f32 %v1225, 3.8729835
        %v1450 = vmul.f32 %v1226, 3.8729835
        %v1451 = vmul.f32 %v1227, 3.8729835
        %v1452 = vmul.f32 %v1228, 3.8729835
        %v1453 = vmul.f32 %v1229, 3.8729835
        %v1454 = vmul.f32 %v1230, 3.8729835
        %v1455 = vmul.f32 %v1231, 3.8729835
        %v1456 = vmul.f32 %v1232, 3.8729835
        %v1457 = vmul.f32 %v1233, 3.8729835
        %1474 = vrot.lane.b32.xlu0 %v1282, 127
        %v1475 = vpop.permute.xlu0 %1474
        %1476 = vrot.lane.b32.xlu0 %v1283, 127
        %v1477 = vpop.permute.xlu0 %1476
        %1478 = vrot.lane.b32.xlu0 %v1284, 127
        %v1479 = vpop.permute.xlu0 %1478
        %1480 = vrot.lane.b32.xlu0 %v1285, 127
        %v1481 = vpop.permute.xlu0 %1480
        %1482 = vrot.lane.b32.xlu0 %v1286, 127
        %v1483 = vpop.permute.xlu0 %1482
        %1484 = vrot.lane.b32.xlu0 %v1287, 127
        %v1485 = vpop.permute.xlu0 %1484
        %1486 = vrot.lane.b32.xlu0 %v1288, 127
        %v1487 = vpop.permute.xlu0 %1486
        %1488 = vrot.lane.b32.xlu0 %v1289, 127
        %v1489 = vpop.permute.xlu0 %1488
        %1490 = vrot.lane.b32.xlu0 %v1290, 127
        %v1491 = vpop.permute.xlu0 %1490
        %1492 = vrot.lane.b32.xlu0 %v1291, 127
        %v1493 = vpop.permute.xlu0 %1492
        %1494 = vrot.lane.b32.xlu0 %v1292, 127
        %v1495 = vpop.permute.xlu0 %1494
        %1496 = vrot.lane.b32.xlu0 %v1293, 127
        %v1497 = vpop.permute.xlu0 %1496
        %1498 = vrot.lane.b32.xlu0 %v1294, 127
        %v1499 = vpop.permute.xlu0 %1498
        %1500 = vrot.lane.b32.xlu0 %v1295, 127
        %v1501 = vpop.permute.xlu0 %1500
        %1502 = vrot.lane.b32.xlu0 %v1296, 127
        %v1503 = vpop.permute.xlu0 %1502
        %1504 = vrot.lane.b32.xlu0 %v1297, 127
        %v1505 = vpop.permute.xlu0 %1504
        %v1522 = vmul.f32 %v1442, %v1475
        %v1523 = vmul.f32 %v1443, %v1477
        %v1524 = vmul.f32 %v1444, %v1479
        %v1525 = vmul.f32 %v1445, %v1481
        %v1526 = vmul.f32 %v1446, %v1483
        %v1527 = vmul.f32 %v1447, %v1485
        %v1528 = vmul.f32 %v1448, %v1487
        %v1529 = vmul.f32 %v1449, %v1489
        %v1530 = vmul.f32 %v1450, %v1491
        %v1531 = vmul.f32 %v1451, %v1493
        %v1532 = vmul.f32 %v1452, %v1495
        %v1533 = vmul.f32 %v1453, %v1497
        %v1534 = vmul.f32 %v1454, %v1499
        %v1535 = vmul.f32 %v1455, %v1501
        %v1536 = vmul.f32 %v1456, %v1503
        %v1537 = vmul.f32 %v1457, %v1505
        %v1538 = vmul.f32 %v1282, 3.0
        %v1539 = vmul.f32 %v1283, 3.0
        %v1540 = vmul.f32 %v1284, 3.0
        %v1541 = vmul.f32 %v1285, 3.0
        %v1542 = vmul.f32 %v1286, 3.0
        %v1543 = vmul.f32 %v1287, 3.0
        %v1544 = vmul.f32 %v1288, 3.0
        %v1545 = vmul.f32 %v1289, 3.0
        %v1546 = vmul.f32 %v1290, 3.0
        %v1547 = vmul.f32 %v1291, 3.0
        %v1548 = vmul.f32 %v1292, 3.0
        %v1549 = vmul.f32 %v1293, 3.0
        %v1550 = vmul.f32 %v1294, 3.0
        %v1551 = vmul.f32 %v1295, 3.0
        %v1552 = vmul.f32 %v1296, 3.0
        %v1553 = vmul.f32 %v1297, 3.0
        %v1554 = vmul.f32 %v1538, %v1282
        %v1555 = vmul.f32 %v1539, %v1283
        %v1556 = vmul.f32 %v1540, %v1284
        %v1557 = vmul.f32 %v1541, %v1285
        %v1558 = vmul.f32 %v1542, %v1286
        %v1559 = vmul.f32 %v1543, %v1287
        %v1560 = vmul.f32 %v1544, %v1288
        %v1561 = vmul.f32 %v1545, %v1289
        %v1562 = vmul.f32 %v1546, %v1290
        %v1563 = vmul.f32 %v1547, %v1291
        %v1564 = vmul.f32 %v1548, %v1292
        %v1565 = vmul.f32 %v1549, %v1293
        %v1566 = vmul.f32 %v1550, %v1294
        %v1567 = vmul.f32 %v1551, %v1295
        %v1568 = vmul.f32 %v1552, %v1296
        %v1569 = vmul.f32 %v1553, %v1297
        %v1570 = vsub.f32 %v1554, 1.0
        %v1571 = vsub.f32 %v1555, 1.0
        %v1572 = vsub.f32 %v1556, 1.0
        %v1573 = vsub.f32 %v1557, 1.0
        %v1574 = vsub.f32 %v1558, 1.0
        %v1575 = vsub.f32 %v1559, 1.0
        %v1576 = vsub.f32 %v1560, 1.0
        %v1577 = vsub.f32 %v1561, 1.0
        %v1578 = vsub.f32 %v1562, 1.0
        %v1579 = vsub.f32 %v1563, 1.0
        %v1580 = vsub.f32 %v1564, 1.0
        %v1581 = vsub.f32 %v1565, 1.0
        %v1582 = vsub.f32 %v1566, 1.0
        %v1583 = vsub.f32 %v1567, 1.0
        %v1584 = vsub.f32 %v1568, 1.0
        %v1585 = vsub.f32 %v1569, 1.0
        %v1586 = vmul.f32 %v1570, 1.118034
        %v1587 = vmul.f32 %v1571, 1.118034
        %v1588 = vmul.f32 %v1572, 1.118034
        %v1589 = vmul.f32 %v1573, 1.118034
        %v1590 = vmul.f32 %v1574, 1.118034
        %v1591 = vmul.f32 %v1575, 1.118034
        %v1592 = vmul.f32 %v1576, 1.118034
        %v1593 = vmul.f32 %v1577, 1.118034
        %v1594 = vmul.f32 %v1578, 1.118034
        %v1595 = vmul.f32 %v1579, 1.118034
        %v1596 = vmul.f32 %v1580, 1.118034
        %v1597 = vmul.f32 %v1581, 1.118034
        %v1598 = vmul.f32 %v1582, 1.118034
        %v1599 = vmul.f32 %v1583, 1.118034
        %v1600 = vmul.f32 %v1584, 1.118034
        %v1601 = vmul.f32 %v1585, 1.118034
        %1602 = vrot.lane.b32.xlu0 %v1282, 126
        %v1603 = vpop.permute.xlu0 %1602
        %1604 = vrot.lane.b32.xlu0 %v1283, 126
        %v1605 = vpop.permute.xlu0 %1604
        %1606 = vrot.lane.b32.xlu0 %v1284, 126
        %v1607 = vpop.permute.xlu0 %1606
        %1608 = vrot.lane.b32.xlu0 %v1285, 126
        %v1609 = vpop.permute.xlu0 %1608
        %1610 = vrot.lane.b32.xlu0 %v1286, 126
        %v1611 = vpop.permute.xlu0 %1610
        %1612 = vrot.lane.b32.xlu0 %v1287, 126
        %v1613 = vpop.permute.xlu0 %1612
        %1614 = vrot.lane.b32.xlu0 %v1288, 126
        %v1615 = vpop.permute.xlu0 %1614
        %1616 = vrot.lane.b32.xlu0 %v1289, 126
        %v1617 = vpop.permute.xlu0 %1616
        %1618 = vrot.lane.b32.xlu0 %v1290, 126
        %v1619 = vpop.permute.xlu0 %1618
        %1620 = vrot.lane.b32.xlu0 %v1291, 126
        %v1621 = vpop.permute.xlu0 %1620
        %1622 = vrot.lane.b32.xlu0 %v1292, 126
        %v1623 = vpop.permute.xlu0 %1622
        %1624 = vrot.lane.b32.xlu0 %v1293, 126
        %v1625 = vpop.permute.xlu0 %1624
        %1626 = vrot.lane.b32.xlu0 %v1294, 126
        %v1627 = vpop.permute.xlu0 %1626
        %1628 = vrot.lane.b32.xlu0 %v1295, 126
        %v1629 = vpop.permute.xlu0 %1628
        %1630 = vrot.lane.b32.xlu0 %v1296, 126
        %v1631 = vpop.permute.xlu0 %1630
        %1632 = vrot.lane.b32.xlu0 %v1297, 126
        %v1633 = vpop.permute.xlu0 %1632
        %v1650 = vmul.f32 %v1346, %v1603
        %v1651 = vmul.f32 %v1347, %v1605
        %v1652 = vmul.f32 %v1348, %v1607
        %v1653 = vmul.f32 %v1349, %v1609
        %v1654 = vmul.f32 %v1350, %v1611
        %v1655 = vmul.f32 %v1351, %v1613
        %v1656 = vmul.f32 %v1352, %v1615
        %v1657 = vmul.f32 %v1353, %v1617
        %v1658 = vmul.f32 %v1354, %v1619
        %v1659 = vmul.f32 %v1355, %v1621
        %v1660 = vmul.f32 %v1356, %v1623
        %v1661 = vmul.f32 %v1357, %v1625
        %v1662 = vmul.f32 %v1358, %v1627
        %v1663 = vmul.f32 %v1359, %v1629
        %v1664 = vmul.f32 %v1360, %v1631
        %v1665 = vmul.f32 %v1361, %v1633
        %v1666 = vmul.f32 %v1138, %v1138
        %v1667 = vmul.f32 %v1139, %v1139
        %v1668 = vmul.f32 %v1140, %v1140
        %v1669 = vmul.f32 %v1141, %v1141
        %v1670 = vmul.f32 %v1142, %v1142
        %v1671 = vmul.f32 %v1143, %v1143
        %v1672 = vmul.f32 %v1144, %v1144
        %v1673 = vmul.f32 %v1145, %v1145
        %v1674 = vmul.f32 %v1146, %v1146
        %v1675 = vmul.f32 %v1147, %v1147
        %v1676 = vmul.f32 %v1148, %v1148
        %v1677 = vmul.f32 %v1149, %v1149
        %v1678 = vmul.f32 %v1150, %v1150
        %v1679 = vmul.f32 %v1151, %v1151
        %v1680 = vmul.f32 %v1152, %v1152
        %v1681 = vmul.f32 %v1153, %v1153
        %v1682 = vmul.f32 %v1218, %v1218
        %v1683 = vmul.f32 %v1219, %v1219
        %v1684 = vmul.f32 %v1220, %v1220
        %v1685 = vmul.f32 %v1221, %v1221
        %v1686 = vmul.f32 %v1222, %v1222
        %v1687 = vmul.f32 %v1223, %v1223
        %v1688 = vmul.f32 %v1224, %v1224
        %v1689 = vmul.f32 %v1225, %v1225
        %v1690 = vmul.f32 %v1226, %v1226
        %v1691 = vmul.f32 %v1227, %v1227
        %v1692 = vmul.f32 %v1228, %v1228
        %v1693 = vmul.f32 %v1229, %v1229
        %v1694 = vmul.f32 %v1230, %v1230
        %v1695 = vmul.f32 %v1231, %v1231
        %v1696 = vmul.f32 %v1232, %v1232
        %v1697 = vmul.f32 %v1233, %v1233
        %1714 = vrot.lane.b32.xlu0 %v1682, 127
        %v1715 = vpop.permute.xlu0 %1714
        %1716 = vrot.lane.b32.xlu0 %v1683, 127
        %v1717 = vpop.permute.xlu0 %1716
        %1718 = vrot.lane.b32.xlu0 %v1684, 127
        %v1719 = vpop.permute.xlu0 %1718
        %1720 = vrot.lane.b32.xlu0 %v1685, 127
        %v1721 = vpop.permute.xlu0 %1720
        %1722 = vrot.lane.b32.xlu0 %v1686, 127
        %v1723 = vpop.permute.xlu0 %1722
        %1724 = vrot.lane.b32.xlu0 %v1687, 127
        %v1725 = vpop.permute.xlu0 %1724
        %1726 = vrot.lane.b32.xlu0 %v1688, 127
        %v1727 = vpop.permute.xlu0 %1726
        %1728 = vrot.lane.b32.xlu0 %v1689, 127
        %v1729 = vpop.permute.xlu0 %1728
        %1730 = vrot.lane.b32.xlu0 %v1690, 127
        %v1731 = vpop.permute.xlu0 %1730
        %1732 = vrot.lane.b32.xlu0 %v1691, 127
        %v1733 = vpop.permute.xlu0 %1732
        %1734 = vrot.lane.b32.xlu0 %v1692, 127
        %v1735 = vpop.permute.xlu0 %1734
        %1736 = vrot.lane.b32.xlu0 %v1693, 127
        %v1737 = vpop.permute.xlu0 %1736
        %1738 = vrot.lane.b32.xlu0 %v1694, 127
        %v1739 = vpop.permute.xlu0 %1738
        %1740 = vrot.lane.b32.xlu0 %v1695, 127
        %v1741 = vpop.permute.xlu0 %1740
        %1742 = vrot.lane.b32.xlu0 %v1696, 127
        %v1743 = vpop.permute.xlu0 %1742
        %1744 = vrot.lane.b32.xlu0 %v1697, 127
        %v1745 = vpop.permute.xlu0 %1744
        %v1762 = vsub.f32 %v1666, %v1715
        %v1763 = vsub.f32 %v1667, %v1717
        %v1764 = vsub.f32 %v1668, %v1719
        %v1765 = vsub.f32 %v1669, %v1721
        %v1766 = vsub.f32 %v1670, %v1723
        %v1767 = vsub.f32 %v1671, %v1725
        %v1768 = vsub.f32 %v1672, %v1727
        %v1769 = vsub.f32 %v1673, %v1729
        %v1770 = vsub.f32 %v1674, %v1731
        %v1771 = vsub.f32 %v1675, %v1733
        %v1772 = vsub.f32 %v1676, %v1735
        %v1773 = vsub.f32 %v1677, %v1737
        %v1774 = vsub.f32 %v1678, %v1739
        %v1775 = vsub.f32 %v1679, %v1741
        %v1776 = vsub.f32 %v1680, %v1743
        %v1777 = vsub.f32 %v1681, %v1745
        %v1778 = vmul.f32 %v1762, 1.9364917
        %v1779 = vmul.f32 %v1763, 1.9364917
        %v1780 = vmul.f32 %v1764, 1.9364917
        %v1781 = vmul.f32 %v1765, 1.9364917
        %v1782 = vmul.f32 %v1766, 1.9364917
        %v1783 = vmul.f32 %v1767, 1.9364917
        %v1784 = vmul.f32 %v1768, 1.9364917
        %v1785 = vmul.f32 %v1769, 1.9364917
        %v1786 = vmul.f32 %v1770, 1.9364917
        %v1787 = vmul.f32 %v1771, 1.9364917
        %v1788 = vmul.f32 %v1772, 1.9364917
        %v1789 = vmul.f32 %v1773, 1.9364917
        %v1790 = vmul.f32 %v1774, 1.9364917
        %v1791 = vmul.f32 %v1775, 1.9364917
        %v1792 = vmul.f32 %v1776, 1.9364917
        %v1793 = vmul.f32 %v1777, 1.9364917
        %v1794 = vld [vmem:[%s824] sm:$0xff]
        %v1795 = vld [vmem:[%s824 + $0x8] sm:$0xff]
        %v1796 = vld [vmem:[%s824 + $0x10] sm:$0xff]
        %v1797 = vld [vmem:[%s824 + $0x18] sm:$0xff]
        %v1798 = vld [vmem:[%s824 + $0x20] sm:$0xff]
        %v1799 = vld [vmem:[%s824 + $0x28] sm:$0xff]
        %v1800 = vld [vmem:[%s824 + $0x30] sm:$0xff]
        %v1801 = vld [vmem:[%s824 + $0x38] sm:$0xff]
        %v1802 = vld [vmem:[%s824 + $0x40] sm:$0xff]
        %v1803 = vld [vmem:[%s824 + $0x48] sm:$0xff]
        %v1804 = vld [vmem:[%s824 + $0x50] sm:$0xff]
        %v1805 = vld [vmem:[%s824 + $0x58] sm:$0xff]
        %v1806 = vld [vmem:[%s824 + $0x60] sm:$0xff]
        %v1807 = vld [vmem:[%s824 + $0x68] sm:$0xff]
        %v1808 = vld [vmem:[%s824 + $0x70] sm:$0xff]
        %v1809 = vld [vmem:[%s824 + $0x78] sm:$0xff]
        %v1810 = vlaneseq
        %v1811 = vand.u32 %v1810, 127
        %v1812 = vcvt.s32.f32 %v1811
        %v1813 = vmul.f32 %v1812, 0.2857143
        %1815 = vset.pattern.permute.xlu0 0
        %1816 = vperm.xlu0 %1815, %v1794
        %v1817 = vpop.permute.xlu0 %1816
        %1820 = vset.pattern.permute.xlu0 0
        %1821 = vperm.xlu0 %1820, %v1795
        %v1822 = vpop.permute.xlu0 %1821
        %1825 = vset.pattern.permute.xlu0 0
        %1826 = vperm.xlu0 %1825, %v1796
        %v1827 = vpop.permute.xlu0 %1826
        %1830 = vset.pattern.permute.xlu0 0
        %1831 = vperm.xlu0 %1830, %v1797
        %v1832 = vpop.permute.xlu0 %1831
        %1835 = vset.pattern.permute.xlu0 0
        %1836 = vperm.xlu0 %1835, %v1798
        %v1837 = vpop.permute.xlu0 %1836
        %1840 = vset.pattern.permute.xlu0 0
        %1841 = vperm.xlu0 %1840, %v1799
        %v1842 = vpop.permute.xlu0 %1841
        %1845 = vset.pattern.permute.xlu0 0
        %1846 = vperm.xlu0 %1845, %v1800
        %v1847 = vpop.permute.xlu0 %1846
        %1850 = vset.pattern.permute.xlu0 0
        %1851 = vperm.xlu0 %1850, %v1801
        %v1852 = vpop.permute.xlu0 %1851
        %1855 = vset.pattern.permute.xlu0 0
        %1856 = vperm.xlu0 %1855, %v1802
        %v1857 = vpop.permute.xlu0 %1856
        %1860 = vset.pattern.permute.xlu0 0
        %1861 = vperm.xlu0 %1860, %v1803
        %v1862 = vpop.permute.xlu0 %1861
        %1865 = vset.pattern.permute.xlu0 0
        %1866 = vperm.xlu0 %1865, %v1804
        %v1867 = vpop.permute.xlu0 %1866
        %1870 = vset.pattern.permute.xlu0 0
        %1871 = vperm.xlu0 %1870, %v1805
        %v1872 = vpop.permute.xlu0 %1871
        %1875 = vset.pattern.permute.xlu0 0
        %1876 = vperm.xlu0 %1875, %v1806
        %v1877 = vpop.permute.xlu0 %1876
        %1880 = vset.pattern.permute.xlu0 0
        %1881 = vperm.xlu0 %1880, %v1807
        %v1882 = vpop.permute.xlu0 %1881
        %1885 = vset.pattern.permute.xlu0 0
        %1886 = vperm.xlu0 %1885, %v1808
        %v1887 = vpop.permute.xlu0 %1886
        %1890 = vset.pattern.permute.xlu0 0
        %1891 = vperm.xlu0 %1890, %v1809
        %v1892 = vpop.permute.xlu0 %1891
        %v1894 = vsub.f32 %v1817, %v1813
        %v1895 = vsub.f32 %v1822, %v1813
        %v1896 = vsub.f32 %v1827, %v1813
        %v1897 = vsub.f32 %v1832, %v1813
        %v1898 = vsub.f32 %v1837, %v1813
        %v1899 = vsub.f32 %v1842, %v1813
        %v1900 = vsub.f32 %v1847, %v1813
        %v1901 = vsub.f32 %v1852, %v1813
        %v1902 = vsub.f32 %v1857, %v1813
        %v1903 = vsub.f32 %v1862, %v1813
        %v1904 = vsub.f32 %v1867, %v1813
        %v1905 = vsub.f32 %v1872, %v1813
        %v1906 = vsub.f32 %v1877, %v1813
        %v1907 = vsub.f32 %v1882, %v1813
        %v1908 = vsub.f32 %v1887, %v1813
        %v1909 = vsub.f32 %v1892, %v1813
        %v1910 = vrcp.pop 0.2857143
        %v1911 = vmul.f32 %v1894, %v1910
        %v1912 = vmul.f32 %v1895, %v1910
        %v1913 = vmul.f32 %v1896, %v1910
        %v1914 = vmul.f32 %v1897, %v1910
        %v1915 = vmul.f32 %v1898, %v1910
        %v1916 = vmul.f32 %v1899, %v1910
        %v1917 = vmul.f32 %v1900, %v1910
        %v1918 = vmul.f32 %v1901, %v1910
        %v1919 = vmul.f32 %v1902, %v1910
        %v1920 = vmul.f32 %v1903, %v1910
        %v1921 = vmul.f32 %v1904, %v1910
        %v1922 = vmul.f32 %v1905, %v1910
        %v1923 = vmul.f32 %v1906, %v1910
        %v1924 = vmul.f32 %v1907, %v1910
        %v1925 = vmul.f32 %v1908, %v1910
        %v1926 = vmul.f32 %v1909, %v1910
        %v1927 = vmul.f32 %v1911, %v1911
        %v1928 = vmul.f32 %v1912, %v1912
        %v1929 = vmul.f32 %v1913, %v1913
        %v1930 = vmul.f32 %v1914, %v1914
        %v1931 = vmul.f32 %v1915, %v1915
        %v1932 = vmul.f32 %v1916, %v1916
        %v1933 = vmul.f32 %v1917, %v1917
        %v1934 = vmul.f32 %v1918, %v1918
        %v1935 = vmul.f32 %v1919, %v1919
        %v1936 = vmul.f32 %v1920, %v1920
        %v1937 = vmul.f32 %v1921, %v1921
        %v1938 = vmul.f32 %v1922, %v1922
        %v1939 = vmul.f32 %v1923, %v1923
        %v1940 = vmul.f32 %v1924, %v1924
        %v1941 = vmul.f32 %v1925, %v1925
        %v1942 = vmul.f32 %v1926, %v1926
        %v1943 = vsub.f32 0.0, %v1927
        %v1944 = vsub.f32 0.0, %v1928
        %v1945 = vsub.f32 0.0, %v1929
        %v1946 = vsub.f32 0.0, %v1930
        %v1947 = vsub.f32 0.0, %v1931
        %v1948 = vsub.f32 0.0, %v1932
        %v1949 = vsub.f32 0.0, %v1933
        %v1950 = vsub.f32 0.0, %v1934
        %v1951 = vsub.f32 0.0, %v1935
        %v1952 = vsub.f32 0.0, %v1936
        %v1953 = vsub.f32 0.0, %v1937
        %v1954 = vsub.f32 0.0, %v1938
        %v1955 = vsub.f32 0.0, %v1939
        %v1956 = vsub.f32 0.0, %v1940
        %v1957 = vsub.f32 0.0, %v1941
        %v1958 = vsub.f32 0.0, %v1942
        %v1959 = vmul.f32 %v1943, 1.442695
        %v1960 = vpow.pop %v1959
        %v1961 = vmul.f32 %v1944, 1.442695
        %v1962 = vpow.pop %v1961
        %v1963 = vmul.f32 %v1945, 1.442695
        %v1964 = vpow.pop %v1963
        %v1965 = vmul.f32 %v1946, 1.442695
        %v1966 = vpow.pop %v1965
        %v1967 = vmul.f32 %v1947, 1.442695
        %v1968 = vpow.pop %v1967
        %v1969 = vmul.f32 %v1948, 1.442695
        %v1970 = vpow.pop %v1969
        %v1971 = vmul.f32 %v1949, 1.442695
        %v1972 = vpow.pop %v1971
        %v1973 = vmul.f32 %v1950, 1.442695
        %v1974 = vpow.pop %v1973
        %v1975 = vmul.f32 %v1951, 1.442695
        %v1976 = vpow.pop %v1975
        %v1977 = vmul.f32 %v1952, 1.442695
        %v1978 = vpow.pop %v1977
        %v1979 = vmul.f32 %v1953, 1.442695
        %v1980 = vpow.pop %v1979
        %v1981 = vmul.f32 %v1954, 1.442695
        %v1982 = vpow.pop %v1981
        %v1983 = vmul.f32 %v1955, 1.442695
        %v1984 = vpow.pop %v1983
        %v1985 = vmul.f32 %v1956, 1.442695
        %v1986 = vpow.pop %v1985
        %v1987 = vmul.f32 %v1957, 1.442695
        %v1988 = vpow.pop %v1987
        %v1989 = vmul.f32 %v1958, 1.442695
        %v1990 = vpow.pop %v1989
        %v1991 = vrcp.pop 1.12
        %v1992 = vmul.f32 %v1960, %v1991
        %v1993 = vmul.f32 %v1962, %v1991
        %v1994 = vmul.f32 %v1964, %v1991
        %v1995 = vmul.f32 %v1966, %v1991
        %v1996 = vmul.f32 %v1968, %v1991
        %v1997 = vmul.f32 %v1970, %v1991
        %v1998 = vmul.f32 %v1972, %v1991
        %v1999 = vmul.f32 %v1974, %v1991
        %v2000 = vmul.f32 %v1976, %v1991
        %v2001 = vmul.f32 %v1978, %v1991
        %v2002 = vmul.f32 %v1980, %v1991
        %v2003 = vmul.f32 %v1982, %v1991
        %v2004 = vmul.f32 %v1984, %v1991
        %v2005 = vmul.f32 %v1986, %v1991
        %v2006 = vmul.f32 %v1988, %v1991
        %v2007 = vmul.f32 %v1990, %v1991
        %v2008 = vmul.f32 %v1812, 0.071428575
        %2009 = vset.pattern.permute.xlu0 1
        %2010 = vperm.xlu0 %2009, %v1794
        %v2011 = vpop.permute.xlu0 %2010
        %2013 = vset.pattern.permute.xlu0 1
        %2014 = vperm.xlu0 %2013, %v1795
        %v2015 = vpop.permute.xlu0 %2014
        %2017 = vset.pattern.permute.xlu0 1
        %2018 = vperm.xlu0 %2017, %v1796
        %v2019 = vpop.permute.xlu0 %2018
        %2021 = vset.pattern.permute.xlu0 1
        %2022 = vperm.xlu0 %2021, %v1797
        %v2023 = vpop.permute.xlu0 %2022
        %2025 = vset.pattern.permute.xlu0 1
        %2026 = vperm.xlu0 %2025, %v1798
        %v2027 = vpop.permute.xlu0 %2026
        %2029 = vset.pattern.permute.xlu0 1
        %2030 = vperm.xlu0 %2029, %v1799
        %v2031 = vpop.permute.xlu0 %2030
        %2033 = vset.pattern.permute.xlu0 1
        %2034 = vperm.xlu0 %2033, %v1800
        %v2035 = vpop.permute.xlu0 %2034
        %2037 = vset.pattern.permute.xlu0 1
        %2038 = vperm.xlu0 %2037, %v1801
        %v2039 = vpop.permute.xlu0 %2038
        %2041 = vset.pattern.permute.xlu0 1
        %2042 = vperm.xlu0 %2041, %v1802
        %v2043 = vpop.permute.xlu0 %2042
        %2045 = vset.pattern.permute.xlu0 1
        %2046 = vperm.xlu0 %2045, %v1803
        %v2047 = vpop.permute.xlu0 %2046
        %2049 = vset.pattern.permute.xlu0 1
        %2050 = vperm.xlu0 %2049, %v1804
        %v2051 = vpop.permute.xlu0 %2050
        %2053 = vset.pattern.permute.xlu0 1
        %2054 = vperm.xlu0 %2053, %v1805
        %v2055 = vpop.permute.xlu0 %2054
        %2057 = vset.pattern.permute.xlu0 1
        %2058 = vperm.xlu0 %2057, %v1806
        %v2059 = vpop.permute.xlu0 %2058
        %2061 = vset.pattern.permute.xlu0 1
        %2062 = vperm.xlu0 %2061, %v1807
        %v2063 = vpop.permute.xlu0 %2062
        %2065 = vset.pattern.permute.xlu0 1
        %2066 = vperm.xlu0 %2065, %v1808
        %v2067 = vpop.permute.xlu0 %2066
        %2069 = vset.pattern.permute.xlu0 1
        %2070 = vperm.xlu0 %2069, %v1809
        %v2071 = vpop.permute.xlu0 %2070
        %v2073 = vsub.f32 %v2011, %v2008
        %v2074 = vsub.f32 %v2015, %v2008
        %v2075 = vsub.f32 %v2019, %v2008
        %v2076 = vsub.f32 %v2023, %v2008
        %v2077 = vsub.f32 %v2027, %v2008
        %v2078 = vsub.f32 %v2031, %v2008
        %v2079 = vsub.f32 %v2035, %v2008
        %v2080 = vsub.f32 %v2039, %v2008
        %v2081 = vsub.f32 %v2043, %v2008
        %v2082 = vsub.f32 %v2047, %v2008
        %v2083 = vsub.f32 %v2051, %v2008
        %v2084 = vsub.f32 %v2055, %v2008
        %v2085 = vsub.f32 %v2059, %v2008
        %v2086 = vsub.f32 %v2063, %v2008
        %v2087 = vsub.f32 %v2067, %v2008
        %v2088 = vsub.f32 %v2071, %v2008
        %v2089 = vrcp.pop 0.071428575
        %v2090 = vmul.f32 %v2073, %v2089
        %v2091 = vmul.f32 %v2074, %v2089
        %v2092 = vmul.f32 %v2075, %v2089
        %v2093 = vmul.f32 %v2076, %v2089
        %v2094 = vmul.f32 %v2077, %v2089
        %v2095 = vmul.f32 %v2078, %v2089
        %v2096 = vmul.f32 %v2079, %v2089
        %v2097 = vmul.f32 %v2080, %v2089
        %v2098 = vmul.f32 %v2081, %v2089
        %v2099 = vmul.f32 %v2082, %v2089
        %v2100 = vmul.f32 %v2083, %v2089
        %v2101 = vmul.f32 %v2084, %v2089
        %v2102 = vmul.f32 %v2085, %v2089
        %v2103 = vmul.f32 %v2086, %v2089
        %v2104 = vmul.f32 %v2087, %v2089
        %v2105 = vmul.f32 %v2088, %v2089
        %v2106 = vmul.f32 %v2090, %v2090
        %v2107 = vmul.f32 %v2091, %v2091
        %v2108 = vmul.f32 %v2092, %v2092
        %v2109 = vmul.f32 %v2093, %v2093
        %v2110 = vmul.f32 %v2094, %v2094
        %v2111 = vmul.f32 %v2095, %v2095
        %v2112 = vmul.f32 %v2096, %v2096
        %v2113 = vmul.f32 %v2097, %v2097
        %v2114 = vmul.f32 %v2098, %v2098
        %v2115 = vmul.f32 %v2099, %v2099
        %v2116 = vmul.f32 %v2100, %v2100
        %v2117 = vmul.f32 %v2101, %v2101
        %v2118 = vmul.f32 %v2102, %v2102
        %v2119 = vmul.f32 %v2103, %v2103
        %v2120 = vmul.f32 %v2104, %v2104
        %v2121 = vmul.f32 %v2105, %v2105
        %v2122 = vsub.f32 0.0, %v2106
        %v2123 = vsub.f32 0.0, %v2107
        %v2124 = vsub.f32 0.0, %v2108
        %v2125 = vsub.f32 0.0, %v2109
        %v2126 = vsub.f32 0.0, %v2110
        %v2127 = vsub.f32 0.0, %v2111
        %v2128 = vsub.f32 0.0, %v2112
        %v2129 = vsub.f32 0.0, %v2113
        %v2130 = vsub.f32 0.0, %v2114
        %v2131 = vsub.f32 0.0, %v2115
        %v2132 = vsub.f32 0.0, %v2116
        %v2133 = vsub.f32 0.0, %v2117
        %v2134 = vsub.f32 0.0, %v2118
        %v2135 = vsub.f32 0.0, %v2119
        %v2136 = vsub.f32 0.0, %v2120
        %v2137 = vsub.f32 0.0, %v2121
        %v2138 = vmul.f32 %v2122, 1.442695
        %v2139 = vpow.pop %v2138
        %v2140 = vmul.f32 %v2123, 1.442695
        %v2141 = vpow.pop %v2140
        %v2142 = vmul.f32 %v2124, 1.442695
        %v2143 = vpow.pop %v2142
        %v2144 = vmul.f32 %v2125, 1.442695
        %v2145 = vpow.pop %v2144
        %v2146 = vmul.f32 %v2126, 1.442695
        %v2147 = vpow.pop %v2146
        %v2148 = vmul.f32 %v2127, 1.442695
        %v2149 = vpow.pop %v2148
        %v2150 = vmul.f32 %v2128, 1.442695
        %v2151 = vpow.pop %v2150
        %v2152 = vmul.f32 %v2129, 1.442695
        %v2153 = vpow.pop %v2152
        %v2154 = vmul.f32 %v2130, 1.442695
        %v2155 = vpow.pop %v2154
        %v2156 = vmul.f32 %v2131, 1.442695
        %v2157 = vpow.pop %v2156
        %v2158 = vmul.f32 %v2132, 1.442695
        %v2159 = vpow.pop %v2158
        %v2160 = vmul.f32 %v2133, 1.442695
        %v2161 = vpow.pop %v2160
        %v2162 = vmul.f32 %v2134, 1.442695
        %v2163 = vpow.pop %v2162
        %v2164 = vmul.f32 %v2135, 1.442695
        %v2165 = vpow.pop %v2164
        %v2166 = vmul.f32 %v2136, 1.442695
        %v2167 = vpow.pop %v2166
        %v2168 = vmul.f32 %v2137, 1.442695
        %v2169 = vpow.pop %v2168
        %v2170 = vmul.f32 %v2139, %v1991
        %v2171 = vmul.f32 %v2141, %v1991
        %v2172 = vmul.f32 %v2143, %v1991
        %v2173 = vmul.f32 %v2145, %v1991
        %v2174 = vmul.f32 %v2147, %v1991
        %v2175 = vmul.f32 %v2149, %v1991
        %v2176 = vmul.f32 %v2151, %v1991
        %v2177 = vmul.f32 %v2153, %v1991
        %v2178 = vmul.f32 %v2155, %v1991
        %v2179 = vmul.f32 %v2157, %v1991
        %v2180 = vmul.f32 %v2159, %v1991
        %v2181 = vmul.f32 %v2161, %v1991
        %v2182 = vmul.f32 %v2163, %v1991
        %v2183 = vmul.f32 %v2165, %v1991
        %v2184 = vmul.f32 %v2167, %v1991
        %v2185 = vmul.f32 %v2169, %v1991
        %2202 = vrot.lane.b32.xlu0 %v2170, 8
        %v2203 = vpop.permute.xlu0 %2202
        %2204 = vrot.lane.b32.xlu0 %v2171, 8
        %v2205 = vpop.permute.xlu0 %2204
        %2206 = vrot.lane.b32.xlu0 %v2172, 8
        %v2207 = vpop.permute.xlu0 %2206
        %2208 = vrot.lane.b32.xlu0 %v2173, 8
        %v2209 = vpop.permute.xlu0 %2208
        %2210 = vrot.lane.b32.xlu0 %v2174, 8
        %v2211 = vpop.permute.xlu0 %2210
        %2212 = vrot.lane.b32.xlu0 %v2175, 8
        %v2213 = vpop.permute.xlu0 %2212
        %2214 = vrot.lane.b32.xlu0 %v2176, 8
        %v2215 = vpop.permute.xlu0 %2214
        %2216 = vrot.lane.b32.xlu0 %v2177, 8
        %v2217 = vpop.permute.xlu0 %2216
        %2218 = vrot.lane.b32.xlu0 %v2178, 8
        %v2219 = vpop.permute.xlu0 %2218
        %2220 = vrot.lane.b32.xlu0 %v2179, 8
        %v2221 = vpop.permute.xlu0 %2220
        %2222 = vrot.lane.b32.xlu0 %v2180, 8
        %v2223 = vpop.permute.xlu0 %2222
        %2224 = vrot.lane.b32.xlu0 %v2181, 8
        %v2225 = vpop.permute.xlu0 %2224
        %2226 = vrot.lane.b32.xlu0 %v2182, 8
        %v2227 = vpop.permute.xlu0 %2226
        %2228 = vrot.lane.b32.xlu0 %v2183, 8
        %v2229 = vpop.permute.xlu0 %2228
        %2230 = vrot.lane.b32.xlu0 %v2184, 8
        %v2231 = vpop.permute.xlu0 %2230
        %2232 = vrot.lane.b32.xlu0 %v2185, 8
        %v2233 = vpop.permute.xlu0 %2232
        %vm2250 = vcmask 64512
        %v2251 = vsel %vm2250, %v1992, %v2203
        %v2252 = vsel %vm2250, %v1993, %v2205
        %v2253 = vsel %vm2250, %v1994, %v2207
        %v2254 = vsel %vm2250, %v1995, %v2209
        %v2255 = vsel %vm2250, %v1996, %v2211
        %v2256 = vsel %vm2250, %v1997, %v2213
        %v2257 = vsel %vm2250, %v1998, %v2215
        %v2258 = vsel %vm2250, %v1999, %v2217
        %v2259 = vsel %vm2250, %v2000, %v2219
        %v2260 = vsel %vm2250, %v2001, %v2221
        %v2261 = vsel %vm2250, %v2002, %v2223
        %v2262 = vsel %vm2250, %v2003, %v2225
        %v2263 = vsel %vm2250, %v2004, %v2227
        %v2264 = vsel %vm2250, %v2005, %v2229
        %v2265 = vsel %vm2250, %v2006, %v2231
        %v2266 = vsel %vm2250, %v2007, %v2233
        %v2267 = vld [vmem:[%s830] sm:$0xff]
        %v2268 = vld [vmem:[%s830 + $0x8] sm:$0xff]
        %v2269 = vld [vmem:[%s830 + $0x10] sm:$0xff]
        %v2270 = vld [vmem:[%s830 + $0x18] sm:$0xff]
        %v2271 = vld [vmem:[%s830 + $0x20] sm:$0xff]
        %v2272 = vld [vmem:[%s830 + $0x28] sm:$0xff]
        %v2273 = vld [vmem:[%s830 + $0x30] sm:$0xff]
        %v2274 = vld [vmem:[%s830 + $0x38] sm:$0xff]
        %v2275 = vld [vmem:[%s830 + $0x40] sm:$0xff]
        %v2276 = vld [vmem:[%s830 + $0x48] sm:$0xff]
        %v2277 = vld [vmem:[%s830 + $0x50] sm:$0xff]
        %v2278 = vld [vmem:[%s830 + $0x58] sm:$0xff]
        %v2279 = vld [vmem:[%s830 + $0x60] sm:$0xff]
        %v2280 = vld [vmem:[%s830 + $0x68] sm:$0xff]
        %v2281 = vld [vmem:[%s830 + $0x70] sm:$0xff]
        %v2282 = vld [vmem:[%s830 + $0x78] sm:$0xff]
        %2283 = vset.pattern.permute.xlu0 0
        %2284 = vperm.xlu0 %2283, %v2267
        %v2285 = vpop.permute.xlu0 %2284
        %2286 = vset.pattern.permute.xlu0 0
        %2287 = vperm.xlu0 %2286, %v2268
        %v2288 = vpop.permute.xlu0 %2287
        %2289 = vset.pattern.permute.xlu0 0
        %2290 = vperm.xlu0 %2289, %v2269
        %v2291 = vpop.permute.xlu0 %2290
        %2292 = vset.pattern.permute.xlu0 0
        %2293 = vperm.xlu0 %2292, %v2270
        %v2294 = vpop.permute.xlu0 %2293
        %2295 = vset.pattern.permute.xlu0 0
        %2296 = vperm.xlu0 %2295, %v2271
        %v2297 = vpop.permute.xlu0 %2296
        %2298 = vset.pattern.permute.xlu0 0
        %2299 = vperm.xlu0 %2298, %v2272
        %v2300 = vpop.permute.xlu0 %2299
        %2301 = vset.pattern.permute.xlu0 0
        %2302 = vperm.xlu0 %2301, %v2273
        %v2303 = vpop.permute.xlu0 %2302
        %2304 = vset.pattern.permute.xlu0 0
        %2305 = vperm.xlu0 %2304, %v2274
        %v2306 = vpop.permute.xlu0 %2305
        %2307 = vset.pattern.permute.xlu0 0
        %2308 = vperm.xlu0 %2307, %v2275
        %v2309 = vpop.permute.xlu0 %2308
        %2310 = vset.pattern.permute.xlu0 0
        %2311 = vperm.xlu0 %2310, %v2276
        %v2312 = vpop.permute.xlu0 %2311
        %2313 = vset.pattern.permute.xlu0 0
        %2314 = vperm.xlu0 %2313, %v2277
        %v2315 = vpop.permute.xlu0 %2314
        %2316 = vset.pattern.permute.xlu0 0
        %2317 = vperm.xlu0 %2316, %v2278
        %v2318 = vpop.permute.xlu0 %2317
        %2319 = vset.pattern.permute.xlu0 0
        %2320 = vperm.xlu0 %2319, %v2279
        %v2321 = vpop.permute.xlu0 %2320
        %2322 = vset.pattern.permute.xlu0 0
        %2323 = vperm.xlu0 %2322, %v2280
        %v2324 = vpop.permute.xlu0 %2323
        %2325 = vset.pattern.permute.xlu0 0
        %2326 = vperm.xlu0 %2325, %v2281
        %v2327 = vpop.permute.xlu0 %2326
        %2328 = vset.pattern.permute.xlu0 0
        %2329 = vperm.xlu0 %2328, %v2282
        %v2330 = vpop.permute.xlu0 %2329
        %vm2331 = vcmp.eq.s32.totalorder %v2285, %v1811
        %vm2332 = vcmp.eq.s32.totalorder %v2288, %v1811
        %vm2333 = vcmp.eq.s32.totalorder %v2291, %v1811
        %vm2334 = vcmp.eq.s32.totalorder %v2294, %v1811
        %vm2335 = vcmp.eq.s32.totalorder %v2297, %v1811
        %vm2336 = vcmp.eq.s32.totalorder %v2300, %v1811
        %vm2337 = vcmp.eq.s32.totalorder %v2303, %v1811
        %vm2338 = vcmp.eq.s32.totalorder %v2306, %v1811
        %vm2339 = vcmp.eq.s32.totalorder %v2309, %v1811
        %vm2340 = vcmp.eq.s32.totalorder %v2312, %v1811
        %vm2341 = vcmp.eq.s32.totalorder %v2315, %v1811
        %vm2342 = vcmp.eq.s32.totalorder %v2318, %v1811
        %vm2343 = vcmp.eq.s32.totalorder %v2321, %v1811
        %vm2344 = vcmp.eq.s32.totalorder %v2324, %v1811
        %vm2345 = vcmp.eq.s32.totalorder %v2327, %v1811
        %vm2346 = vcmp.eq.s32.totalorder %v2330, %v1811
        %v2347 = vsel %vm2331, 1, 0
        %v2348 = vsel %vm2332, 1, 0
        %v2349 = vsel %vm2333, 1, 0
        %v2350 = vsel %vm2334, 1, 0
        %v2351 = vsel %vm2335, 1, 0
        %v2352 = vsel %vm2336, 1, 0
        %v2353 = vsel %vm2337, 1, 0
        %v2354 = vsel %vm2338, 1, 0
        %v2355 = vsel %vm2339, 1, 0
        %v2356 = vsel %vm2340, 1, 0
        %v2357 = vsel %vm2341, 1, 0
        %v2358 = vsel %vm2342, 1, 0
        %v2359 = vsel %vm2343, 1, 0
        %v2360 = vsel %vm2344, 1, 0
        %v2361 = vsel %vm2345, 1, 0
        %v2362 = vsel %vm2346, 1, 0
        %v2363 = vcvt.s32.f32 %v2347
        %v2364 = vcvt.s32.f32 %v2348
        %v2365 = vcvt.s32.f32 %v2349
        %v2366 = vcvt.s32.f32 %v2350
        %v2367 = vcvt.s32.f32 %v2351
        %v2368 = vcvt.s32.f32 %v2352
        %v2369 = vcvt.s32.f32 %v2353
        %v2370 = vcvt.s32.f32 %v2354
        %v2371 = vcvt.s32.f32 %v2355
        %v2372 = vcvt.s32.f32 %v2356
        %v2373 = vcvt.s32.f32 %v2357
        %v2374 = vcvt.s32.f32 %v2358
        %v2375 = vcvt.s32.f32 %v2359
        %v2376 = vcvt.s32.f32 %v2360
        %v2377 = vcvt.s32.f32 %v2361
        %v2378 = vcvt.s32.f32 %v2362
        %v2379 = vpack.c.bf16 %v2364, %v2363
        %v2380 = vpack.c.bf16 %v2366, %v2365
        %v2381 = vpack.c.bf16 %v2368, %v2367
        %v2382 = vpack.c.bf16 %v2370, %v2369
        %v2383 = vpack.c.bf16 %v2372, %v2371
        %v2384 = vpack.c.bf16 %v2374, %v2373
        %v2385 = vpack.c.bf16 %v2376, %v2375
        %v2386 = vpack.c.bf16 %v2378, %v2377
        %v2387 = vld [vmem:[#allocation2] sm:$0xff]
        %v2388 = vld [vmem:[#allocation2 + $0x8] sm:$0xff]
        %v2389 = vld [vmem:[#allocation2 + $0x10] sm:$0xff]
        %v2390 = vld [vmem:[#allocation2 + $0x18] sm:$0xff]
        %v2391 = vpack.c.bf16 %v2388, %v2387
        %v2392 = vpack.c.bf16 %v2390, %v2389
        %vm2393 = vcmask 261120
        %v2395 = vsel %vm2393, %v2379, 0
        %v2398 = vsel %vm2393, %v2380, 0
        %v2401 = vsel %vm2393, %v2381, 0
        %v2404 = vsel %vm2393, %v2382, 0
        %v2407 = vsel %vm2393, %v2383, 0
        %v2410 = vsel %vm2393, %v2384, 0
        %v2413 = vsel %vm2393, %v2385, 0
        %v2416 = vsel %vm2393, %v2386, 0
        %2418 = vmatprep.subr.bf16.mxu0 0
        %2419 = vmatpush1.bf16.msra.mxu0 0
        %2420 = vmatprep.subr.bf16.mxu0 0
        %2421 = vmatpush1.bf16.msra.mxu0 0
        %2422 = vmatprep.subr.bf16.mxu0 0
        %2423 = vmatpush1.bf16.msra.mxu0 0
        %2424 = vmatprep.subr.bf16.mxu0 0
        %2425 = vmatpush1.bf16.msra.mxu0 0
        %2426 = vmatprep.subr.bf16.mxu0 0
        %2427 = vmatpush1.bf16.msra.mxu0 0
        %2428 = vmatprep.subr.bf16.mxu0 0
        %2429 = vmatpush1.bf16.msra.mxu0 0
        %2430 = vmatprep.subr.bf16.mxu0 0
        %2431 = vmatpush1.bf16.msra.mxu0 %v2392
        %2432 = vmatprep.subr.bf16.mxu0 0
        %2433 = vmatpush1.bf16.msra.mxu0 %v2391
        %2434 = vmatprep.subr.bf16.mxu0 0
        %2435 = vmatpush2.bf16.msra.mxu0 0
        %2436 = vmatprep.subr.bf16.mxu0 0
        %2437 = vmatpush2.bf16.msra.mxu0 0
        %2438 = vmatprep.subr.bf16.mxu0 0
        %2439 = vmatpush2.bf16.msra.mxu0 0
        %2440 = vmatprep.subr.bf16.mxu0 0
        %2441 = vmatpush2.bf16.msra.mxu0 0
        %2442 = vmatprep.subr.bf16.mxu0 0
        %2443 = vmatpush2.bf16.msra.mxu0 0
        %2444 = vmatprep.subr.bf16.mxu0 0
        %2445 = vmatpush2.bf16.msra.mxu0 0
        %2446 = vmatprep.subr.bf16.mxu0 0
        %2447 = vmatpush2.bf16.msra.mxu0 0
        %2448 = vmatprep.subr.bf16.mxu0 0
        %2449 = vmatpush2.bf16.msra.mxu0 0
        %2450 = vmatprep.mubr.bf16.mxu0 0
        %2451 = vmatmul.mubr.bf16.gmra.mxu0 %v2395
        %v2452 = vpop.f32.mrf.mxu0
        %v2453 = vadd.f32 0.0, %v2452
        %v2454 = vpop.f32.mrf.mxu0
        %v2455 = vpop.f32.mrf.mxu0
        %v2456 = vadd.f32 0.0, %v2455
        %v2457 = vpop.f32.mrf.mxu0
        %2458 = vmatprep.mubr.bf16.mxu0 0
        %2459 = vmatmul.mubr.bf16.gmra.mxu0 %v2398
        %v2460 = vpop.f32.mrf.mxu0
        %v2461 = vadd.f32 0.0, %v2460
        %v2462 = vpop.f32.mrf.mxu0
        %v2463 = vpop.f32.mrf.mxu0
        %v2464 = vadd.f32 0.0, %v2463
        %v2465 = vpop.f32.mrf.mxu0
        %2466 = vmatprep.mubr.bf16.mxu0 0
        %2467 = vmatmul.mubr.bf16.gmra.mxu0 %v2401
        %v2468 = vpop.f32.mrf.mxu0
        %v2469 = vadd.f32 0.0, %v2468
        %v2470 = vpop.f32.mrf.mxu0
        %v2471 = vpop.f32.mrf.mxu0
        %v2472 = vadd.f32 0.0, %v2471
        %v2473 = vpop.f32.mrf.mxu0
        %2474 = vmatprep.mubr.bf16.mxu0 0
        %2475 = vmatmul.mubr.bf16.gmra.mxu0 %v2404
        %v2476 = vpop.f32.mrf.mxu0
        %v2477 = vadd.f32 0.0, %v2476
        %v2478 = vpop.f32.mrf.mxu0
        %v2479 = vpop.f32.mrf.mxu0
        %v2480 = vadd.f32 0.0, %v2479
        %v2481 = vpop.f32.mrf.mxu0
        %2482 = vmatprep.mubr.bf16.mxu0 0
        %2483 = vmatmul.mubr.bf16.gmra.mxu0 %v2407
        %v2484 = vpop.f32.mrf.mxu0
        %v2485 = vadd.f32 0.0, %v2484
        %v2486 = vpop.f32.mrf.mxu0
        %v2487 = vpop.f32.mrf.mxu0
        %v2488 = vadd.f32 0.0, %v2487
        %v2489 = vpop.f32.mrf.mxu0
        %2490 = vmatprep.mubr.bf16.mxu0 0
        %2491 = vmatmul.mubr.bf16.gmra.mxu0 %v2410
        %v2492 = vpop.f32.mrf.mxu0
        %v2493 = vadd.f32 0.0, %v2492
        %v2494 = vpop.f32.mrf.mxu0
        %v2495 = vpop.f32.mrf.mxu0
        %v2496 = vadd.f32 0.0, %v2495
        %v2497 = vpop.f32.mrf.mxu0
        %2498 = vmatprep.mubr.bf16.mxu0 0
        %2499 = vmatmul.mubr.bf16.gmra.mxu0 %v2413
        %v2500 = vpop.f32.mrf.mxu0
        %v2501 = vadd.f32 0.0, %v2500
        %v2502 = vpop.f32.mrf.mxu0
        %v2503 = vpop.f32.mrf.mxu0
        %v2504 = vadd.f32 0.0, %v2503
        %v2505 = vpop.f32.mrf.mxu0
        %2506 = vmatprep.mubr.bf16.mxu0 0
        %2507 = vmatmul.mubr.bf16.gmra.mxu0 %v2416
        %v2508 = vpop.f32.mrf.mxu0
        %v2509 = vadd.f32 0.0, %v2508
        %v2510 = vpop.f32.mrf.mxu0
        %v2511 = vpop.f32.mrf.mxu0
        %v2512 = vadd.f32 0.0, %v2511
        %v2513 = vpop.f32.mrf.mxu0
        %2514 = vdwg.mxu0
        %v2515 = vld [vmem:[%s839] sm:$0xff]
        %v2516 = vld [vmem:[%s839 + $0x8] sm:$0xff]
        %v2517 = vld [vmem:[%s842] sm:$0x1]
        %v2519 = vlaneseq
        %v2520 = vshrl.u32 %v2519, 7
        %v2521 = vsub.s32 0, %v2520
        %v2522 = vrot.slane %v2517, %v2521
        %vm2524 = vcmask 130048
        %v2526 = vsel %vm2524, %v2251, 0
        %v2529 = vsel %vm2524, %v2252, 0
        %v2532 = vsel %vm2524, %v2253, 0
        %v2535 = vsel %vm2524, %v2254, 0
        %v2538 = vsel %vm2524, %v2255, 0
        %v2541 = vsel %vm2524, %v2256, 0
        %v2544 = vsel %vm2524, %v2257, 0
        %v2547 = vsel %vm2524, %v2258, 0
        %v2550 = vsel %vm2524, %v2259, 0
        %v2553 = vsel %vm2524, %v2260, 0
        %v2556 = vsel %vm2524, %v2261, 0
        %v2559 = vsel %vm2524, %v2262, 0
        %v2562 = vsel %vm2524, %v2263, 0
        %v2565 = vsel %vm2524, %v2264, 0
        %v2568 = vsel %vm2524, %v2265, 0
        %v2571 = vsel %vm2524, %v2266, 0
        %2573 = vmatprep.subr.mxu0 0.0
        %2574 = vmatpush1.msra.mxu0 0.0
        %2575 = vmatprep.subr.mxu0 0.0
        %2576 = vmatpush1.msra.mxu0 0.0
        %2577 = vmatprep.subr.mxu0 0.0
        %2578 = vmatpush1.msra.mxu0 0.0
        %2579 = vmatprep.subr.mxu0 0.0
        %2580 = vmatpush1.msra.mxu0 0.0
        %2581 = vmatprep.subr.mxu0 0.0
        %2582 = vmatpush1.msra.mxu0 0.0
        %2583 = vmatprep.subr.mxu0 0.0
        %2584 = vmatpush1.msra.mxu0 0.0
        %2585 = vmatprep.subr.mxu0 0.0
        %2586 = vmatpush1.msra.mxu0 0.0
        %2587 = vmatprep.subr.mxu0 0.0
        %2588 = vmatpush1.msra.mxu0 0.0
        %2589 = vmatprep.subr.mxu0 0.0
        %2590 = vmatpush1.msra.mxu0 0.0
        %2591 = vmatprep.subr.mxu0 0.0
        %2592 = vmatpush1.msra.mxu0 0.0
        %2593 = vmatprep.subr.mxu0 0.0
        %2594 = vmatpush1.msra.mxu0 0.0
        %2595 = vmatprep.subr.mxu0 0.0
        %2596 = vmatpush1.msra.mxu0 0.0
        %2597 = vmatprep.subr.mxu0 0.0
        %2598 = vmatpush1.msra.mxu0 0.0
        %2599 = vmatprep.subr.mxu0 0.0
        %2600 = vmatpush1.msra.mxu0 0.0
        %2601 = vmatprep.subr.mxu0 0.0
        %2602 = vmatpush1.msra.mxu0 %v2516
        %2603 = vmatprep.subr.mxu0 0.0
        %2604 = vmatpush1.msra.mxu0 %v2515
        %2605 = vmatprep.subr.mxu0 0.0
        %2606 = vmatpush2.msra.mxu0 0.0
        %2607 = vmatprep.subr.mxu0 0.0
        %2608 = vmatpush2.msra.mxu0 0.0
        %2609 = vmatprep.subr.mxu0 0.0
        %2610 = vmatpush2.msra.mxu0 0.0
        %2611 = vmatprep.subr.mxu0 0.0
        %2612 = vmatpush2.msra.mxu0 0.0
        %2613 = vmatprep.subr.mxu0 0.0
        %2614 = vmatpush2.msra.mxu0 0.0
        %2615 = vmatprep.subr.mxu0 0.0
        %2616 = vmatpush2.msra.mxu0 0.0
        %2617 = vmatprep.subr.mxu0 0.0
        %2618 = vmatpush2.msra.mxu0 0.0
        %2619 = vmatprep.subr.mxu0 0.0
        %2620 = vmatpush2.msra.mxu0 0.0
        %2621 = vmatprep.subr.mxu0 0.0
        %2622 = vmatpush2.msra.mxu0 0.0
        %2623 = vmatprep.subr.mxu0 0.0
        %2624 = vmatpush2.msra.mxu0 0.0
        %2625 = vmatprep.subr.mxu0 0.0
        %2626 = vmatpush2.msra.mxu0 0.0
        %2627 = vmatprep.subr.mxu0 0.0
        %2628 = vmatpush2.msra.mxu0 0.0
        %2629 = vmatprep.subr.mxu0 0.0
        %2630 = vmatpush2.msra.mxu0 0.0
        %2631 = vmatprep.subr.mxu0 0.0
        %2632 = vmatpush2.msra.mxu0 0.0
        %2633 = vmatprep.subr.mxu0 0.0
        %2634 = vmatpush2.msra.mxu0 0.0
        %2635 = vmatprep.subr.mxu0 0.0
        %2636 = vmatpush2.msra.mxu0 0.0
        %2637 = vmatprep.mubr.f32.mxu0 0.0
        %2638 = vmatmul.mubr.f32.gmra.mxu0 %v2526
        %v2639 = vpop.f32.mrf.mxu0
        %v2640 = vadd.f32 %v2522, %v2639
        %v2641 = vpop.f32.mrf.mxu0
        %2642 = vmatprep.mubr.f32.mxu0 0.0
        %2643 = vmatmul.mubr.f32.gmra.mxu0 %v2529
        %v2644 = vpop.f32.mrf.mxu0
        %v2645 = vadd.f32 %v2522, %v2644
        %v2646 = vpop.f32.mrf.mxu0
        %2647 = vmatprep.mubr.f32.mxu0 0.0
        %2648 = vmatmul.mubr.f32.gmra.mxu0 %v2532
        %v2649 = vpop.f32.mrf.mxu0
        %v2650 = vadd.f32 %v2522, %v2649
        %v2651 = vpop.f32.mrf.mxu0
        %2652 = vmatprep.mubr.f32.mxu0 0.0
        %2653 = vmatmul.mubr.f32.gmra.mxu0 %v2535
        %v2654 = vpop.f32.mrf.mxu0
        %v2655 = vadd.f32 %v2522, %v2654
        %v2656 = vpop.f32.mrf.mxu0
        %2657 = vmatprep.mubr.f32.mxu0 0.0
        %2658 = vmatmul.mubr.f32.gmra.mxu0 %v2538
        %v2659 = vpop.f32.mrf.mxu0
        %v2660 = vadd.f32 %v2522, %v2659
        %v2661 = vpop.f32.mrf.mxu0
        %2662 = vmatprep.mubr.f32.mxu0 0.0
        %2663 = vmatmul.mubr.f32.gmra.mxu0 %v2541
        %v2664 = vpop.f32.mrf.mxu0
        %v2665 = vadd.f32 %v2522, %v2664
        %v2666 = vpop.f32.mrf.mxu0
        %2667 = vmatprep.mubr.f32.mxu0 0.0
        %2668 = vmatmul.mubr.f32.gmra.mxu0 %v2544
        %v2669 = vpop.f32.mrf.mxu0
        %v2670 = vadd.f32 %v2522, %v2669
        %v2671 = vpop.f32.mrf.mxu0
        %2672 = vmatprep.mubr.f32.mxu0 0.0
        %2673 = vmatmul.mubr.f32.gmra.mxu0 %v2547
        %v2674 = vpop.f32.mrf.mxu0
        %v2675 = vadd.f32 %v2522, %v2674
        %v2676 = vpop.f32.mrf.mxu0
        %2677 = vmatprep.mubr.f32.mxu0 0.0
        %2678 = vmatmul.mubr.f32.gmra.mxu0 %v2550
        %v2679 = vpop.f32.mrf.mxu0
        %v2680 = vadd.f32 %v2522, %v2679
        %v2681 = vpop.f32.mrf.mxu0
        %2682 = vmatprep.mubr.f32.mxu0 0.0
        %2683 = vmatmul.mubr.f32.gmra.mxu0 %v2553
        %v2684 = vpop.f32.mrf.mxu0
        %v2685 = vadd.f32 %v2522, %v2684
        %v2686 = vpop.f32.mrf.mxu0
        %2687 = vmatprep.mubr.f32.mxu0 0.0
        %2688 = vmatmul.mubr.f32.gmra.mxu0 %v2556
        %v2689 = vpop.f32.mrf.mxu0
        %v2690 = vadd.f32 %v2522, %v2689
        %v2691 = vpop.f32.mrf.mxu0
        %2692 = vmatprep.mubr.f32.mxu0 0.0
        %2693 = vmatmul.mubr.f32.gmra.mxu0 %v2559
        %v2694 = vpop.f32.mrf.mxu0
        %v2695 = vadd.f32 %v2522, %v2694
        %v2696 = vpop.f32.mrf.mxu0
        %2697 = vmatprep.mubr.f32.mxu0 0.0
        %2698 = vmatmul.mubr.f32.gmra.mxu0 %v2562
        %v2699 = vpop.f32.mrf.mxu0
        %v2700 = vadd.f32 %v2522, %v2699
        %v2701 = vpop.f32.mrf.mxu0
        %2702 = vmatprep.mubr.f32.mxu0 0.0
        %2703 = vmatmul.mubr.f32.gmra.mxu0 %v2565
        %v2704 = vpop.f32.mrf.mxu0
        %v2705 = vadd.f32 %v2522, %v2704
        %v2706 = vpop.f32.mrf.mxu0
        %2707 = vmatprep.mubr.f32.mxu0 0.0
        %2708 = vmatmul.mubr.f32.gmra.mxu0 %v2568
        %v2709 = vpop.f32.mrf.mxu0
        %v2710 = vadd.f32 %v2522, %v2709
        %v2711 = vpop.f32.mrf.mxu0
        %2712 = vmatprep.mubr.f32.mxu0 0.0
        %2713 = vmatmul.mubr.f32.gmra.mxu0 %v2571
        %v2714 = vpop.f32.mrf.mxu0
        %v2715 = vadd.f32 %v2522, %v2714
        %v2716 = vpop.f32.mrf.mxu0
        %2717 = vdwg.mxu0
        %v2718 = vxor.u32 %v2640, 2147483648
        %v2719 = vxor.u32 %v2645, 2147483648
        %v2720 = vxor.u32 %v2650, 2147483648
        %v2721 = vxor.u32 %v2655, 2147483648
        %v2722 = vxor.u32 %v2660, 2147483648
        %v2723 = vxor.u32 %v2665, 2147483648
        %v2724 = vxor.u32 %v2670, 2147483648
        %v2725 = vxor.u32 %v2675, 2147483648
        %v2726 = vxor.u32 %v2680, 2147483648
        %v2727 = vxor.u32 %v2685, 2147483648
        %v2728 = vxor.u32 %v2690, 2147483648
        %v2729 = vxor.u32 %v2695, 2147483648
        %v2730 = vxor.u32 %v2700, 2147483648
        %v2731 = vxor.u32 %v2705, 2147483648
        %v2732 = vxor.u32 %v2710, 2147483648
        %v2733 = vxor.u32 %v2715, 2147483648
        %v2734 = vmul.f32 %v2718, 1.442695
        %v2735 = vpow.pop %v2734
        %v2736 = vmul.f32 %v2719, 1.442695
        %v2737 = vpow.pop %v2736
        %v2738 = vmul.f32 %v2720, 1.442695
        %v2739 = vpow.pop %v2738
        %v2740 = vmul.f32 %v2721, 1.442695
        %v2741 = vpow.pop %v2740
        %v2742 = vmul.f32 %v2722, 1.442695
        %v2743 = vpow.pop %v2742
        %v2744 = vmul.f32 %v2723, 1.442695
        %v2745 = vpow.pop %v2744
        %v2746 = vmul.f32 %v2724, 1.442695
        %v2747 = vpow.pop %v2746
        %v2748 = vmul.f32 %v2725, 1.442695
        %v2749 = vpow.pop %v2748
        %v2750 = vmul.f32 %v2726, 1.442695
        %v2751 = vpow.pop %v2750
        %v2752 = vmul.f32 %v2727, 1.442695
        %v2753 = vpow.pop %v2752
        %v2754 = vmul.f32 %v2728, 1.442695
        %v2755 = vpow.pop %v2754
        %v2756 = vmul.f32 %v2729, 1.442695
        %v2757 = vpow.pop %v2756
        %v2758 = vmul.f32 %v2730, 1.442695
        %v2759 = vpow.pop %v2758
        %v2760 = vmul.f32 %v2731, 1.442695
        %v2761 = vpow.pop %v2760
        %v2762 = vmul.f32 %v2732, 1.442695
        %v2763 = vpow.pop %v2762
        %v2764 = vmul.f32 %v2733, 1.442695
        %v2765 = vpow.pop %v2764
        %v2766 = vadd.f32 %v2735, 1.0
        %v2767 = vadd.f32 %v2737, 1.0
        %v2768 = vadd.f32 %v2739, 1.0
        %v2769 = vadd.f32 %v2741, 1.0
        %v2770 = vadd.f32 %v2743, 1.0
        %v2771 = vadd.f32 %v2745, 1.0
        %v2772 = vadd.f32 %v2747, 1.0
        %v2773 = vadd.f32 %v2749, 1.0
        %v2774 = vadd.f32 %v2751, 1.0
        %v2775 = vadd.f32 %v2753, 1.0
        %v2776 = vadd.f32 %v2755, 1.0
        %v2777 = vadd.f32 %v2757, 1.0
        %v2778 = vadd.f32 %v2759, 1.0
        %v2779 = vadd.f32 %v2761, 1.0
        %v2780 = vadd.f32 %v2763, 1.0
        %v2781 = vadd.f32 %v2765, 1.0
        %v2782 = vrcp.pop %v2766
        %v2783 = vmul.f32 1.0, %v2782
        %v2784 = vrcp.pop %v2767
        %v2785 = vmul.f32 1.0, %v2784
        %v2786 = vrcp.pop %v2768
        %v2787 = vmul.f32 1.0, %v2786
        %v2788 = vrcp.pop %v2769
        %v2789 = vmul.f32 1.0, %v2788
        %v2790 = vrcp.pop %v2770
        %v2791 = vmul.f32 1.0, %v2790
        %v2792 = vrcp.pop %v2771
        %v2793 = vmul.f32 1.0, %v2792
        %v2794 = vrcp.pop %v2772
        %v2795 = vmul.f32 1.0, %v2794
        %v2796 = vrcp.pop %v2773
        %v2797 = vmul.f32 1.0, %v2796
        %v2798 = vrcp.pop %v2774
        %v2799 = vmul.f32 1.0, %v2798
        %v2800 = vrcp.pop %v2775
        %v2801 = vmul.f32 1.0, %v2800
        %v2802 = vrcp.pop %v2776
        %v2803 = vmul.f32 1.0, %v2802
        %v2804 = vrcp.pop %v2777
        %v2805 = vmul.f32 1.0, %v2804
        %v2806 = vrcp.pop %v2778
        %v2807 = vmul.f32 1.0, %v2806
        %v2808 = vrcp.pop %v2779
        %v2809 = vmul.f32 1.0, %v2808
        %v2810 = vrcp.pop %v2780
        %v2811 = vmul.f32 1.0, %v2810
        %v2812 = vrcp.pop %v2781
        %v2813 = vmul.f32 1.0, %v2812
        %v2814 = vmul.f32 %v2640, %v2783
        %v2815 = vmul.f32 %v2645, %v2785
        %v2816 = vmul.f32 %v2650, %v2787
        %v2817 = vmul.f32 %v2655, %v2789
        %v2818 = vmul.f32 %v2660, %v2791
        %v2819 = vmul.f32 %v2665, %v2793
        %v2820 = vmul.f32 %v2670, %v2795
        %v2821 = vmul.f32 %v2675, %v2797
        %v2822 = vmul.f32 %v2680, %v2799
        %v2823 = vmul.f32 %v2685, %v2801
        %v2824 = vmul.f32 %v2690, %v2803
        %v2825 = vmul.f32 %v2695, %v2805
        %v2826 = vmul.f32 %v2700, %v2807
        %v2827 = vmul.f32 %v2705, %v2809
        %v2828 = vmul.f32 %v2710, %v2811
        %v2829 = vmul.f32 %v2715, %v2813
        %v2830 = vld [vmem:[%s847] sm:$0xff]
        %v2831 = vld [vmem:[%s847 + $0x8] sm:$0xff]
        %v2832 = vld [vmem:[%s847 + $0x10] sm:$0xff]
        %v2833 = vld [vmem:[%s847 + $0x18] sm:$0xff]
        %v2834 = vld [vmem:[%s850] sm:$0x1]
        %v2836 = vlaneseq
        %v2837 = vshrl.u32 %v2836, 7
        %v2838 = vsub.s32 0, %v2837
        %v2839 = vrot.slane %v2834, %v2838
        %v2842 = vsel %vm2393, %v2814, 0
        %v2845 = vsel %vm2393, %v2815, 0
        %v2848 = vsel %vm2393, %v2816, 0
        %v2851 = vsel %vm2393, %v2817, 0
        %v2854 = vsel %vm2393, %v2818, 0
        %v2857 = vsel %vm2393, %v2819, 0
        %v2860 = vsel %vm2393, %v2820, 0
        %v2863 = vsel %vm2393, %v2821, 0
        %v2866 = vsel %vm2393, %v2822, 0
        %v2869 = vsel %vm2393, %v2823, 0
        %v2872 = vsel %vm2393, %v2824, 0
        %v2875 = vsel %vm2393, %v2825, 0
        %v2878 = vsel %vm2393, %v2826, 0
        %v2881 = vsel %vm2393, %v2827, 0
        %v2884 = vsel %vm2393, %v2828, 0
        %v2887 = vsel %vm2393, %v2829, 0
        %2889 = vmatprep.subr.mxu0 0.0
        %2890 = vmatpush1.msra.mxu0 0.0
        %2891 = vmatprep.subr.mxu0 0.0
        %2892 = vmatpush1.msra.mxu0 0.0
        %2893 = vmatprep.subr.mxu0 0.0
        %2894 = vmatpush1.msra.mxu0 0.0
        %2895 = vmatprep.subr.mxu0 0.0
        %2896 = vmatpush1.msra.mxu0 0.0
        %2897 = vmatprep.subr.mxu0 0.0
        %2898 = vmatpush1.msra.mxu0 0.0
        %2899 = vmatprep.subr.mxu0 0.0
        %2900 = vmatpush1.msra.mxu0 0.0
        %2901 = vmatprep.subr.mxu0 0.0
        %2902 = vmatpush1.msra.mxu0 0.0
        %2903 = vmatprep.subr.mxu0 0.0
        %2904 = vmatpush1.msra.mxu0 0.0
        %2905 = vmatprep.subr.mxu0 0.0
        %2906 = vmatpush1.msra.mxu0 0.0
        %2907 = vmatprep.subr.mxu0 0.0
        %2908 = vmatpush1.msra.mxu0 0.0
        %2909 = vmatprep.subr.mxu0 0.0
        %2910 = vmatpush1.msra.mxu0 0.0
        %2911 = vmatprep.subr.mxu0 0.0
        %2912 = vmatpush1.msra.mxu0 0.0
        %2913 = vmatprep.subr.mxu0 0.0
        %2914 = vmatpush1.msra.mxu0 %v2833
        %2915 = vmatprep.subr.mxu0 0.0
        %2916 = vmatpush1.msra.mxu0 %v2832
        %2917 = vmatprep.subr.mxu0 0.0
        %2918 = vmatpush1.msra.mxu0 %v2831
        %2919 = vmatprep.subr.mxu0 0.0
        %2920 = vmatpush1.msra.mxu0 %v2830
        %2921 = vmatprep.subr.mxu0 0.0
        %2922 = vmatpush2.msra.mxu0 0.0
        %2923 = vmatprep.subr.mxu0 0.0
        %2924 = vmatpush2.msra.mxu0 0.0
        %2925 = vmatprep.subr.mxu0 0.0
        %2926 = vmatpush2.msra.mxu0 0.0
        %2927 = vmatprep.subr.mxu0 0.0
        %2928 = vmatpush2.msra.mxu0 0.0
        %2929 = vmatprep.subr.mxu0 0.0
        %2930 = vmatpush2.msra.mxu0 0.0
        %2931 = vmatprep.subr.mxu0 0.0
        %2932 = vmatpush2.msra.mxu0 0.0
        %2933 = vmatprep.subr.mxu0 0.0
        %2934 = vmatpush2.msra.mxu0 0.0
        %2935 = vmatprep.subr.mxu0 0.0
        %2936 = vmatpush2.msra.mxu0 0.0
        %2937 = vmatprep.subr.mxu0 0.0
        %2938 = vmatpush2.msra.mxu0 0.0
        %2939 = vmatprep.subr.mxu0 0.0
        %2940 = vmatpush2.msra.mxu0 0.0
        %2941 = vmatprep.subr.mxu0 0.0
        %2942 = vmatpush2.msra.mxu0 0.0
        %2943 = vmatprep.subr.mxu0 0.0
        %2944 = vmatpush2.msra.mxu0 0.0
        %2945 = vmatprep.subr.mxu0 0.0
        %2946 = vmatpush2.msra.mxu0 0.0
        %2947 = vmatprep.subr.mxu0 0.0
        %2948 = vmatpush2.msra.mxu0 0.0
        %2949 = vmatprep.subr.mxu0 0.0
        %2950 = vmatpush2.msra.mxu0 0.0
        %2951 = vmatprep.subr.mxu0 0.0
        %2952 = vmatpush2.msra.mxu0 0.0
        %2953 = vmatprep.mubr.f32.mxu0 0.0
        %2954 = vmatmul.mubr.f32.gmra.mxu0 %v2842
        %v2955 = vpop.f32.mrf.mxu0
        %v2956 = vadd.f32 %v2839, %v2955
        %v2957 = vpop.f32.mrf.mxu0
        %2958 = vmatprep.mubr.f32.mxu0 0.0
        %2959 = vmatmul.mubr.f32.gmra.mxu0 %v2845
        %v2960 = vpop.f32.mrf.mxu0
        %v2961 = vadd.f32 %v2839, %v2960
        %v2962 = vpop.f32.mrf.mxu0
        %2963 = vmatprep.mubr.f32.mxu0 0.0
        %2964 = vmatmul.mubr.f32.gmra.mxu0 %v2848
        %v2965 = vpop.f32.mrf.mxu0
        %v2966 = vadd.f32 %v2839, %v2965
        %v2967 = vpop.f32.mrf.mxu0
        %2968 = vmatprep.mubr.f32.mxu0 0.0
        %2969 = vmatmul.mubr.f32.gmra.mxu0 %v2851
        %v2970 = vpop.f32.mrf.mxu0
        %v2971 = vadd.f32 %v2839, %v2970
        %v2972 = vpop.f32.mrf.mxu0
        %2973 = vmatprep.mubr.f32.mxu0 0.0
        %2974 = vmatmul.mubr.f32.gmra.mxu0 %v2854
        %v2975 = vpop.f32.mrf.mxu0
        %v2976 = vadd.f32 %v2839, %v2975
        %v2977 = vpop.f32.mrf.mxu0
        %2978 = vmatprep.mubr.f32.mxu0 0.0
        %2979 = vmatmul.mubr.f32.gmra.mxu0 %v2857
        %v2980 = vpop.f32.mrf.mxu0
        %v2981 = vadd.f32 %v2839, %v2980
        %v2982 = vpop.f32.mrf.mxu0
        %2983 = vmatprep.mubr.f32.mxu0 0.0
        %2984 = vmatmul.mubr.f32.gmra.mxu0 %v2860
        %v2985 = vpop.f32.mrf.mxu0
        %v2986 = vadd.f32 %v2839, %v2985
        %v2987 = vpop.f32.mrf.mxu0
        %2988 = vmatprep.mubr.f32.mxu0 0.0
        %2989 = vmatmul.mubr.f32.gmra.mxu0 %v2863
        %v2990 = vpop.f32.mrf.mxu0
        %v2991 = vadd.f32 %v2839, %v2990
        %v2992 = vpop.f32.mrf.mxu0
        %2993 = vmatprep.mubr.f32.mxu0 0.0
        %2994 = vmatmul.mubr.f32.gmra.mxu0 %v2866
        %v2995 = vpop.f32.mrf.mxu0
        %v2996 = vadd.f32 %v2839, %v2995
        %v2997 = vpop.f32.mrf.mxu0
        %2998 = vmatprep.mubr.f32.mxu0 0.0
        %2999 = vmatmul.mubr.f32.gmra.mxu0 %v2869
        %v3000 = vpop.f32.mrf.mxu0
        %v3001 = vadd.f32 %v2839, %v3000
        %v3002 = vpop.f32.mrf.mxu0
        %3003 = vmatprep.mubr.f32.mxu0 0.0
        %3004 = vmatmul.mubr.f32.gmra.mxu0 %v2872
        %v3005 = vpop.f32.mrf.mxu0
        %v3006 = vadd.f32 %v2839, %v3005
        %v3007 = vpop.f32.mrf.mxu0
        %3008 = vmatprep.mubr.f32.mxu0 0.0
        %3009 = vmatmul.mubr.f32.gmra.mxu0 %v2875
        %v3010 = vpop.f32.mrf.mxu0
        %v3011 = vadd.f32 %v2839, %v3010
        %v3012 = vpop.f32.mrf.mxu0
        %3013 = vmatprep.mubr.f32.mxu0 0.0
        %3014 = vmatmul.mubr.f32.gmra.mxu0 %v2878
        %v3015 = vpop.f32.mrf.mxu0
        %v3016 = vadd.f32 %v2839, %v3015
        %v3017 = vpop.f32.mrf.mxu0
        %3018 = vmatprep.mubr.f32.mxu0 0.0
        %3019 = vmatmul.mubr.f32.gmra.mxu0 %v2881
        %v3020 = vpop.f32.mrf.mxu0
        %v3021 = vadd.f32 %v2839, %v3020
        %v3022 = vpop.f32.mrf.mxu0
        %3023 = vmatprep.mubr.f32.mxu0 0.0
        %3024 = vmatmul.mubr.f32.gmra.mxu0 %v2884
        %v3025 = vpop.f32.mrf.mxu0
        %v3026 = vadd.f32 %v2839, %v3025
        %v3027 = vpop.f32.mrf.mxu0
        %3028 = vmatprep.mubr.f32.mxu0 0.0
        %3029 = vmatmul.mubr.f32.gmra.mxu0 %v2887
        %v3030 = vpop.f32.mrf.mxu0
        %v3031 = vadd.f32 %v2839, %v3030
        %v3032 = vpop.f32.mrf.mxu0
        %3033 = vdwg.mxu0
        %v3034 = vmul.f32 %v2453, %v2956
        %v3035 = vmul.f32 %v2456, %v2961
        %v3036 = vmul.f32 %v2461, %v2966
        %v3037 = vmul.f32 %v2464, %v2971
        %v3038 = vmul.f32 %v2469, %v2976
        %v3039 = vmul.f32 %v2472, %v2981
        %v3040 = vmul.f32 %v2477, %v2986
        %v3041 = vmul.f32 %v2480, %v2991
        %v3042 = vmul.f32 %v2485, %v2996
        %v3043 = vmul.f32 %v2488, %v3001
        %v3044 = vmul.f32 %v2493, %v3006
        %v3045 = vmul.f32 %v2496, %v3011
        %v3046 = vmul.f32 %v2501, %v3016
        %v3047 = vmul.f32 %v2504, %v3021
        %v3048 = vmul.f32 %v2509, %v3026
        %v3049 = vmul.f32 %v2512, %v3031
        %3051 = vset.pattern.permute.xlu0 0
        %3052 = vperm.xlu0 %3051, %v1298
        %v3053 = vpop.permute.xlu0 %3052
        %3056 = vset.pattern.permute.xlu0 0
        %3057 = vperm.xlu0 %3056, %v1299
        %v3058 = vpop.permute.xlu0 %3057
        %3061 = vset.pattern.permute.xlu0 0
        %3062 = vperm.xlu0 %3061, %v1300
        %v3063 = vpop.permute.xlu0 %3062
        %3066 = vset.pattern.permute.xlu0 0
        %3067 = vperm.xlu0 %3066, %v1301
        %v3068 = vpop.permute.xlu0 %3067
        %3071 = vset.pattern.permute.xlu0 0
        %3072 = vperm.xlu0 %3071, %v1302
        %v3073 = vpop.permute.xlu0 %3072
        %3076 = vset.pattern.permute.xlu0 0
        %3077 = vperm.xlu0 %3076, %v1303
        %v3078 = vpop.permute.xlu0 %3077
        %3081 = vset.pattern.permute.xlu0 0
        %3082 = vperm.xlu0 %3081, %v1304
        %v3083 = vpop.permute.xlu0 %3082
        %3086 = vset.pattern.permute.xlu0 0
        %3087 = vperm.xlu0 %3086, %v1305
        %v3088 = vpop.permute.xlu0 %3087
        %3091 = vset.pattern.permute.xlu0 0
        %3092 = vperm.xlu0 %3091, %v1306
        %v3093 = vpop.permute.xlu0 %3092
        %3096 = vset.pattern.permute.xlu0 0
        %3097 = vperm.xlu0 %3096, %v1307
        %v3098 = vpop.permute.xlu0 %3097
        %3101 = vset.pattern.permute.xlu0 0
        %3102 = vperm.xlu0 %3101, %v1308
        %v3103 = vpop.permute.xlu0 %3102
        %3106 = vset.pattern.permute.xlu0 0
        %3107 = vperm.xlu0 %3106, %v1309
        %v3108 = vpop.permute.xlu0 %3107
        %3111 = vset.pattern.permute.xlu0 0
        %3112 = vperm.xlu0 %3111, %v1310
        %v3113 = vpop.permute.xlu0 %3112
        %3116 = vset.pattern.permute.xlu0 0
        %3117 = vperm.xlu0 %3116, %v1311
        %v3118 = vpop.permute.xlu0 %3117
        %3121 = vset.pattern.permute.xlu0 0
        %3122 = vperm.xlu0 %3121, %v1312
        %v3123 = vpop.permute.xlu0 %3122
        %3126 = vset.pattern.permute.xlu0 0
        %3127 = vperm.xlu0 %3126, %v1313
        %v3128 = vpop.permute.xlu0 %3127
        %v3130 = vmul.f32 %v3034, %v3053
        %v3131 = vmul.f32 %v3035, %v3058
        %v3132 = vmul.f32 %v3036, %v3063
        %v3133 = vmul.f32 %v3037, %v3068
        %v3134 = vmul.f32 %v3038, %v3073
        %v3135 = vmul.f32 %v3039, %v3078
        %v3136 = vmul.f32 %v3040, %v3083
        %v3137 = vmul.f32 %v3041, %v3088
        %v3138 = vmul.f32 %v3042, %v3093
        %v3139 = vmul.f32 %v3043, %v3098
        %v3140 = vmul.f32 %v3044, %v3103
        %v3141 = vmul.f32 %v3045, %v3108
        %v3142 = vmul.f32 %v3046, %v3113
        %v3143 = vmul.f32 %v3047, %v3118
        %v3144 = vmul.f32 %v3048, %v3123
        %v3145 = vmul.f32 %v3049, %v3128
        %3147 = vset.pattern.permute.xlu0 1
        %3148 = vperm.xlu0 %3147, %v1314
        %v3149 = vpop.permute.xlu0 %3148
        %3152 = vset.pattern.permute.xlu0 1
        %3153 = vperm.xlu0 %3152, %v1315
        %v3154 = vpop.permute.xlu0 %3153
        %3157 = vset.pattern.permute.xlu0 1
        %3158 = vperm.xlu0 %3157, %v1316
        %v3159 = vpop.permute.xlu0 %3158
        %3162 = vset.pattern.permute.xlu0 1
        %3163 = vperm.xlu0 %3162, %v1317
        %v3164 = vpop.permute.xlu0 %3163
        %3167 = vset.pattern.permute.xlu0 1
        %3168 = vperm.xlu0 %3167, %v1318
        %v3169 = vpop.permute.xlu0 %3168
        %3172 = vset.pattern.permute.xlu0 1
        %3173 = vperm.xlu0 %3172, %v1319
        %v3174 = vpop.permute.xlu0 %3173
        %3177 = vset.pattern.permute.xlu0 1
        %3178 = vperm.xlu0 %3177, %v1320
        %v3179 = vpop.permute.xlu0 %3178
        %3182 = vset.pattern.permute.xlu0 1
        %3183 = vperm.xlu0 %3182, %v1321
        %v3184 = vpop.permute.xlu0 %3183
        %3187 = vset.pattern.permute.xlu0 1
        %3188 = vperm.xlu0 %3187, %v1322
        %v3189 = vpop.permute.xlu0 %3188
        %3192 = vset.pattern.permute.xlu0 1
        %3193 = vperm.xlu0 %3192, %v1323
        %v3194 = vpop.permute.xlu0 %3193
        %3197 = vset.pattern.permute.xlu0 1
        %3198 = vperm.xlu0 %3197, %v1324
        %v3199 = vpop.permute.xlu0 %3198
        %3202 = vset.pattern.permute.xlu0 1
        %3203 = vperm.xlu0 %3202, %v1325
        %v3204 = vpop.permute.xlu0 %3203
        %3207 = vset.pattern.permute.xlu0 1
        %3208 = vperm.xlu0 %3207, %v1326
        %v3209 = vpop.permute.xlu0 %3208
        %3212 = vset.pattern.permute.xlu0 1
        %3213 = vperm.xlu0 %3212, %v1327
        %v3214 = vpop.permute.xlu0 %3213
        %3217 = vset.pattern.permute.xlu0 1
        %3218 = vperm.xlu0 %3217, %v1328
        %v3219 = vpop.permute.xlu0 %3218
        %3222 = vset.pattern.permute.xlu0 1
        %3223 = vperm.xlu0 %3222, %v1329
        %v3224 = vpop.permute.xlu0 %3223
        %v3226 = vmul.f32 %v3034, %v3149
        %v3227 = vmul.f32 %v3035, %v3154
        %v3228 = vmul.f32 %v3036, %v3159
        %v3229 = vmul.f32 %v3037, %v3164
        %v3230 = vmul.f32 %v3038, %v3169
        %v3231 = vmul.f32 %v3039, %v3174
        %v3232 = vmul.f32 %v3040, %v3179
        %v3233 = vmul.f32 %v3041, %v3184
        %v3234 = vmul.f32 %v3042, %v3189
        %v3235 = vmul.f32 %v3043, %v3194
        %v3236 = vmul.f32 %v3044, %v3199
        %v3237 = vmul.f32 %v3045, %v3204
        %v3238 = vmul.f32 %v3046, %v3209
        %v3239 = vmul.f32 %v3047, %v3214
        %v3240 = vmul.f32 %v3048, %v3219
        %v3241 = vmul.f32 %v3049, %v3224
        %3243 = vset.pattern.permute.xlu0 2
        %3244 = vperm.xlu0 %3243, %v1330
        %v3245 = vpop.permute.xlu0 %3244
        %3248 = vset.pattern.permute.xlu0 2
        %3249 = vperm.xlu0 %3248, %v1331
        %v3250 = vpop.permute.xlu0 %3249
        %3253 = vset.pattern.permute.xlu0 2
        %3254 = vperm.xlu0 %3253, %v1332
        %v3255 = vpop.permute.xlu0 %3254
        %3258 = vset.pattern.permute.xlu0 2
        %3259 = vperm.xlu0 %3258, %v1333
        %v3260 = vpop.permute.xlu0 %3259
        %3263 = vset.pattern.permute.xlu0 2
        %3264 = vperm.xlu0 %3263, %v1334
        %v3265 = vpop.permute.xlu0 %3264
        %3268 = vset.pattern.permute.xlu0 2
        %3269 = vperm.xlu0 %3268, %v1335
        %v3270 = vpop.permute.xlu0 %3269
        %3273 = vset.pattern.permute.xlu0 2
        %3274 = vperm.xlu0 %3273, %v1336
        %v3275 = vpop.permute.xlu0 %3274
        %3278 = vset.pattern.permute.xlu0 2
        %3279 = vperm.xlu0 %3278, %v1337
        %v3280 = vpop.permute.xlu0 %3279
        %3283 = vset.pattern.permute.xlu0 2
        %3284 = vperm.xlu0 %3283, %v1338
        %v3285 = vpop.permute.xlu0 %3284
        %3288 = vset.pattern.permute.xlu0 2
        %3289 = vperm.xlu0 %3288, %v1339
        %v3290 = vpop.permute.xlu0 %3289
        %3293 = vset.pattern.permute.xlu0 2
        %3294 = vperm.xlu0 %3293, %v1340
        %v3295 = vpop.permute.xlu0 %3294
        %3298 = vset.pattern.permute.xlu0 2
        %3299 = vperm.xlu0 %3298, %v1341
        %v3300 = vpop.permute.xlu0 %3299
        %3303 = vset.pattern.permute.xlu0 2
        %3304 = vperm.xlu0 %3303, %v1342
        %v3305 = vpop.permute.xlu0 %3304
        %3308 = vset.pattern.permute.xlu0 2
        %3309 = vperm.xlu0 %3308, %v1343
        %v3310 = vpop.permute.xlu0 %3309
        %3313 = vset.pattern.permute.xlu0 2
        %3314 = vperm.xlu0 %3313, %v1344
        %v3315 = vpop.permute.xlu0 %3314
        %3318 = vset.pattern.permute.xlu0 2
        %3319 = vperm.xlu0 %3318, %v1345
        %v3320 = vpop.permute.xlu0 %3319
        %v3322 = vmul.f32 %v3034, %v3245
        %v3323 = vmul.f32 %v3035, %v3250
        %v3324 = vmul.f32 %v3036, %v3255
        %v3325 = vmul.f32 %v3037, %v3260
        %v3326 = vmul.f32 %v3038, %v3265
        %v3327 = vmul.f32 %v3039, %v3270
        %v3328 = vmul.f32 %v3040, %v3275
        %v3329 = vmul.f32 %v3041, %v3280
        %v3330 = vmul.f32 %v3042, %v3285
        %v3331 = vmul.f32 %v3043, %v3290
        %v3332 = vmul.f32 %v3044, %v3295
        %v3333 = vmul.f32 %v3045, %v3300
        %v3334 = vmul.f32 %v3046, %v3305
        %v3335 = vmul.f32 %v3047, %v3310
        %v3336 = vmul.f32 %v3048, %v3315
        %v3337 = vmul.f32 %v3049, %v3320
        %3339 = vset.pattern.permute.xlu0 0
        %3340 = vperm.xlu0 %3339, %v1426
        %v3341 = vpop.permute.xlu0 %3340
        %3344 = vset.pattern.permute.xlu0 0
        %3345 = vperm.xlu0 %3344, %v1427
        %v3346 = vpop.permute.xlu0 %3345
        %3349 = vset.pattern.permute.xlu0 0
        %3350 = vperm.xlu0 %3349, %v1428
        %v3351 = vpop.permute.xlu0 %3350
        %3354 = vset.pattern.permute.xlu0 0
        %3355 = vperm.xlu0 %3354, %v1429
        %v3356 = vpop.permute.xlu0 %3355
        %3359 = vset.pattern.permute.xlu0 0
        %3360 = vperm.xlu0 %3359, %v1430
        %v3361 = vpop.permute.xlu0 %3360
        %3364 = vset.pattern.permute.xlu0 0
        %3365 = vperm.xlu0 %3364, %v1431
        %v3366 = vpop.permute.xlu0 %3365
        %3369 = vset.pattern.permute.xlu0 0
        %3370 = vperm.xlu0 %3369, %v1432
        %v3371 = vpop.permute.xlu0 %3370
        %3374 = vset.pattern.permute.xlu0 0
        %3375 = vperm.xlu0 %3374, %v1433
        %v3376 = vpop.permute.xlu0 %3375
        %3379 = vset.pattern.permute.xlu0 0
        %3380 = vperm.xlu0 %3379, %v1434
        %v3381 = vpop.permute.xlu0 %3380
        %3384 = vset.pattern.permute.xlu0 0
        %3385 = vperm.xlu0 %3384, %v1435
        %v3386 = vpop.permute.xlu0 %3385
        %3389 = vset.pattern.permute.xlu0 0
        %3390 = vperm.xlu0 %3389, %v1436
        %v3391 = vpop.permute.xlu0 %3390
        %3394 = vset.pattern.permute.xlu0 0
        %3395 = vperm.xlu0 %3394, %v1437
        %v3396 = vpop.permute.xlu0 %3395
        %3399 = vset.pattern.permute.xlu0 0
        %3400 = vperm.xlu0 %3399, %v1438
        %v3401 = vpop.permute.xlu0 %3400
        %3404 = vset.pattern.permute.xlu0 0
        %3405 = vperm.xlu0 %3404, %v1439
        %v3406 = vpop.permute.xlu0 %3405
        %3409 = vset.pattern.permute.xlu0 0
        %3410 = vperm.xlu0 %3409, %v1440
        %v3411 = vpop.permute.xlu0 %3410
        %3414 = vset.pattern.permute.xlu0 0
        %3415 = vperm.xlu0 %3414, %v1441
        %v3416 = vpop.permute.xlu0 %3415
        %v3418 = vmul.f32 %v3034, %v3341
        %v3419 = vmul.f32 %v3035, %v3346
        %v3420 = vmul.f32 %v3036, %v3351
        %v3421 = vmul.f32 %v3037, %v3356
        %v3422 = vmul.f32 %v3038, %v3361
        %v3423 = vmul.f32 %v3039, %v3366
        %v3424 = vmul.f32 %v3040, %v3371
        %v3425 = vmul.f32 %v3041, %v3376
        %v3426 = vmul.f32 %v3042, %v3381
        %v3427 = vmul.f32 %v3043, %v3386
        %v3428 = vmul.f32 %v3044, %v3391
        %v3429 = vmul.f32 %v3045, %v3396
        %v3430 = vmul.f32 %v3046, %v3401
        %v3431 = vmul.f32 %v3047, %v3406
        %v3432 = vmul.f32 %v3048, %v3411
        %v3433 = vmul.f32 %v3049, %v3416
        %3435 = vset.pattern.permute.xlu0 1
        %3436 = vperm.xlu0 %3435, %v1522
        %v3437 = vpop.permute.xlu0 %3436
        %3440 = vset.pattern.permute.xlu0 1
        %3441 = vperm.xlu0 %3440, %v1523
        %v3442 = vpop.permute.xlu0 %3441
        %3445 = vset.pattern.permute.xlu0 1
        %3446 = vperm.xlu0 %3445, %v1524
        %v3447 = vpop.permute.xlu0 %3446
        %3450 = vset.pattern.permute.xlu0 1
        %3451 = vperm.xlu0 %3450, %v1525
        %v3452 = vpop.permute.xlu0 %3451
        %3455 = vset.pattern.permute.xlu0 1
        %3456 = vperm.xlu0 %3455, %v1526
        %v3457 = vpop.permute.xlu0 %3456
        %3460 = vset.pattern.permute.xlu0 1
        %3461 = vperm.xlu0 %3460, %v1527
        %v3462 = vpop.permute.xlu0 %3461
        %3465 = vset.pattern.permute.xlu0 1
        %3466 = vperm.xlu0 %3465, %v1528
        %v3467 = vpop.permute.xlu0 %3466
        %3470 = vset.pattern.permute.xlu0 1
        %3471 = vperm.xlu0 %3470, %v1529
        %v3472 = vpop.permute.xlu0 %3471
        %3475 = vset.pattern.permute.xlu0 1
        %3476 = vperm.xlu0 %3475, %v1530
        %v3477 = vpop.permute.xlu0 %3476
        %3480 = vset.pattern.permute.xlu0 1
        %3481 = vperm.xlu0 %3480, %v1531
        %v3482 = vpop.permute.xlu0 %3481
        %3485 = vset.pattern.permute.xlu0 1
        %3486 = vperm.xlu0 %3485, %v1532
        %v3487 = vpop.permute.xlu0 %3486
        %3490 = vset.pattern.permute.xlu0 1
        %3491 = vperm.xlu0 %3490, %v1533
        %v3492 = vpop.permute.xlu0 %3491
        %3495 = vset.pattern.permute.xlu0 1
        %3496 = vperm.xlu0 %3495, %v1534
        %v3497 = vpop.permute.xlu0 %3496
        %3500 = vset.pattern.permute.xlu0 1
        %3501 = vperm.xlu0 %3500, %v1535
        %v3502 = vpop.permute.xlu0 %3501
        %3505 = vset.pattern.permute.xlu0 1
        %3506 = vperm.xlu0 %3505, %v1536
        %v3507 = vpop.permute.xlu0 %3506
        %3510 = vset.pattern.permute.xlu0 1
        %3511 = vperm.xlu0 %3510, %v1537
        %v3512 = vpop.permute.xlu0 %3511
        %v3514 = vmul.f32 %v3034, %v3437
        %v3515 = vmul.f32 %v3035, %v3442
        %v3516 = vmul.f32 %v3036, %v3447
        %v3517 = vmul.f32 %v3037, %v3452
        %v3518 = vmul.f32 %v3038, %v3457
        %v3519 = vmul.f32 %v3039, %v3462
        %v3520 = vmul.f32 %v3040, %v3467
        %v3521 = vmul.f32 %v3041, %v3472
        %v3522 = vmul.f32 %v3042, %v3477
        %v3523 = vmul.f32 %v3043, %v3482
        %v3524 = vmul.f32 %v3044, %v3487
        %v3525 = vmul.f32 %v3045, %v3492
        %v3526 = vmul.f32 %v3046, %v3497
        %v3527 = vmul.f32 %v3047, %v3502
        %v3528 = vmul.f32 %v3048, %v3507
        %v3529 = vmul.f32 %v3049, %v3512
        %3531 = vset.pattern.permute.xlu0 2
        %3532 = vperm.xlu0 %3531, %v1586
        %v3533 = vpop.permute.xlu0 %3532
        %3536 = vset.pattern.permute.xlu0 2
        %3537 = vperm.xlu0 %3536, %v1587
        %v3538 = vpop.permute.xlu0 %3537
        %3541 = vset.pattern.permute.xlu0 2
        %3542 = vperm.xlu0 %3541, %v1588
        %v3543 = vpop.permute.xlu0 %3542
        %3546 = vset.pattern.permute.xlu0 2
        %3547 = vperm.xlu0 %3546, %v1589
        %v3548 = vpop.permute.xlu0 %3547
        %3551 = vset.pattern.permute.xlu0 2
        %3552 = vperm.xlu0 %3551, %v1590
        %v3553 = vpop.permute.xlu0 %3552
        %3556 = vset.pattern.permute.xlu0 2
        %3557 = vperm.xlu0 %3556, %v1591
        %v3558 = vpop.permute.xlu0 %3557
        %3561 = vset.pattern.permute.xlu0 2
        %3562 = vperm.xlu0 %3561, %v1592
        %v3563 = vpop.permute.xlu0 %3562
        %3566 = vset.pattern.permute.xlu0 2
        %3567 = vperm.xlu0 %3566, %v1593
        %v3568 = vpop.permute.xlu0 %3567
        %3571 = vset.pattern.permute.xlu0 2
        %3572 = vperm.xlu0 %3571, %v1594
        %v3573 = vpop.permute.xlu0 %3572
        %3576 = vset.pattern.permute.xlu0 2
        %3577 = vperm.xlu0 %3576, %v1595
        %v3578 = vpop.permute.xlu0 %3577
        %3581 = vset.pattern.permute.xlu0 2
        %3582 = vperm.xlu0 %3581, %v1596
        %v3583 = vpop.permute.xlu0 %3582
        %3586 = vset.pattern.permute.xlu0 2
        %3587 = vperm.xlu0 %3586, %v1597
        %v3588 = vpop.permute.xlu0 %3587
        %3591 = vset.pattern.permute.xlu0 2
        %3592 = vperm.xlu0 %3591, %v1598
        %v3593 = vpop.permute.xlu0 %3592
        %3596 = vset.pattern.permute.xlu0 2
        %3597 = vperm.xlu0 %3596, %v1599
        %v3598 = vpop.permute.xlu0 %3597
        %3601 = vset.pattern.permute.xlu0 2
        %3602 = vperm.xlu0 %3601, %v1600
        %v3603 = vpop.permute.xlu0 %3602
        %3606 = vset.pattern.permute.xlu0 2
        %3607 = vperm.xlu0 %3606, %v1601
        %v3608 = vpop.permute.xlu0 %3607
        %v3610 = vmul.f32 %v3034, %v3533
        %v3611 = vmul.f32 %v3035, %v3538
        %v3612 = vmul.f32 %v3036, %v3543
        %v3613 = vmul.f32 %v3037, %v3548
        %v3614 = vmul.f32 %v3038, %v3553
        %v3615 = vmul.f32 %v3039, %v3558
        %v3616 = vmul.f32 %v3040, %v3563
        %v3617 = vmul.f32 %v3041, %v3568
        %v3618 = vmul.f32 %v3042, %v3573
        %v3619 = vmul.f32 %v3043, %v3578
        %v3620 = vmul.f32 %v3044, %v3583
        %v3621 = vmul.f32 %v3045, %v3588
        %v3622 = vmul.f32 %v3046, %v3593
        %v3623 = vmul.f32 %v3047, %v3598
        %v3624 = vmul.f32 %v3048, %v3603
        %v3625 = vmul.f32 %v3049, %v3608
        %3627 = vset.pattern.permute.xlu0 0
        %3628 = vperm.xlu0 %3627, %v1650
        %v3629 = vpop.permute.xlu0 %3628
        %3632 = vset.pattern.permute.xlu0 0
        %3633 = vperm.xlu0 %3632, %v1651
        %v3634 = vpop.permute.xlu0 %3633
        %3637 = vset.pattern.permute.xlu0 0
        %3638 = vperm.xlu0 %3637, %v1652
        %v3639 = vpop.permute.xlu0 %3638
        %3642 = vset.pattern.permute.xlu0 0
        %3643 = vperm.xlu0 %3642, %v1653
        %v3644 = vpop.permute.xlu0 %3643
        %3647 = vset.pattern.permute.xlu0 0
        %3648 = vperm.xlu0 %3647, %v1654
        %v3649 = vpop.permute.xlu0 %3648
        %3652 = vset.pattern.permute.xlu0 0
        %3653 = vperm.xlu0 %3652, %v1655
        %v3654 = vpop.permute.xlu0 %3653
        %3657 = vset.pattern.permute.xlu0 0
        %3658 = vperm.xlu0 %3657, %v1656
        %v3659 = vpop.permute.xlu0 %3658
        %3662 = vset.pattern.permute.xlu0 0
        %3663 = vperm.xlu0 %3662, %v1657
        %v3664 = vpop.permute.xlu0 %3663
        %3667 = vset.pattern.permute.xlu0 0
        %3668 = vperm.xlu0 %3667, %v1658
        %v3669 = vpop.permute.xlu0 %3668
        %3672 = vset.pattern.permute.xlu0 0
        %3673 = vperm.xlu0 %3672, %v1659
        %v3674 = vpop.permute.xlu0 %3673
        %3677 = vset.pattern.permute.xlu0 0
        %3678 = vperm.xlu0 %3677, %v1660
        %v3679 = vpop.permute.xlu0 %3678
        %3682 = vset.pattern.permute.xlu0 0
        %3683 = vperm.xlu0 %3682, %v1661
        %v3684 = vpop.permute.xlu0 %3683
        %3687 = vset.pattern.permute.xlu0 0
        %3688 = vperm.xlu0 %3687, %v1662
        %v3689 = vpop.permute.xlu0 %3688
        %3692 = vset.pattern.permute.xlu0 0
        %3693 = vperm.xlu0 %3692, %v1663
        %v3694 = vpop.permute.xlu0 %3693
        %3697 = vset.pattern.permute.xlu0 0
        %3698 = vperm.xlu0 %3697, %v1664
        %v3699 = vpop.permute.xlu0 %3698
        %3702 = vset.pattern.permute.xlu0 0
        %3703 = vperm.xlu0 %3702, %v1665
        %v3704 = vpop.permute.xlu0 %3703
        %v3706 = vmul.f32 %v3034, %v3629
        %v3707 = vmul.f32 %v3035, %v3634
        %v3708 = vmul.f32 %v3036, %v3639
        %v3709 = vmul.f32 %v3037, %v3644
        %v3710 = vmul.f32 %v3038, %v3649
        %v3711 = vmul.f32 %v3039, %v3654
        %v3712 = vmul.f32 %v3040, %v3659
        %v3713 = vmul.f32 %v3041, %v3664
        %v3714 = vmul.f32 %v3042, %v3669
        %v3715 = vmul.f32 %v3043, %v3674
        %v3716 = vmul.f32 %v3044, %v3679
        %v3717 = vmul.f32 %v3045, %v3684
        %v3718 = vmul.f32 %v3046, %v3689
        %v3719 = vmul.f32 %v3047, %v3694
        %v3720 = vmul.f32 %v3048, %v3699
        %v3721 = vmul.f32 %v3049, %v3704
        %3723 = vset.pattern.permute.xlu0 0
        %3724 = vperm.xlu0 %3723, %v1778
        %v3725 = vpop.permute.xlu0 %3724
        %3728 = vset.pattern.permute.xlu0 0
        %3729 = vperm.xlu0 %3728, %v1779
        %v3730 = vpop.permute.xlu0 %3729
        %3733 = vset.pattern.permute.xlu0 0
        %3734 = vperm.xlu0 %3733, %v1780
        %v3735 = vpop.permute.xlu0 %3734
        %3738 = vset.pattern.permute.xlu0 0
        %3739 = vperm.xlu0 %3738, %v1781
        %v3740 = vpop.permute.xlu0 %3739
        %3743 = vset.pattern.permute.xlu0 0
        %3744 = vperm.xlu0 %3743, %v1782
        %v3745 = vpop.permute.xlu0 %3744
        %3748 = vset.pattern.permute.xlu0 0
        %3749 = vperm.xlu0 %3748, %v1783
        %v3750 = vpop.permute.xlu0 %3749
        %3753 = vset.pattern.permute.xlu0 0
        %3754 = vperm.xlu0 %3753, %v1784
        %v3755 = vpop.permute.xlu0 %3754
        %3758 = vset.pattern.permute.xlu0 0
        %3759 = vperm.xlu0 %3758, %v1785
        %v3760 = vpop.permute.xlu0 %3759
        %3763 = vset.pattern.permute.xlu0 0
        %3764 = vperm.xlu0 %3763, %v1786
        %v3765 = vpop.permute.xlu0 %3764
        %3768 = vset.pattern.permute.xlu0 0
        %3769 = vperm.xlu0 %3768, %v1787
        %v3770 = vpop.permute.xlu0 %3769
        %3773 = vset.pattern.permute.xlu0 0
        %3774 = vperm.xlu0 %3773, %v1788
        %v3775 = vpop.permute.xlu0 %3774
        %3778 = vset.pattern.permute.xlu0 0
        %3779 = vperm.xlu0 %3778, %v1789
        %v3780 = vpop.permute.xlu0 %3779
        %3783 = vset.pattern.permute.xlu0 0
        %3784 = vperm.xlu0 %3783, %v1790
        %v3785 = vpop.permute.xlu0 %3784
        %3788 = vset.pattern.permute.xlu0 0
        %3789 = vperm.xlu0 %3788, %v1791
        %v3790 = vpop.permute.xlu0 %3789
        %3793 = vset.pattern.permute.xlu0 0
        %3794 = vperm.xlu0 %3793, %v1792
        %v3795 = vpop.permute.xlu0 %3794
        %3798 = vset.pattern.permute.xlu0 0
        %3799 = vperm.xlu0 %3798, %v1793
        %v3800 = vpop.permute.xlu0 %3799
        %v3802 = vmul.f32 %v3034, %v3725
        %v3803 = vmul.f32 %v3035, %v3730
        %v3804 = vmul.f32 %v3036, %v3735
        %v3805 = vmul.f32 %v3037, %v3740
        %v3806 = vmul.f32 %v3038, %v3745
        %v3807 = vmul.f32 %v3039, %v3750
        %v3808 = vmul.f32 %v3040, %v3755
        %v3809 = vmul.f32 %v3041, %v3760
        %v3810 = vmul.f32 %v3042, %v3765
        %v3811 = vmul.f32 %v3043, %v3770
        %v3812 = vmul.f32 %v3044, %v3775
        %v3813 = vmul.f32 %v3045, %v3780
        %v3814 = vmul.f32 %v3046, %v3785
        %v3815 = vmul.f32 %v3047, %v3790
        %v3816 = vmul.f32 %v3048, %v3795
        %v3817 = vmul.f32 %v3049, %v3800
        %3834 = vrot.lane.b32.xlu0 %v3130, 32
        %v3835 = vpop.permute.xlu0 %3834
        %3836 = vrot.lane.b32.xlu0 %v3131, 32
        %v3837 = vpop.permute.xlu0 %3836
        %3838 = vrot.lane.b32.xlu0 %v3132, 32
        %v3839 = vpop.permute.xlu0 %3838
        %3840 = vrot.lane.b32.xlu0 %v3133, 32
        %v3841 = vpop.permute.xlu0 %3840
        %3842 = vrot.lane.b32.xlu0 %v3134, 32
        %v3843 = vpop.permute.xlu0 %3842
        %3844 = vrot.lane.b32.xlu0 %v3135, 32
        %v3845 = vpop.permute.xlu0 %3844
        %3846 = vrot.lane.b32.xlu0 %v3136, 32
        %v3847 = vpop.permute.xlu0 %3846
        %3848 = vrot.lane.b32.xlu0 %v3137, 32
        %v3849 = vpop.permute.xlu0 %3848
        %3850 = vrot.lane.b32.xlu0 %v3138, 32
        %v3851 = vpop.permute.xlu0 %3850
        %3852 = vrot.lane.b32.xlu0 %v3139, 32
        %v3853 = vpop.permute.xlu0 %3852
        %3854 = vrot.lane.b32.xlu0 %v3140, 32
        %v3855 = vpop.permute.xlu0 %3854
        %3856 = vrot.lane.b32.xlu0 %v3141, 32
        %v3857 = vpop.permute.xlu0 %3856
        %3858 = vrot.lane.b32.xlu0 %v3142, 32
        %v3859 = vpop.permute.xlu0 %3858
        %3860 = vrot.lane.b32.xlu0 %v3143, 32
        %v3861 = vpop.permute.xlu0 %3860
        %3862 = vrot.lane.b32.xlu0 %v3144, 32
        %v3863 = vpop.permute.xlu0 %3862
        %3864 = vrot.lane.b32.xlu0 %v3145, 32
        %v3865 = vpop.permute.xlu0 %3864
        %3898 = vrot.lane.b32.xlu0 %v3226, 64
        %v3899 = vpop.permute.xlu0 %3898
        %3900 = vrot.lane.b32.xlu0 %v3227, 64
        %v3901 = vpop.permute.xlu0 %3900
        %3902 = vrot.lane.b32.xlu0 %v3228, 64
        %v3903 = vpop.permute.xlu0 %3902
        %3904 = vrot.lane.b32.xlu0 %v3229, 64
        %v3905 = vpop.permute.xlu0 %3904
        %3906 = vrot.lane.b32.xlu0 %v3230, 64
        %v3907 = vpop.permute.xlu0 %3906
        %3908 = vrot.lane.b32.xlu0 %v3231, 64
        %v3909 = vpop.permute.xlu0 %3908
        %3910 = vrot.lane.b32.xlu0 %v3232, 64
        %v3911 = vpop.permute.xlu0 %3910
        %3912 = vrot.lane.b32.xlu0 %v3233, 64
        %v3913 = vpop.permute.xlu0 %3912
        %3914 = vrot.lane.b32.xlu0 %v3234, 64
        %v3915 = vpop.permute.xlu0 %3914
        %3916 = vrot.lane.b32.xlu0 %v3235, 64
        %v3917 = vpop.permute.xlu0 %3916
        %3918 = vrot.lane.b32.xlu0 %v3236, 64
        %v3919 = vpop.permute.xlu0 %3918
        %3920 = vrot.lane.b32.xlu0 %v3237, 64
        %v3921 = vpop.permute.xlu0 %3920
        %3922 = vrot.lane.b32.xlu0 %v3238, 64
        %v3923 = vpop.permute.xlu0 %3922
        %3924 = vrot.lane.b32.xlu0 %v3239, 64
        %v3925 = vpop.permute.xlu0 %3924
        %3926 = vrot.lane.b32.xlu0 %v3240, 64
        %v3927 = vpop.permute.xlu0 %3926
        %3928 = vrot.lane.b32.xlu0 %v3241, 64
        %v3929 = vpop.permute.xlu0 %3928
        %3962 = vrot.lane.b32.xlu0 %v3322, 96
        %v3963 = vpop.permute.xlu0 %3962
        %3964 = vrot.lane.b32.xlu0 %v3323, 96
        %v3965 = vpop.permute.xlu0 %3964
        %3966 = vrot.lane.b32.xlu0 %v3324, 96
        %v3967 = vpop.permute.xlu0 %3966
        %3968 = vrot.lane.b32.xlu0 %v3325, 96
        %v3969 = vpop.permute.xlu0 %3968
        %3970 = vrot.lane.b32.xlu0 %v3326, 96
        %v3971 = vpop.permute.xlu0 %3970
        %3972 = vrot.lane.b32.xlu0 %v3327, 96
        %v3973 = vpop.permute.xlu0 %3972
        %3974 = vrot.lane.b32.xlu0 %v3328, 96
        %v3975 = vpop.permute.xlu0 %3974
        %3976 = vrot.lane.b32.xlu0 %v3329, 96
        %v3977 = vpop.permute.xlu0 %3976
        %3978 = vrot.lane.b32.xlu0 %v3330, 96
        %v3979 = vpop.permute.xlu0 %3978
        %3980 = vrot.lane.b32.xlu0 %v3331, 96
        %v3981 = vpop.permute.xlu0 %3980
        %3982 = vrot.lane.b32.xlu0 %v3332, 96
        %v3983 = vpop.permute.xlu0 %3982
        %3984 = vrot.lane.b32.xlu0 %v3333, 96
        %v3985 = vpop.permute.xlu0 %3984
        %3986 = vrot.lane.b32.xlu0 %v3334, 96
        %v3987 = vpop.permute.xlu0 %3986
        %3988 = vrot.lane.b32.xlu0 %v3335, 96
        %v3989 = vpop.permute.xlu0 %3988
        %3990 = vrot.lane.b32.xlu0 %v3336, 96
        %v3991 = vpop.permute.xlu0 %3990
        %3992 = vrot.lane.b32.xlu0 %v3337, 96
        %v3993 = vpop.permute.xlu0 %3992
        %4026 = vrot.lane.b32.xlu0 %v3514, 32
        %v4027 = vpop.permute.xlu0 %4026
        %4028 = vrot.lane.b32.xlu0 %v3515, 32
        %v4029 = vpop.permute.xlu0 %4028
        %4030 = vrot.lane.b32.xlu0 %v3516, 32
        %v4031 = vpop.permute.xlu0 %4030
        %4032 = vrot.lane.b32.xlu0 %v3517, 32
        %v4033 = vpop.permute.xlu0 %4032
        %4034 = vrot.lane.b32.xlu0 %v3518, 32
        %v4035 = vpop.permute.xlu0 %4034
        %4036 = vrot.lane.b32.xlu0 %v3519, 32
        %v4037 = vpop.permute.xlu0 %4036
        %4038 = vrot.lane.b32.xlu0 %v3520, 32
        %v4039 = vpop.permute.xlu0 %4038
        %4040 = vrot.lane.b32.xlu0 %v3521, 32
        %v4041 = vpop.permute.xlu0 %4040
        %4042 = vrot.lane.b32.xlu0 %v3522, 32
        %v4043 = vpop.permute.xlu0 %4042
        %4044 = vrot.lane.b32.xlu0 %v3523, 32
        %v4045 = vpop.permute.xlu0 %4044
        %4046 = vrot.lane.b32.xlu0 %v3524, 32
        %v4047 = vpop.permute.xlu0 %4046
        %4048 = vrot.lane.b32.xlu0 %v3525, 32
        %v4049 = vpop.permute.xlu0 %4048
        %4050 = vrot.lane.b32.xlu0 %v3526, 32
        %v4051 = vpop.permute.xlu0 %4050
        %4052 = vrot.lane.b32.xlu0 %v3527, 32
        %v4053 = vpop.permute.xlu0 %4052
        %4054 = vrot.lane.b32.xlu0 %v3528, 32
        %v4055 = vpop.permute.xlu0 %4054
        %4056 = vrot.lane.b32.xlu0 %v3529, 32
        %v4057 = vpop.permute.xlu0 %4056
        %4090 = vrot.lane.b32.xlu0 %v3610, 64
        %v4091 = vpop.permute.xlu0 %4090
        %4092 = vrot.lane.b32.xlu0 %v3611, 64
        %v4093 = vpop.permute.xlu0 %4092
        %4094 = vrot.lane.b32.xlu0 %v3612, 64
        %v4095 = vpop.permute.xlu0 %4094
        %4096 = vrot.lane.b32.xlu0 %v3613, 64
        %v4097 = vpop.permute.xlu0 %4096
        %4098 = vrot.lane.b32.xlu0 %v3614, 64
        %v4099 = vpop.permute.xlu0 %4098
        %4100 = vrot.lane.b32.xlu0 %v3615, 64
        %v4101 = vpop.permute.xlu0 %4100
        %4102 = vrot.lane.b32.xlu0 %v3616, 64
        %v4103 = vpop.permute.xlu0 %4102
        %4104 = vrot.lane.b32.xlu0 %v3617, 64
        %v4105 = vpop.permute.xlu0 %4104
        %4106 = vrot.lane.b32.xlu0 %v3618, 64
        %v4107 = vpop.permute.xlu0 %4106
        %4108 = vrot.lane.b32.xlu0 %v3619, 64
        %v4109 = vpop.permute.xlu0 %4108
        %4110 = vrot.lane.b32.xlu0 %v3620, 64
        %v4111 = vpop.permute.xlu0 %4110
        %4112 = vrot.lane.b32.xlu0 %v3621, 64
        %v4113 = vpop.permute.xlu0 %4112
        %4114 = vrot.lane.b32.xlu0 %v3622, 64
        %v4115 = vpop.permute.xlu0 %4114
        %4116 = vrot.lane.b32.xlu0 %v3623, 64
        %v4117 = vpop.permute.xlu0 %4116
        %4118 = vrot.lane.b32.xlu0 %v3624, 64
        %v4119 = vpop.permute.xlu0 %4118
        %4120 = vrot.lane.b32.xlu0 %v3625, 64
        %v4121 = vpop.permute.xlu0 %4120
        %4154 = vrot.lane.b32.xlu0 %v3706, 96
        %v4155 = vpop.permute.xlu0 %4154
        %4156 = vrot.lane.b32.xlu0 %v3707, 96
        %v4157 = vpop.permute.xlu0 %4156
        %4158 = vrot.lane.b32.xlu0 %v3708, 96
        %v4159 = vpop.permute.xlu0 %4158
        %4160 = vrot.lane.b32.xlu0 %v3709, 96
        %v4161 = vpop.permute.xlu0 %4160
        %4162 = vrot.lane.b32.xlu0 %v3710, 96
        %v4163 = vpop.permute.xlu0 %4162
        %4164 = vrot.lane.b32.xlu0 %v3711, 96
        %v4165 = vpop.permute.xlu0 %4164
        %4166 = vrot.lane.b32.xlu0 %v3712, 96
        %v4167 = vpop.permute.xlu0 %4166
        %4168 = vrot.lane.b32.xlu0 %v3713, 96
        %v4169 = vpop.permute.xlu0 %4168
        %4170 = vrot.lane.b32.xlu0 %v3714, 96
        %v4171 = vpop.permute.xlu0 %4170
        %4172 = vrot.lane.b32.xlu0 %v3715, 96
        %v4173 = vpop.permute.xlu0 %4172
        %4174 = vrot.lane.b32.xlu0 %v3716, 96
        %v4175 = vpop.permute.xlu0 %4174
        %4176 = vrot.lane.b32.xlu0 %v3717, 96
        %v4177 = vpop.permute.xlu0 %4176
        %4178 = vrot.lane.b32.xlu0 %v3718, 96
        %v4179 = vpop.permute.xlu0 %4178
        %4180 = vrot.lane.b32.xlu0 %v3719, 96
        %v4181 = vpop.permute.xlu0 %4180
        %4182 = vrot.lane.b32.xlu0 %v3720, 96
        %v4183 = vpop.permute.xlu0 %4182
        %4184 = vrot.lane.b32.xlu0 %v3721, 96
        %v4185 = vpop.permute.xlu0 %4184
        %v4202 = vsel %vm2393, %v3034, %v3835
        %v4203 = vsel %vm2393, %v3035, %v3837
        %v4204 = vsel %vm2393, %v3036, %v3839
        %v4205 = vsel %vm2393, %v3037, %v3841
        %v4206 = vsel %vm2393, %v3038, %v3843
        %v4207 = vsel %vm2393, %v3039, %v3845
        %v4208 = vsel %vm2393, %v3040, %v3847
        %v4209 = vsel %vm2393, %v3041, %v3849
        %v4210 = vsel %vm2393, %v3042, %v3851
        %v4211 = vsel %vm2393, %v3043, %v3853
        %v4212 = vsel %vm2393, %v3044, %v3855
        %v4213 = vsel %vm2393, %v3045, %v3857
        %v4214 = vsel %vm2393, %v3046, %v3859
        %v4215 = vsel %vm2393, %v3047, %v3861
        %v4216 = vsel %vm2393, %v3048, %v3863
        %v4217 = vsel %vm2393, %v3049, %v3865
        %vm4218 = vcmask 523264
        %v4219 = vsel %vm4218, %v4202, %v3899
        %v4220 = vsel %vm4218, %v4203, %v3901
        %v4221 = vsel %vm4218, %v4204, %v3903
        %v4222 = vsel %vm4218, %v4205, %v3905
        %v4223 = vsel %vm4218, %v4206, %v3907
        %v4224 = vsel %vm4218, %v4207, %v3909
        %v4225 = vsel %vm4218, %v4208, %v3911
        %v4226 = vsel %vm4218, %v4209, %v3913
        %v4227 = vsel %vm4218, %v4210, %v3915
        %v4228 = vsel %vm4218, %v4211, %v3917
        %v4229 = vsel %vm4218, %v4212, %v3919
        %v4230 = vsel %vm4218, %v4213, %v3921
        %v4231 = vsel %vm4218, %v4214, %v3923
        %v4232 = vsel %vm4218, %v4215, %v3925
        %v4233 = vsel %vm4218, %v4216, %v3927
        %v4234 = vsel %vm4218, %v4217, %v3929
        %vm4235 = vcmask 785408
        %v4236 = vsel %vm4235, %v4219, %v3963
        %v4237 = vsel %vm4235, %v4220, %v3965
        %v4238 = vsel %vm4235, %v4221, %v3967
        %v4239 = vsel %vm4235, %v4222, %v3969
        %v4240 = vsel %vm4235, %v4223, %v3971
        %v4241 = vsel %vm4235, %v4224, %v3973
        %v4242 = vsel %vm4235, %v4225, %v3975
        %v4243 = vsel %vm4235, %v4226, %v3977
        %v4244 = vsel %vm4235, %v4227, %v3979
        %v4245 = vsel %vm4235, %v4228, %v3981
        %v4246 = vsel %vm4235, %v4229, %v3983
        %v4247 = vsel %vm4235, %v4230, %v3985
        %v4248 = vsel %vm4235, %v4231, %v3987
        %v4249 = vsel %vm4235, %v4232, %v3989
        %v4250 = vsel %vm4235, %v4233, %v3991
        %v4251 = vsel %vm4235, %v4234, %v3993
        %v4252 = vsel %vm2393, %v3418, %v4027
        %v4253 = vsel %vm2393, %v3419, %v4029
        %v4254 = vsel %vm2393, %v3420, %v4031
        %v4255 = vsel %vm2393, %v3421, %v4033
        %v4256 = vsel %vm2393, %v3422, %v4035
        %v4257 = vsel %vm2393, %v3423, %v4037
        %v4258 = vsel %vm2393, %v3424, %v4039
        %v4259 = vsel %vm2393, %v3425, %v4041
        %v4260 = vsel %vm2393, %v3426, %v4043
        %v4261 = vsel %vm2393, %v3427, %v4045
        %v4262 = vsel %vm2393, %v3428, %v4047
        %v4263 = vsel %vm2393, %v3429, %v4049
        %v4264 = vsel %vm2393, %v3430, %v4051
        %v4265 = vsel %vm2393, %v3431, %v4053
        %v4266 = vsel %vm2393, %v3432, %v4055
        %v4267 = vsel %vm2393, %v3433, %v4057
        %v4268 = vsel %vm4218, %v4252, %v4091
        %v4269 = vsel %vm4218, %v4253, %v4093
        %v4270 = vsel %vm4218, %v4254, %v4095
        %v4271 = vsel %vm4218, %v4255, %v4097
        %v4272 = vsel %vm4218, %v4256, %v4099
        %v4273 = vsel %vm4218, %v4257, %v4101
        %v4274 = vsel %vm4218, %v4258, %v4103
        %v4275 = vsel %vm4218, %v4259, %v4105
        %v4276 = vsel %vm4218, %v4260, %v4107
        %v4277 = vsel %vm4218, %v4261, %v4109
        %v4278 = vsel %vm4218, %v4262, %v4111
        %v4279 = vsel %vm4218, %v4263, %v4113
        %v4280 = vsel %vm4218, %v4264, %v4115
        %v4281 = vsel %vm4218, %v4265, %v4117
        %v4282 = vsel %vm4218, %v4266, %v4119
        %v4283 = vsel %vm4218, %v4267, %v4121
        %v4284 = vsel %vm4235, %v4268, %v4155
        %v4285 = vsel %vm4235, %v4269, %v4157
        %v4286 = vsel %vm4235, %v4270, %v4159
        %v4287 = vsel %vm4235, %v4271, %v4161
        %v4288 = vsel %vm4235, %v4272, %v4163
        %v4289 = vsel %vm4235, %v4273, %v4165
        %v4290 = vsel %vm4235, %v4274, %v4167
        %v4291 = vsel %vm4235, %v4275, %v4169
        %v4292 = vsel %vm4235, %v4276, %v4171
        %v4293 = vsel %vm4235, %v4277, %v4173
        %v4294 = vsel %vm4235, %v4278, %v4175
        %v4295 = vsel %vm4235, %v4279, %v4177
        %v4296 = vsel %vm4235, %v4280, %v4179
        %v4297 = vsel %vm4235, %v4281, %v4181
        %v4298 = vsel %vm4235, %v4282, %v4183
        %v4299 = vsel %vm4235, %v4283, %v4185
        %v4300 = vpack.c.bf16 %v4237, %v4236
        %v4301 = vpack.c.bf16 %v4285, %v4284
        %v4302 = vpack.c.bf16 %v3803, %v3802
        %v4303 = vpack.c.bf16 %v4239, %v4238
        %v4304 = vpack.c.bf16 %v4287, %v4286
        %v4305 = vpack.c.bf16 %v3805, %v3804
        %v4306 = vpack.c.bf16 %v4241, %v4240
        %v4307 = vpack.c.bf16 %v4289, %v4288
        %v4308 = vpack.c.bf16 %v3807, %v3806
        %v4309 = vpack.c.bf16 %v4243, %v4242
        %v4310 = vpack.c.bf16 %v4291, %v4290
        %v4311 = vpack.c.bf16 %v3809, %v3808
        %v4312 = vpack.c.bf16 %v4245, %v4244
        %v4313 = vpack.c.bf16 %v4293, %v4292
        %v4314 = vpack.c.bf16 %v3811, %v3810
        %v4315 = vpack.c.bf16 %v4247, %v4246
        %v4316 = vpack.c.bf16 %v4295, %v4294
        %v4317 = vpack.c.bf16 %v3813, %v3812
        %v4318 = vpack.c.bf16 %v4249, %v4248
        %v4319 = vpack.c.bf16 %v4297, %v4296
        %v4320 = vpack.c.bf16 %v3815, %v3814
        %v4321 = vpack.c.bf16 %v4251, %v4250
        %v4322 = vpack.c.bf16 %v4299, %v4298
        %v4323 = vpack.c.bf16 %v3817, %v3816
        %v4324 = vld [vmem:[%s855] sm:$0xff]
        %v4325 = vld [vmem:[%s855 + $0x8] sm:$0xff]
        %v4326 = vld [vmem:[%s855 + $0x10] sm:$0xff]
        %v4327 = vld [vmem:[%s855 + $0x18] sm:$0xff]
        %v4328 = vld [vmem:[%s855 + $0x20] sm:$0xff]
        %v4329 = vld [vmem:[%s855 + $0x28] sm:$0xff]
        %v4330 = vld [vmem:[%s855 + $0x30] sm:$0xff]
        %v4331 = vld [vmem:[%s855 + $0x38] sm:$0xff]
        %v4332 = vld [vmem:[%s855 + $0x40] sm:$0xff]
        %v4333 = vld [vmem:[%s855 + $0x48] sm:$0xff]
        %v4334 = vld [vmem:[%s855 + $0x50] sm:$0xff]
        %v4335 = vld [vmem:[%s855 + $0x58] sm:$0xff]
        %v4336 = vld [vmem:[%s855 + $0x60] sm:$0xff]
        %v4337 = vld [vmem:[%s855 + $0x68] sm:$0xff]
        %v4338 = vld [vmem:[%s855 + $0x70] sm:$0xff]
        %v4339 = vld [vmem:[%s855 + $0x78] sm:$0xff]
        %v4340 = vld [vmem:[%s855 + $0x80] sm:$0xff]
        %v4341 = vld [vmem:[%s855 + $0x88] sm:$0xff]
        %v4342 = vld [vmem:[%s855 + $0x90] sm:$0xff]
        %v4343 = vld [vmem:[%s855 + $0x98] sm:$0xff]
        %v4344 = vld [vmem:[%s855 + $0xa0] sm:$0xff]
        %v4345 = vld [vmem:[%s855 + $0xa8] sm:$0xff]
        %v4346 = vld [vmem:[%s855 + $0xb0] sm:$0xff]
        %v4347 = vld [vmem:[%s855 + $0xb8] sm:$0xff]
        %v4348 = vld [vmem:[%s855 + $0xc0] sm:$0xff]
        %v4349 = vld [vmem:[%s855 + $0xc8] sm:$0xff]
        %v4350 = vld [vmem:[%s855 + $0xd0] sm:$0xff]
        %v4351 = vld [vmem:[%s855 + $0xd8] sm:$0xff]
        %v4352 = vld [vmem:[%s855 + $0xe0] sm:$0xff]
        %v4353 = vld [vmem:[%s855 + $0xe8] sm:$0xff]
        %v4354 = vld [vmem:[%s855 + $0xf0] sm:$0xff]
        %v4355 = vld [vmem:[%s855 + $0xf8] sm:$0xff]
        %v4356 = vld [vmem:[%s855 + $0x100] sm:$0xff]
        %v4357 = vld [vmem:[%s855 + $0x108] sm:$0xff]
        %v4358 = vld [vmem:[%s855 + $0x110] sm:$0xff]
        %v4359 = vld [vmem:[%s855 + $0x118] sm:$0xff]
        %v4360 = vpack.c.bf16 %v4325, %v4324
        %v4361 = vpack.c.bf16 %v4327, %v4326
        %v4362 = vpack.c.bf16 %v4329, %v4328
        %v4363 = vpack.c.bf16 %v4331, %v4330
        %v4364 = vpack.c.bf16 %v4333, %v4332
        %v4365 = vpack.c.bf16 %v4335, %v4334
        %v4366 = vpack.c.bf16 %v4337, %v4336
        %v4367 = vpack.c.bf16 %v4339, %v4338
        %v4368 = vpack.c.bf16 %v4341, %v4340
        %v4369 = vpack.c.bf16 %v4343, %v4342
        %v4370 = vpack.c.bf16 %v4345, %v4344
        %v4371 = vpack.c.bf16 %v4347, %v4346
        %v4372 = vpack.c.bf16 %v4349, %v4348
        %v4373 = vpack.c.bf16 %v4351, %v4350
        %v4374 = vpack.c.bf16 %v4353, %v4352
        %v4375 = vpack.c.bf16 %v4355, %v4354
        %v4376 = vpack.c.bf16 %v4357, %v4356
        %v4377 = vpack.c.bf16 %v4359, %v4358
        %v4379 = vsel %vm2393, %v4302, 0
        %v4382 = vsel %vm2393, %v4305, 0
        %v4385 = vsel %vm2393, %v4308, 0
        %v4388 = vsel %vm2393, %v4311, 0
        %v4391 = vsel %vm2393, %v4314, 0
        %v4394 = vsel %vm2393, %v4317, 0
        %v4397 = vsel %vm2393, %v4320, 0
        %v4400 = vsel %vm2393, %v4323, 0
        %4402 = vmatprep.subr.bf16.mxu0 0
        %4403 = vmatpush1.bf16.msra.mxu0 %v4367
        %4404 = vmatprep.subr.bf16.mxu0 0
        %4405 = vmatpush1.bf16.msra.mxu0 %v4366
        %4406 = vmatprep.subr.bf16.mxu0 0
        %4407 = vmatpush1.bf16.msra.mxu0 %v4365
        %4408 = vmatprep.subr.bf16.mxu0 0
        %4409 = vmatpush1.bf16.msra.mxu0 %v4364
        %4410 = vmatprep.subr.bf16.mxu0 0
        %4411 = vmatpush1.bf16.msra.mxu0 %v4363
        %4412 = vmatprep.subr.bf16.mxu0 0
        %4413 = vmatpush1.bf16.msra.mxu0 %v4362
        %4414 = vmatprep.subr.bf16.mxu0 0
        %4415 = vmatpush1.bf16.msra.mxu0 %v4361
        %4416 = vmatprep.subr.bf16.mxu0 0
        %4417 = vmatpush1.bf16.msra.mxu0 %v4360
        %4418 = vmatprep.subr.bf16.mxu0 0
        %4419 = vmatpush2.bf16.msra.mxu0 %v4375
        %4420 = vmatprep.subr.bf16.mxu0 0
        %4421 = vmatpush2.bf16.msra.mxu0 %v4374
        %4422 = vmatprep.subr.bf16.mxu0 0
        %4423 = vmatpush2.bf16.msra.mxu0 %v4373
        %4424 = vmatprep.subr.bf16.mxu0 0
        %4425 = vmatpush2.bf16.msra.mxu0 %v4372
        %4426 = vmatprep.subr.bf16.mxu0 0
        %4427 = vmatpush2.bf16.msra.mxu0 %v4371
        %4428 = vmatprep.subr.bf16.mxu0 0
        %4429 = vmatpush2.bf16.msra.mxu0 %v4370
        %4430 = vmatprep.subr.bf16.mxu0 0
        %4431 = vmatpush2.bf16.msra.mxu0 %v4369
        %4432 = vmatprep.subr.bf16.mxu0 0
        %4433 = vmatpush2.bf16.msra.mxu0 %v4368
        %4434 = vmatprep.mubr.bf16.mxu0 %v4301
        %4435 = vmatmul.mubr.bf16.gmra.mxu0 %v4300
        %v4436 = vpop.f32.mrf.mxu0
        %v4437 = vadd.f32 0.0, %v4436
        %v4438 = vpop.f32.mrf.mxu0
        %v4439 = vpop.f32.mrf.mxu0
        %v4440 = vadd.f32 0.0, %v4439
        %v4441 = vpop.f32.mrf.mxu0
        %4442 = vmatprep.mubr.bf16.mxu0 %v4304
        %4443 = vmatmul.mubr.bf16.gmra.mxu0 %v4303
        %v4444 = vpop.f32.mrf.mxu0
        %v4445 = vadd.f32 0.0, %v4444
        %v4446 = vpop.f32.mrf.mxu0
        %v4447 = vpop.f32.mrf.mxu0
        %v4448 = vadd.f32 0.0, %v4447
        %v4449 = vpop.f32.mrf.mxu0
        %4450 = vmatprep.mubr.bf16.mxu0 %v4307
        %4451 = vmatmul.mubr.bf16.gmra.mxu0 %v4306
        %v4452 = vpop.f32.mrf.mxu0
        %v4453 = vadd.f32 0.0, %v4452
        %v4454 = vpop.f32.mrf.mxu0
        %v4455 = vpop.f32.mrf.mxu0
        %v4456 = vadd.f32 0.0, %v4455
        %v4457 = vpop.f32.mrf.mxu0
        %4458 = vmatprep.mubr.bf16.mxu0 %v4310
        %4459 = vmatmul.mubr.bf16.gmra.mxu0 %v4309
        %v4460 = vpop.f32.mrf.mxu0
        %v4461 = vadd.f32 0.0, %v4460
        %v4462 = vpop.f32.mrf.mxu0
        %v4463 = vpop.f32.mrf.mxu0
        %v4464 = vadd.f32 0.0, %v4463
        %v4465 = vpop.f32.mrf.mxu0
        %4466 = vmatprep.mubr.bf16.mxu0 %v4313
        %4467 = vmatmul.mubr.bf16.gmra.mxu0 %v4312
        %v4468 = vpop.f32.mrf.mxu0
        %v4469 = vadd.f32 0.0, %v4468
        %v4470 = vpop.f32.mrf.mxu0
        %v4471 = vpop.f32.mrf.mxu0
        %v4472 = vadd.f32 0.0, %v4471
        %v4473 = vpop.f32.mrf.mxu0
        %4474 = vmatprep.mubr.bf16.mxu0 %v4316
        %4475 = vmatmul.mubr.bf16.gmra.mxu0 %v4315
        %v4476 = vpop.f32.mrf.mxu0
        %v4477 = vadd.f32 0.0, %v4476
        %v4478 = vpop.f32.mrf.mxu0
        %v4479 = vpop.f32.mrf.mxu0
        %v4480 = vadd.f32 0.0, %v4479
        %v4481 = vpop.f32.mrf.mxu0
        %4482 = vmatprep.mubr.bf16.mxu0 %v4319
        %4483 = vmatmul.mubr.bf16.gmra.mxu0 %v4318
        %v4484 = vpop.f32.mrf.mxu0
        %v4485 = vadd.f32 0.0, %v4484
        %v4486 = vpop.f32.mrf.mxu0
        %v4487 = vpop.f32.mrf.mxu0
        %v4488 = vadd.f32 0.0, %v4487
        %v4489 = vpop.f32.mrf.mxu0
        %4490 = vmatprep.mubr.bf16.mxu0 %v4322
        %4491 = vmatmul.mubr.bf16.gmra.mxu0 %v4321
        %v4492 = vpop.f32.mrf.mxu0
        %v4493 = vadd.f32 0.0, %v4492
        %v4494 = vpop.f32.mrf.mxu0
        %v4495 = vpop.f32.mrf.mxu0
        %v4496 = vadd.f32 0.0, %v4495
        %v4497 = vpop.f32.mrf.mxu0
        %4498 = vdwg.mxu0
        %4499 = vmatprep.subr.bf16.mxu0 0
        %4500 = vmatpush1.bf16.msra.mxu0 0
        %4501 = vmatprep.subr.bf16.mxu0 0
        %4502 = vmatpush1.bf16.msra.mxu0 0
        %4503 = vmatprep.subr.bf16.mxu0 0
        %4504 = vmatpush1.bf16.msra.mxu0 0
        %4505 = vmatprep.subr.bf16.mxu0 0
        %4506 = vmatpush1.bf16.msra.mxu0 0
        %4507 = vmatprep.subr.bf16.mxu0 0
        %4508 = vmatpush1.bf16.msra.mxu0 0
        %4509 = vmatprep.subr.bf16.mxu0 0
        %4510 = vmatpush1.bf16.msra.mxu0 0
        %4511 = vmatprep.subr.bf16.mxu0 0
        %4512 = vmatpush1.bf16.msra.mxu0 %v4377
        %4513 = vmatprep.subr.bf16.mxu0 0
        %4514 = vmatpush1.bf16.msra.mxu0 %v4376
        %4515 = vmatprep.subr.bf16.mxu0 0
        %4516 = vmatpush2.bf16.msra.mxu0 0
        %4517 = vmatprep.subr.bf16.mxu0 0
        %4518 = vmatpush2.bf16.msra.mxu0 0
        %4519 = vmatprep.subr.bf16.mxu0 0
        %4520 = vmatpush2.bf16.msra.mxu0 0
        %4521 = vmatprep.subr.bf16.mxu0 0
        %4522 = vmatpush2.bf16.msra.mxu0 0
        %4523 = vmatprep.subr.bf16.mxu0 0
        %4524 = vmatpush2.bf16.msra.mxu0 0
        %4525 = vmatprep.subr.bf16.mxu0 0
        %4526 = vmatpush2.bf16.msra.mxu0 0
        %4527 = vmatprep.subr.bf16.mxu0 0
        %4528 = vmatpush2.bf16.msra.mxu0 0
        %4529 = vmatprep.subr.bf16.mxu0 0
        %4530 = vmatpush2.bf16.msra.mxu0 0
        %4531 = vmatprep.mubr.bf16.mxu0 0
        %4532 = vmatmul.mubr.bf16.gmra.mxu0 %v4379
        %v4533 = vpop.f32.mrf.mxu0
        %v4534 = vadd.f32 %v4437, %v4533
        %v4535 = vpop.f32.mrf.mxu0
        %v4536 = vpop.f32.mrf.mxu0
        %v4537 = vadd.f32 %v4440, %v4536
        %v4538 = vpop.f32.mrf.mxu0
        %4539 = vmatprep.mubr.bf16.mxu0 0
        %4540 = vmatmul.mubr.bf16.gmra.mxu0 %v4382
        %v4541 = vpop.f32.mrf.mxu0
        %v4542 = vadd.f32 %v4445, %v4541
        %v4543 = vpop.f32.mrf.mxu0
        %v4544 = vpop.f32.mrf.mxu0
        %v4545 = vadd.f32 %v4448, %v4544
        %v4546 = vpop.f32.mrf.mxu0
        %4547 = vmatprep.mubr.bf16.mxu0 0
        %4548 = vmatmul.mubr.bf16.gmra.mxu0 %v4385
        %v4549 = vpop.f32.mrf.mxu0
        %v4550 = vadd.f32 %v4453, %v4549
        %v4551 = vpop.f32.mrf.mxu0
        %v4552 = vpop.f32.mrf.mxu0
        %v4553 = vadd.f32 %v4456, %v4552
        %v4554 = vpop.f32.mrf.mxu0
        %4555 = vmatprep.mubr.bf16.mxu0 0
        %4556 = vmatmul.mubr.bf16.gmra.mxu0 %v4388
        %v4557 = vpop.f32.mrf.mxu0
        %v4558 = vadd.f32 %v4461, %v4557
        %v4559 = vpop.f32.mrf.mxu0
        %v4560 = vpop.f32.mrf.mxu0
        %v4561 = vadd.f32 %v4464, %v4560
        %v4562 = vpop.f32.mrf.mxu0
        %4563 = vmatprep.mubr.bf16.mxu0 0
        %4564 = vmatmul.mubr.bf16.gmra.mxu0 %v4391
        %v4565 = vpop.f32.mrf.mxu0
        %v4566 = vadd.f32 %v4469, %v4565
        %v4567 = vpop.f32.mrf.mxu0
        %v4568 = vpop.f32.mrf.mxu0
        %v4569 = vadd.f32 %v4472, %v4568
        %v4570 = vpop.f32.mrf.mxu0
        %4571 = vmatprep.mubr.bf16.mxu0 0
        %4572 = vmatmul.mubr.bf16.gmra.mxu0 %v4394
        %v4573 = vpop.f32.mrf.mxu0
        %v4574 = vadd.f32 %v4477, %v4573
        %v4575 = vpop.f32.mrf.mxu0
        %v4576 = vpop.f32.mrf.mxu0
        %v4577 = vadd.f32 %v4480, %v4576
        %v4578 = vpop.f32.mrf.mxu0
        %4579 = vmatprep.mubr.bf16.mxu0 0
        %4580 = vmatmul.mubr.bf16.gmra.mxu0 %v4397
        %v4581 = vpop.f32.mrf.mxu0
        %v4582 = vadd.f32 %v4485, %v4581
        %v4583 = vpop.f32.mrf.mxu0
        %v4584 = vpop.f32.mrf.mxu0
        %v4585 = vadd.f32 %v4488, %v4584
        %v4586 = vpop.f32.mrf.mxu0
        %4587 = vmatprep.mubr.bf16.mxu0 0
        %4588 = vmatmul.mubr.bf16.gmra.mxu0 %v4400
        %v4589 = vpop.f32.mrf.mxu0
        %v4590 = vadd.f32 %v4493, %v4589
        %v4591 = vpop.f32.mrf.mxu0
        %v4592 = vpop.f32.mrf.mxu0
        %v4593 = vadd.f32 %v4496, %v4592
        %v4594 = vpop.f32.mrf.mxu0
        %4595 = vdwg.mxu0
        %v4596 = vld [vmem:[%s834] sm:$0x1]
        %v4597 = vlaneseq
        %v4598 = vshrl.u32 %v4597, 7
        %v4599 = vadd.s32 %v4598, 8
        %v4600 = vadd.s32 %v4598, 16
        %v4601 = vadd.s32 %v4598, 24
        %v4602 = vlaneseq
        %v4603 = vshrl.u32 %v4602, 7
        %v4604 = vsub.s32 0, %v4603
        %v4605 = vrot.slane %v4596, %v4604
        %vm4606 = vcmp.eq.s32.totalorder %v4605, %v4598
        %vm4607 = vcmp.eq.s32.totalorder %v4605, %v4599
        %vm4608 = vcmp.eq.s32.totalorder %v4605, %v4600
        %vm4609 = vcmp.eq.s32.totalorder %v4605, %v4601
        %v4610 = vsel %vm4606, 1, 0
        %v4611 = vsel %vm4607, 1, 0
        %v4612 = vsel %vm4608, 1, 0
        %v4613 = vsel %vm4609, 1, 0
        %v4614 = vcvt.s32.f32 %v4610
        %v4615 = vcvt.s32.f32 %v4611
        %v4616 = vcvt.s32.f32 %v4612
        %v4617 = vcvt.s32.f32 %v4613
        %v4618 = vpack.c.bf16 %v4615, %v4614
        %v4619 = vpack.c.bf16 %v4617, %v4616
        %v4620 = vld [vmem:[#allocation3] sm:$0xff]
        %v4621 = vld [vmem:[#allocation3 + $0x8] sm:$0xff]
        %v4622 = vld [vmem:[#allocation3 + $0x10] sm:$0xff]
        %v4623 = vld [vmem:[#allocation3 + $0x18] sm:$0xff]
        %v4624 = vpack.c.bf16 %v4537, %v4534
        %v4625 = vpack.c.bf16 %v4545, %v4542
        %v4626 = vpack.c.bf16 %v4553, %v4550
        %v4627 = vpack.c.bf16 %v4561, %v4558
        %v4628 = vpack.c.bf16 %v4569, %v4566
        %v4629 = vpack.c.bf16 %v4577, %v4574
        %v4630 = vpack.c.bf16 %v4585, %v4582
        %v4631 = vpack.c.bf16 %v4593, %v4590
        %4632 = vmatprep.subr.bf16.mxu0 0
        %4633 = vmatpush1.bf16.msra.mxu0 %v4631
        %4634 = vmatprep.subr.bf16.mxu0 0
        %4635 = vmatpush1.bf16.msra.mxu0 %v4630
        %4636 = vmatprep.subr.bf16.mxu0 0
        %4637 = vmatpush1.bf16.msra.mxu0 %v4629
        %4638 = vmatprep.subr.bf16.mxu0 0
        %4639 = vmatpush1.bf16.msra.mxu0 %v4628
        %4640 = vmatprep.subr.bf16.mxu0 0
        %4641 = vmatpush1.bf16.msra.mxu0 %v4627
        %4642 = vmatprep.subr.bf16.mxu0 0
        %4643 = vmatpush1.bf16.msra.mxu0 %v4626
        %4644 = vmatprep.subr.bf16.mxu0 0
        %4645 = vmatpush1.bf16.msra.mxu0 %v4625
        %4646 = vmatprep.subr.bf16.mxu0 0
        %4647 = vmatpush1.bf16.msra.mxu0 %v4624
        %4648 = vmatprep.subr.bf16.mxu0 0
        %4649 = vmatpush2.bf16.msra.mxu0 0
        %4650 = vmatprep.subr.bf16.mxu0 0
        %4651 = vmatpush2.bf16.msra.mxu0 0
        %4652 = vmatprep.subr.bf16.mxu0 0
        %4653 = vmatpush2.bf16.msra.mxu0 0
        %4654 = vmatprep.subr.bf16.mxu0 0
        %4655 = vmatpush2.bf16.msra.mxu0 0
        %4656 = vmatprep.subr.bf16.mxu0 0
        %4657 = vmatpush2.bf16.msra.mxu0 0
        %4658 = vmatprep.subr.bf16.mxu0 0
        %4659 = vmatpush2.bf16.msra.mxu0 0
        %4660 = vmatprep.subr.bf16.mxu0 0
        %4661 = vmatpush2.bf16.msra.mxu0 0
        %4662 = vmatprep.subr.bf16.mxu0 0
        %4663 = vmatpush2.bf16.msra.mxu0 0
        %4664 = vmatprep.mubr.bf16.mxu0 0
        %4665 = vmatmul.mubr.bf16.gmra.mxu0 %v4618
        %v4666 = vpop.f32.mrf.mxu0
        %v4667 = vadd.f32 0.0, %v4666
        %v4668 = vpop.f32.mrf.mxu0
        %v4669 = vpop.f32.mrf.mxu0
        %v4670 = vadd.f32 0.0, %v4669
        %v4671 = vpop.f32.mrf.mxu0
        %4672 = vmatprep.mubr.bf16.mxu0 0
        %4673 = vmatmul.mubr.bf16.gmra.mxu0 %v4619
        %v4674 = vpop.f32.mrf.mxu0
        %v4675 = vadd.f32 0.0, %v4674
        %v4676 = vpop.f32.mrf.mxu0
        %v4677 = vpop.f32.mrf.mxu0
        %v4678 = vadd.f32 0.0, %v4677
        %v4679 = vpop.f32.mrf.mxu0
        %4680 = vdwg.mxu0
        %v4681 = vadd.f32 %v4620, %v4667
        %v4682 = vadd.f32 %v4621, %v4670
        %v4683 = vadd.f32 %v4622, %v4675
        %v4684 = vadd.f32 %v4623, %v4678
        %4685 = vst.msk [vmem:[#allocation3] sm:$0xff] %vm2393, %v4681
        %4686 = vst.msk [vmem:[#allocation3 + $0x8] sm:$0xff] %vm2393, %v4682
        %4687 = vst.msk [vmem:[#allocation3 + $0x10] sm:$0xff] %vm2393, %v4683
        %4688 = vst.msk [vmem:[#allocation3 + $0x18] sm:$0xff] %vm2393, %v4684
        %p4689 = scmp.eq.s32.totalorder %s39, 1
        // Predicated region
        $region117: #{tpu_custom_call.1} parent=107 // pred_check
          %p4690 = pneg %p4689
        $region118: #{tpu_custom_call.1} parent=107 // pred_check_branch
          %4692 = sbr.rel (%p4690) target = $region120
        $region119: #{tpu_custom_call.1} parent=107 // pred_region
          %v4693 = vld [vmem:[#allocation2] sm:$0xff]
          %v4694 = vld [vmem:[#allocation2 + $0x8] sm:$0xff]
          %v4695 = vld [vmem:[#allocation2 + $0x10] sm:$0xff]
          %v4696 = vld [vmem:[#allocation2 + $0x18] sm:$0xff]
          %v4697 = vld [vmem:[%s860] sm:$0xff]
          %v4698 = vld [vmem:[%s860 + $0x8] sm:$0xff]
          %v4699 = vld [vmem:[%s860 + $0x10] sm:$0xff]
          %v4700 = vld [vmem:[%s860 + $0x18] sm:$0xff]
          %v4701 = vld [vmem:[%s863] sm:$0x1]
          %v4703 = vlaneseq
          %v4704 = vshrl.u32 %v4703, 7
          %v4705 = vsub.s32 0, %v4704
          %v4706 = vrot.slane %v4701, %v4705
          %v4709 = vsel %vm2393, %v4693, 0
          %v4712 = vsel %vm2393, %v4694, 0
          %v4715 = vsel %vm2393, %v4695, 0
          %v4718 = vsel %vm2393, %v4696, 0
          %4720 = vmatprep.subr.mxu0 0.0
          %4721 = vmatpush1.msra.mxu0 0.0
          %4722 = vmatprep.subr.mxu0 0.0
          %4723 = vmatpush1.msra.mxu0 0.0
          %4724 = vmatprep.subr.mxu0 0.0
          %4725 = vmatpush1.msra.mxu0 0.0
          %4726 = vmatprep.subr.mxu0 0.0
          %4727 = vmatpush1.msra.mxu0 0.0
          %4728 = vmatprep.subr.mxu0 0.0
          %4729 = vmatpush1.msra.mxu0 0.0
          %4730 = vmatprep.subr.mxu0 0.0
          %4731 = vmatpush1.msra.mxu0 0.0
          %4732 = vmatprep.subr.mxu0 0.0
          %4733 = vmatpush1.msra.mxu0 0.0
          %4734 = vmatprep.subr.mxu0 0.0
          %4735 = vmatpush1.msra.mxu0 0.0
          %4736 = vmatprep.subr.mxu0 0.0
          %4737 = vmatpush1.msra.mxu0 0.0
          %4738 = vmatprep.subr.mxu0 0.0
          %4739 = vmatpush1.msra.mxu0 0.0
          %4740 = vmatprep.subr.mxu0 0.0
          %4741 = vmatpush1.msra.mxu0 0.0
          %4742 = vmatprep.subr.mxu0 0.0
          %4743 = vmatpush1.msra.mxu0 0.0
          %4744 = vmatprep.subr.mxu0 0.0
          %4745 = vmatpush1.msra.mxu0 %v4700
          %4746 = vmatprep.subr.mxu0 0.0
          %4747 = vmatpush1.msra.mxu0 %v4699
          %4748 = vmatprep.subr.mxu0 0.0
          %4749 = vmatpush1.msra.mxu0 %v4698
          %4750 = vmatprep.subr.mxu0 0.0
          %4751 = vmatpush1.msra.mxu0 %v4697
          %4752 = vmatprep.subr.mxu0 0.0
          %4753 = vmatpush2.msra.mxu0 0.0
          %4754 = vmatprep.subr.mxu0 0.0
          %4755 = vmatpush2.msra.mxu0 0.0
          %4756 = vmatprep.subr.mxu0 0.0
          %4757 = vmatpush2.msra.mxu0 0.0
          %4758 = vmatprep.subr.mxu0 0.0
          %4759 = vmatpush2.msra.mxu0 0.0
          %4760 = vmatprep.subr.mxu0 0.0
          %4761 = vmatpush2.msra.mxu0 0.0
          %4762 = vmatprep.subr.mxu0 0.0
          %4763 = vmatpush2.msra.mxu0 0.0
          %4764 = vmatprep.subr.mxu0 0.0
          %4765 = vmatpush2.msra.mxu0 0.0
          %4766 = vmatprep.subr.mxu0 0.0
          %4767 = vmatpush2.msra.mxu0 0.0
          %4768 = vmatprep.subr.mxu0 0.0
          %4769 = vmatpush2.msra.mxu0 0.0
          %4770 = vmatprep.subr.mxu0 0.0
          %4771 = vmatpush2.msra.mxu0 0.0
          %4772 = vmatprep.subr.mxu0 0.0
          %4773 = vmatpush2.msra.mxu0 0.0
          %4774 = vmatprep.subr.mxu0 0.0
          %4775 = vmatpush2.msra.mxu0 0.0
          %4776 = vmatprep.subr.mxu0 0.0
          %4777 = vmatpush2.msra.mxu0 0.0
          %4778 = vmatprep.subr.mxu0 0.0
          %4779 = vmatpush2.msra.mxu0 0.0
          %4780 = vmatprep.subr.mxu0 0.0
          %4781 = vmatpush2.msra.mxu0 0.0
          %4782 = vmatprep.subr.mxu0 0.0
          %4783 = vmatpush2.msra.mxu0 0.0
          %4784 = vmatprep.mubr.f32.mxu0 0.0
          %4785 = vmatmul.mubr.f32.gmra.mxu0 %v4709
          %v4786 = vpop.f32.mrf.mxu0
          %v4787 = vadd.f32 %v4706, %v4786
          %v4788 = vpop.f32.mrf.mxu0
          %4789 = vmatprep.mubr.f32.mxu0 0.0
          %4790 = vmatmul.mubr.f32.gmra.mxu0 %v4712
          %v4791 = vpop.f32.mrf.mxu0
          %v4792 = vadd.f32 %v4706, %v4791
          %v4793 = vpop.f32.mrf.mxu0
          %4794 = vmatprep.mubr.f32.mxu0 0.0
          %4795 = vmatmul.mubr.f32.gmra.mxu0 %v4715
          %v4796 = vpop.f32.mrf.mxu0
          %v4797 = vadd.f32 %v4706, %v4796
          %v4798 = vpop.f32.mrf.mxu0
          %4799 = vmatprep.mubr.f32.mxu0 0.0
          %4800 = vmatmul.mubr.f32.gmra.mxu0 %v4718
          %v4801 = vpop.f32.mrf.mxu0
          %v4802 = vadd.f32 %v4706, %v4801
          %v4803 = vpop.f32.mrf.mxu0
          %4804 = vdwg.mxu0
          %v4805 = vld [vmem:[#allocation3] sm:$0xff]
          %v4806 = vld [vmem:[#allocation3 + $0x8] sm:$0xff]
          %v4807 = vld [vmem:[#allocation3 + $0x10] sm:$0xff]
          %v4808 = vld [vmem:[#allocation3 + $0x18] sm:$0xff]
          %v4809 = vmul.f32 %v4805, 0.1
          %v4810 = vmul.f32 %v4806, 0.1
          %v4811 = vmul.f32 %v4807, 0.1
          %v4812 = vmul.f32 %v4808, 0.1
          %v4813 = vadd.f32 %v4787, %v4809
          %v4814 = vadd.f32 %v4792, %v4810
          %v4815 = vadd.f32 %v4797, %v4811
          %v4816 = vadd.f32 %v4802, %v4812
          %p4817 = scmp.gt.s32.totalorder %s38, 0
          %s4818 = scalar_select %p4817, 1, 0
          %s4819 = scvt.s32.f32 %s4818
          %v4820 = vstv %s4819
          %v4821 = vmul.f32 %v4820, %v4693
          %v4822 = vmul.f32 %v4820, %v4694
          %v4823 = vmul.f32 %v4820, %v4695
          %v4824 = vmul.f32 %v4820, %v4696
          %v4825 = vadd.f32 %v4813, %v4821
          %v4826 = vadd.f32 %v4814, %v4822
          %v4827 = vadd.f32 %v4815, %v4823
          %v4828 = vadd.f32 %v4816, %v4824
          %4829 = vst.msk [vmem:[#allocation2] sm:$0xff] %vm2393, %v4825
          %4830 = vst.msk [vmem:[#allocation2 + $0x8] sm:$0xff] %vm2393, %v4826
          %4831 = vst.msk [vmem:[#allocation2 + $0x10] sm:$0xff] %vm2393, %v4827
          %4832 = vst.msk [vmem:[#allocation2 + $0x18] sm:$0xff] %vm2393, %v4828
        $region120: #{tpu_custom_call.1} parent=107 // pred_fallthru
          _
        %p4833 = scmp.eq.s32.totalorder %s38, 1
        %p4834 = pnand %p4833, %p4689
        %p4835 = pneg %p4834
        // Predicated region
        $region121: #{tpu_custom_call.1} parent=107 // pred_check
          _
        $region122: #{tpu_custom_call.1} parent=107 // pred_check_branch
          %4837 = sbr.rel (%p4834) target = $region124
        $region123: #{tpu_custom_call.1} parent=107 // pred_region
          %v4838 = vld [vmem:[#allocation2] sm:$0xff]
          %v4839 = vld [vmem:[#allocation2 + $0x8] sm:$0xff]
          %v4840 = vld [vmem:[#allocation2 + $0x10] sm:$0xff]
          %v4841 = vld [vmem:[#allocation2 + $0x18] sm:$0xff]
          %v4842 = vld [vmem:[%s15] sm:$0xff]
          %v4843 = vld [vmem:[%s15 + $0x8] sm:$0xff]
          %v4844 = vld [vmem:[%s15 + $0x10] sm:$0xff]
          %v4845 = vld [vmem:[%s15 + $0x18] sm:$0xff]
          %v4846 = vld [vmem:[%s16] sm:$0x1]
          %v4848 = vlaneseq
          %v4849 = vshrl.u32 %v4848, 7
          %v4850 = vsub.s32 0, %v4849
          %v4851 = vrot.slane %v4846, %v4850
          %v4854 = vsel %vm2393, %v4838, 0
          %v4857 = vsel %vm2393, %v4839, 0
          %v4860 = vsel %vm2393, %v4840, 0
          %v4863 = vsel %vm2393, %v4841, 0
          %4865 = vmatprep.subr.mxu0 0.0
          %4866 = vmatpush1.msra.mxu0 0.0
          %4867 = vmatprep.subr.mxu0 0.0
          %4868 = vmatpush1.msra.mxu0 0.0
          %4869 = vmatprep.subr.mxu0 0.0
          %4870 = vmatpush1.msra.mxu0 0.0
          %4871 = vmatprep.subr.mxu0 0.0
          %4872 = vmatpush1.msra.mxu0 0.0
          %4873 = vmatprep.subr.mxu0 0.0
          %4874 = vmatpush1.msra.mxu0 0.0
          %4875 = vmatprep.subr.mxu0 0.0
          %4876 = vmatpush1.msra.mxu0 0.0
          %4877 = vmatprep.subr.mxu0 0.0
          %4878 = vmatpush1.msra.mxu0 0.0
          %4879 = vmatprep.subr.mxu0 0.0
          %4880 = vmatpush1.msra.mxu0 0.0
          %4881 = vmatprep.subr.mxu0 0.0
          %4882 = vmatpush1.msra.mxu0 0.0
          %4883 = vmatprep.subr.mxu0 0.0
          %4884 = vmatpush1.msra.mxu0 0.0
          %4885 = vmatprep.subr.mxu0 0.0
          %4886 = vmatpush1.msra.mxu0 0.0
          %4887 = vmatprep.subr.mxu0 0.0
          %4888 = vmatpush1.msra.mxu0 0.0
          %4889 = vmatprep.subr.mxu0 0.0
          %4890 = vmatpush1.msra.mxu0 %v4845
          %4891 = vmatprep.subr.mxu0 0.0
          %4892 = vmatpush1.msra.mxu0 %v4844
          %4893 = vmatprep.subr.mxu0 0.0
          %4894 = vmatpush1.msra.mxu0 %v4843
          %4895 = vmatprep.subr.mxu0 0.0
          %4896 = vmatpush1.msra.mxu0 %v4842
          %4897 = vmatprep.subr.mxu0 0.0
          %4898 = vmatpush2.msra.mxu0 0.0
          %4899 = vmatprep.subr.mxu0 0.0
          %4900 = vmatpush2.msra.mxu0 0.0
          %4901 = vmatprep.subr.mxu0 0.0
          %4902 = vmatpush2.msra.mxu0 0.0
          %4903 = vmatprep.subr.mxu0 0.0
          %4904 = vmatpush2.msra.mxu0 0.0
          %4905 = vmatprep.subr.mxu0 0.0
          %4906 = vmatpush2.msra.mxu0 0.0
          %4907 = vmatprep.subr.mxu0 0.0
          %4908 = vmatpush2.msra.mxu0 0.0
          %4909 = vmatprep.subr.mxu0 0.0
          %4910 = vmatpush2.msra.mxu0 0.0
          %4911 = vmatprep.subr.mxu0 0.0
          %4912 = vmatpush2.msra.mxu0 0.0
          %4913 = vmatprep.subr.mxu0 0.0
          %4914 = vmatpush2.msra.mxu0 0.0
          %4915 = vmatprep.subr.mxu0 0.0
          %4916 = vmatpush2.msra.mxu0 0.0
          %4917 = vmatprep.subr.mxu0 0.0
          %4918 = vmatpush2.msra.mxu0 0.0
          %4919 = vmatprep.subr.mxu0 0.0
          %4920 = vmatpush2.msra.mxu0 0.0
          %4921 = vmatprep.subr.mxu0 0.0
          %4922 = vmatpush2.msra.mxu0 0.0
          %4923 = vmatprep.subr.mxu0 0.0
          %4924 = vmatpush2.msra.mxu0 0.0
          %4925 = vmatprep.subr.mxu0 0.0
          %4926 = vmatpush2.msra.mxu0 0.0
          %4927 = vmatprep.subr.mxu0 0.0
          %4928 = vmatpush2.msra.mxu0 0.0
          %4929 = vmatprep.mubr.f32.mxu0 0.0
          %4930 = vmatmul.mubr.f32.gmra.mxu0 %v4854
          %v4931 = vpop.f32.mrf.mxu0
          %v4932 = vadd.f32 %v4851, %v4931
          %v4933 = vpop.f32.mrf.mxu0
          %4934 = vmatprep.mubr.f32.mxu0 0.0
          %4935 = vmatmul.mubr.f32.gmra.mxu0 %v4857
          %v4936 = vpop.f32.mrf.mxu0
          %v4937 = vadd.f32 %v4851, %v4936
          %v4938 = vpop.f32.mrf.mxu0
          %4939 = vmatprep.mubr.f32.mxu0 0.0
          %4940 = vmatmul.mubr.f32.gmra.mxu0 %v4860
          %v4941 = vpop.f32.mrf.mxu0
          %v4942 = vadd.f32 %v4851, %v4941
          %v4943 = vpop.f32.mrf.mxu0
          %4944 = vmatprep.mubr.f32.mxu0 0.0
          %4945 = vmatmul.mubr.f32.gmra.mxu0 %v4863
          %v4946 = vpop.f32.mrf.mxu0
          %v4947 = vadd.f32 %v4851, %v4946
          %v4948 = vpop.f32.mrf.mxu0
          %4949 = vdwg.mxu0
          %v4950 = vxor.u32 %v4932, 2147483648
          %v4951 = vxor.u32 %v4937, 2147483648
          %v4952 = vxor.u32 %v4942, 2147483648
          %v4953 = vxor.u32 %v4947, 2147483648
          %v4954 = vmul.f32 %v4950, 1.442695
          %v4955 = vpow.pop %v4954
          %v4956 = vmul.f32 %v4951, 1.442695
          %v4957 = vpow.pop %v4956
          %v4958 = vmul.f32 %v4952, 1.442695
          %v4959 = vpow.pop %v4958
          %v4960 = vmul.f32 %v4953, 1.442695
          %v4961 = vpow.pop %v4960
          %v4962 = vadd.f32 %v4955, 1.0
          %v4963 = vadd.f32 %v4957, 1.0
          %v4964 = vadd.f32 %v4959, 1.0
          %v4965 = vadd.f32 %v4961, 1.0
          %v4966 = vrcp.pop %v4962
          %v4967 = vmul.f32 1.0, %v4966
          %v4968 = vrcp.pop %v4963
          %v4969 = vmul.f32 1.0, %v4968
          %v4970 = vrcp.pop %v4964
          %v4971 = vmul.f32 1.0, %v4970
          %v4972 = vrcp.pop %v4965
          %v4973 = vmul.f32 1.0, %v4972
          %v4974 = vmul.f32 %v4932, %v4967
          %v4975 = vmul.f32 %v4937, %v4969
          %v4976 = vmul.f32 %v4942, %v4971
          %v4977 = vmul.f32 %v4947, %v4973
          %v4978 = vld [vmem:[%s17] sm:$0xff]
          %v4979 = vld [vmem:[%s17 + $0x8] sm:$0xff]
          %v4980 = vld [vmem:[%s17 + $0x10] sm:$0xff]
          %v4981 = vld [vmem:[%s17 + $0x18] sm:$0xff]
          %v4982 = vld [vmem:[%s18] sm:$0x1]
          %v4984 = vlaneseq
          %v4985 = vshrl.u32 %v4984, 7
          %v4986 = vsub.s32 0, %v4985
          %v4987 = vrot.slane %v4982, %v4986
          %v4990 = vsel %vm2393, %v4974, 0
          %v4993 = vsel %vm2393, %v4975, 0
          %v4996 = vsel %vm2393, %v4976, 0
          %v4999 = vsel %vm2393, %v4977, 0
          %5001 = vmatprep.subr.mxu0 0.0
          %5002 = vmatpush1.msra.mxu0 0.0
          %5003 = vmatprep.subr.mxu0 0.0
          %5004 = vmatpush1.msra.mxu0 0.0
          %5005 = vmatprep.subr.mxu0 0.0
          %5006 = vmatpush1.msra.mxu0 0.0
          %5007 = vmatprep.subr.mxu0 0.0
          %5008 = vmatpush1.msra.mxu0 0.0
          %5009 = vmatprep.subr.mxu0 0.0
          %5010 = vmatpush1.msra.mxu0 0.0
          %5011 = vmatprep.subr.mxu0 0.0
          %5012 = vmatpush1.msra.mxu0 0.0
          %5013 = vmatprep.subr.mxu0 0.0
          %5014 = vmatpush1.msra.mxu0 0.0
          %5015 = vmatprep.subr.mxu0 0.0
          %5016 = vmatpush1.msra.mxu0 0.0
          %5017 = vmatprep.subr.mxu0 0.0
          %5018 = vmatpush1.msra.mxu0 0.0
          %5019 = vmatprep.subr.mxu0 0.0
          %5020 = vmatpush1.msra.mxu0 0.0
          %5021 = vmatprep.subr.mxu0 0.0
          %5022 = vmatpush1.msra.mxu0 0.0
          %5023 = vmatprep.subr.mxu0 0.0
          %5024 = vmatpush1.msra.mxu0 0.0
          %5025 = vmatprep.subr.mxu0 0.0
          %5026 = vmatpush1.msra.mxu0 %v4981
          %5027 = vmatprep.subr.mxu0 0.0
          %5028 = vmatpush1.msra.mxu0 %v4980
          %5029 = vmatprep.subr.mxu0 0.0
          %5030 = vmatpush1.msra.mxu0 %v4979
          %5031 = vmatprep.subr.mxu0 0.0
          %5032 = vmatpush1.msra.mxu0 %v4978
          %5033 = vmatprep.subr.mxu0 0.0
          %5034 = vmatpush2.msra.mxu0 0.0
          %5035 = vmatprep.subr.mxu0 0.0
          %5036 = vmatpush2.msra.mxu0 0.0
          %5037 = vmatprep.subr.mxu0 0.0
          %5038 = vmatpush2.msra.mxu0 0.0
          %5039 = vmatprep.subr.mxu0 0.0
          %5040 = vmatpush2.msra.mxu0 0.0
          %5041 = vmatprep.subr.mxu0 0.0
          %5042 = vmatpush2.msra.mxu0 0.0
          %5043 = vmatprep.subr.mxu0 0.0
          %5044 = vmatpush2.msra.mxu0 0.0
          %5045 = vmatprep.subr.mxu0 0.0
          %5046 = vmatpush2.msra.mxu0 0.0
          %5047 = vmatprep.subr.mxu0 0.0
          %5048 = vmatpush2.msra.mxu0 0.0
          %5049 = vmatprep.subr.mxu0 0.0
          %5050 = vmatpush2.msra.mxu0 0.0
          %5051 = vmatprep.subr.mxu0 0.0
          %5052 = vmatpush2.msra.mxu0 0.0
          %5053 = vmatprep.subr.mxu0 0.0
          %5054 = vmatpush2.msra.mxu0 0.0
          %5055 = vmatprep.subr.mxu0 0.0
          %5056 = vmatpush2.msra.mxu0 0.0
          %5057 = vmatprep.subr.mxu0 0.0
          %5058 = vmatpush2.msra.mxu0 0.0
          %5059 = vmatprep.subr.mxu0 0.0
          %5060 = vmatpush2.msra.mxu0 0.0
          %5061 = vmatprep.subr.mxu0 0.0
          %5062 = vmatpush2.msra.mxu0 0.0
          %5063 = vmatprep.subr.mxu0 0.0
          %5064 = vmatpush2.msra.mxu0 0.0
          %5065 = vmatprep.mubr.f32.mxu0 0.0
          %5066 = vmatmul.mubr.f32.gmra.mxu0 %v4990
          %v5067 = vpop.f32.mrf.mxu0
          %v5068 = vadd.f32 %v4987, %v5067
          %v5069 = vpop.f32.mrf.mxu0
          %5070 = vmatprep.mubr.f32.mxu0 0.0
          %5071 = vmatmul.mubr.f32.gmra.mxu0 %v4993
          %v5072 = vpop.f32.mrf.mxu0
          %v5073 = vadd.f32 %v4987, %v5072
          %v5074 = vpop.f32.mrf.mxu0
          %5075 = vmatprep.mubr.f32.mxu0 0.0
          %5076 = vmatmul.mubr.f32.gmra.mxu0 %v4996
          %v5077 = vpop.f32.mrf.mxu0
          %v5078 = vadd.f32 %v4987, %v5077
          %v5079 = vpop.f32.mrf.mxu0
          %5080 = vmatprep.mubr.f32.mxu0 0.0
          %5081 = vmatmul.mubr.f32.gmra.mxu0 %v4999
          %v5082 = vpop.f32.mrf.mxu0
          %v5083 = vadd.f32 %v4987, %v5082
          %v5084 = vpop.f32.mrf.mxu0
          %5085 = vdwg.mxu0
          %v5086 = vld [vmem:[%s7] sm:$0x1]
          %v5087 = vlaneseq
          %v5088 = vshrl.u32 %v5087, 7
          %v5089 = vsub.s32 0, %v5088
          %v5090 = vrot.slane %v5086, %v5089
          %vm5091 = vcmp.eq.s32.totalorder %v5090, %v4598
          %v5092 = vsel %vm5091, 1, 0
          %v5093 = vcvt.s32.f32 %v5092
          %v5095 = vsel %vm2393, %v5093, 0
          %5097 = vmatprep.subr.mxu0 0.0
          %5098 = vmatpush1.msra.mxu0 0.0
          %5099 = vmatprep.subr.mxu0 0.0
          %5100 = vmatpush1.msra.mxu0 0.0
          %5101 = vmatprep.subr.mxu0 0.0
          %5102 = vmatpush1.msra.mxu0 0.0
          %5103 = vmatprep.subr.mxu0 0.0
          %5104 = vmatpush1.msra.mxu0 0.0
          %5105 = vmatprep.subr.mxu0 0.0
          %5106 = vmatpush1.msra.mxu0 0.0
          %5107 = vmatprep.subr.mxu0 0.0
          %5108 = vmatpush1.msra.mxu0 0.0
          %5109 = vmatprep.subr.mxu0 0.0
          %5110 = vmatpush1.msra.mxu0 0.0
          %5111 = vmatprep.subr.mxu0 0.0
          %5112 = vmatpush1.msra.mxu0 0.0
          %5113 = vmatprep.subr.mxu0 0.0
          %5114 = vmatpush1.msra.mxu0 0.0
          %5115 = vmatprep.subr.mxu0 0.0
          %5116 = vmatpush1.msra.mxu0 0.0
          %5117 = vmatprep.subr.mxu0 0.0
          %5118 = vmatpush1.msra.mxu0 0.0
          %5119 = vmatprep.subr.mxu0 0.0
          %5120 = vmatpush1.msra.mxu0 0.0
          %5121 = vmatprep.subr.mxu0 0.0
          %5122 = vmatpush1.msra.mxu0 %v5083
          %5123 = vmatprep.subr.mxu0 0.0
          %5124 = vmatpush1.msra.mxu0 %v5078
          %5125 = vmatprep.subr.mxu0 0.0
          %5126 = vmatpush1.msra.mxu0 %v5073
          %5127 = vmatprep.subr.mxu0 0.0
          %5128 = vmatpush1.msra.mxu0 %v5068
          %5129 = vmatprep.subr.mxu0 0.0
          %5130 = vmatpush2.msra.mxu0 0.0
          %5131 = vmatprep.subr.mxu0 0.0
          %5132 = vmatpush2.msra.mxu0 0.0
          %5133 = vmatprep.subr.mxu0 0.0
          %5134 = vmatpush2.msra.mxu0 0.0
          %5135 = vmatprep.subr.mxu0 0.0
          %5136 = vmatpush2.msra.mxu0 0.0
          %5137 = vmatprep.subr.mxu0 0.0
          %5138 = vmatpush2.msra.mxu0 0.0
          %5139 = vmatprep.subr.mxu0 0.0
          %5140 = vmatpush2.msra.mxu0 0.0
          %5141 = vmatprep.subr.mxu0 0.0
          %5142 = vmatpush2.msra.mxu0 0.0
          %5143 = vmatprep.subr.mxu0 0.0
          %5144 = vmatpush2.msra.mxu0 0.0
          %5145 = vmatprep.subr.mxu0 0.0
          %5146 = vmatpush2.msra.mxu0 0.0
          %5147 = vmatprep.subr.mxu0 0.0
          %5148 = vmatpush2.msra.mxu0 0.0
          %5149 = vmatprep.subr.mxu0 0.0
          %5150 = vmatpush2.msra.mxu0 0.0
          %5151 = vmatprep.subr.mxu0 0.0
          %5152 = vmatpush2.msra.mxu0 0.0
          %5153 = vmatprep.subr.mxu0 0.0
          %5154 = vmatpush2.msra.mxu0 0.0
          %5155 = vmatprep.subr.mxu0 0.0
          %5156 = vmatpush2.msra.mxu0 0.0
          %5157 = vmatprep.subr.mxu0 0.0
          %5158 = vmatpush2.msra.mxu0 0.0
          %5159 = vmatprep.subr.mxu0 0.0
          %5160 = vmatpush2.msra.mxu0 0.0
          %5161 = vmatprep.mubr.f32.mxu0 0.0
          %5162 = vmatmul.mubr.f32.gmra.mxu0 %v5095
          %v5163 = vpop.f32.mrf.mxu0
          %v5164 = vadd.f32 0.0, %v5163
          %v5165 = vpop.f32.mrf.mxu0
          %5166 = vdwg.mxu0
          %vm5167 = vcmask 254976
          %v5168 = vsel %vm5167, %v5093, 0.0
          %5169 = vadd.xlane.f32.xlu0 %v5168
          %v5170 = vpop.xlane.xlu0 %5169
          %v5171 = vmax.f32 %v5170, 1.0
          %v5172 = vrcp.pop %v5171
          %v5173 = vmul.f32 %v5164, %v5172
          %v5174 = vld [vmem:[%s19] sm:$0xff]
          %v5175 = vld [vmem:[%s19 + $0x8] sm:$0xff]
          %v5176 = vld [vmem:[%s19 + $0x10] sm:$0x1f]
          %v5177 = vld [vmem:[%s20] sm:$0x1]
          %v5179 = vlaneseq
          %v5180 = vshrl.u32 %v5179, 7
          %v5181 = vsub.s32 0, %v5180
          %v5182 = vrot.slane %v5177, %v5181
          %vm5184 = vcmask 171008
          %v5186 = vsel %vm5184, %v5173, 0
          %vm5188 = vcmask 1044480
          %v5190 = vsel %vm5188, %v5176, 0
          %5192 = vmatprep.subr.mxu0 0.0
          %5193 = vmatpush1.msra.mxu0 0.0
          %5194 = vmatprep.subr.mxu0 0.0
          %5195 = vmatpush1.msra.mxu0 0.0
          %5196 = vmatprep.subr.mxu0 0.0
          %5197 = vmatpush1.msra.mxu0 0.0
          %5198 = vmatprep.subr.mxu0 0.0
          %5199 = vmatpush1.msra.mxu0 0.0
          %5200 = vmatprep.subr.mxu0 0.0
          %5201 = vmatpush1.msra.mxu0 0.0
          %5202 = vmatprep.subr.mxu0 0.0
          %5203 = vmatpush1.msra.mxu0 0.0
          %5204 = vmatprep.subr.mxu0 0.0
          %5205 = vmatpush1.msra.mxu0 0.0
          %5206 = vmatprep.subr.mxu0 0.0
          %5207 = vmatpush1.msra.mxu0 0.0
          %5208 = vmatprep.subr.mxu0 0.0
          %5209 = vmatpush1.msra.mxu0 0.0
          %5210 = vmatprep.subr.mxu0 0.0
          %5211 = vmatpush1.msra.mxu0 0.0
          %5212 = vmatprep.subr.mxu0 0.0
          %5213 = vmatpush1.msra.mxu0 0.0
          %5214 = vmatprep.subr.mxu0 0.0
          %5215 = vmatpush1.msra.mxu0 0.0
          %5216 = vmatprep.subr.mxu0 0.0
          %5217 = vmatpush1.msra.mxu0 0.0
          %5218 = vmatprep.subr.mxu0 0.0
          %5219 = vmatpush1.msra.mxu0 %v5190
          %5220 = vmatprep.subr.mxu0 0.0
          %5221 = vmatpush1.msra.mxu0 %v5175
          %5222 = vmatprep.subr.mxu0 0.0
          %5223 = vmatpush1.msra.mxu0 %v5174
          %5224 = vmatprep.subr.mxu0 0.0
          %5225 = vmatpush2.msra.mxu0 0.0
          %5226 = vmatprep.subr.mxu0 0.0
          %5227 = vmatpush2.msra.mxu0 0.0
          %5228 = vmatprep.subr.mxu0 0.0
          %5229 = vmatpush2.msra.mxu0 0.0
          %5230 = vmatprep.subr.mxu0 0.0
          %5231 = vmatpush2.msra.mxu0 0.0
          %5232 = vmatprep.subr.mxu0 0.0
          %5233 = vmatpush2.msra.mxu0 0.0
          %5234 = vmatprep.subr.mxu0 0.0
          %5235 = vmatpush2.msra.mxu0 0.0
          %5236 = vmatprep.subr.mxu0 0.0
          %5237 = vmatpush2.msra.mxu0 0.0
          %5238 = vmatprep.subr.mxu0 0.0
          %5239 = vmatpush2.msra.mxu0 0.0
          %5240 = vmatprep.subr.mxu0 0.0
          %5241 = vmatpush2.msra.mxu0 0.0
          %5242 = vmatprep.subr.mxu0 0.0
          %5243 = vmatpush2.msra.mxu0 0.0
          %5244 = vmatprep.subr.mxu0 0.0
          %5245 = vmatpush2.msra.mxu0 0.0
          %5246 = vmatprep.subr.mxu0 0.0
          %5247 = vmatpush2.msra.mxu0 0.0
          %5248 = vmatprep.subr.mxu0 0.0
          %5249 = vmatpush2.msra.mxu0 0.0
          %5250 = vmatprep.subr.mxu0 0.0
          %5251 = vmatpush2.msra.mxu0 0.0
          %5252 = vmatprep.subr.mxu0 0.0
          %5253 = vmatpush2.msra.mxu0 0.0
          %5254 = vmatprep.subr.mxu0 0.0
          %5255 = vmatpush2.msra.mxu0 0.0
          %5256 = vmatprep.mubr.f32.mxu0 0.0
          %5257 = vmatmul.mubr.f32.gmra.mxu0 %v5186
          %v5258 = vpop.f32.mrf.mxu0
          %v5259 = vadd.f32 %v5182, %v5258
          %v5260 = vpop.f32.mrf.mxu0
          %5261 = vdwg.mxu0
          %v5262 = vld [vmem:[%s21] sm:$0xff]
          %v5263 = vld [vmem:[%s21 + $0x8] sm:$0xff]
          %v5264 = vld [vmem:[%s21 + $0x10] sm:$0x1f]
          %v5266 = vsel %vm5184, %v5259, 0
          %v5269 = vsel %vm5188, %v5264, 0
          %5271 = vmatprep.subr.mxu0 0.0
          %5272 = vmatpush1.msra.mxu0 0.0
          %5273 = vmatprep.subr.mxu0 0.0
          %5274 = vmatpush1.msra.mxu0 0.0
          %5275 = vmatprep.subr.mxu0 0.0
          %5276 = vmatpush1.msra.mxu0 0.0
          %5277 = vmatprep.subr.mxu0 0.0
          %5278 = vmatpush1.msra.mxu0 0.0
          %5279 = vmatprep.subr.mxu0 0.0
          %5280 = vmatpush1.msra.mxu0 0.0
          %5281 = vmatprep.subr.mxu0 0.0
          %5282 = vmatpush1.msra.mxu0 0.0
          %5283 = vmatprep.subr.mxu0 0.0
          %5284 = vmatpush1.msra.mxu0 0.0
          %5285 = vmatprep.subr.mxu0 0.0
          %5286 = vmatpush1.msra.mxu0 0.0
          %5287 = vmatprep.subr.mxu0 0.0
          %5288 = vmatpush1.msra.mxu0 0.0
          %5289 = vmatprep.subr.mxu0 0.0
          %5290 = vmatpush1.msra.mxu0 0.0
          %5291 = vmatprep.subr.mxu0 0.0
          %5292 = vmatpush1.msra.mxu0 0.0
          %5293 = vmatprep.subr.mxu0 0.0
          %5294 = vmatpush1.msra.mxu0 0.0
          %5295 = vmatprep.subr.mxu0 0.0
          %5296 = vmatpush1.msra.mxu0 0.0
          %5297 = vmatprep.subr.mxu0 0.0
          %5298 = vmatpush1.msra.mxu0 %v5269
          %5299 = vmatprep.subr.mxu0 0.0
          %5300 = vmatpush1.msra.mxu0 %v5263
          %5301 = vmatprep.subr.mxu0 0.0
          %5302 = vmatpush1.msra.mxu0 %v5262
          %5303 = vmatprep.subr.mxu0 0.0
          %5304 = vmatpush2.msra.mxu0 0.0
          %5305 = vmatprep.subr.mxu0 0.0
          %5306 = vmatpush2.msra.mxu0 0.0
          %5307 = vmatprep.subr.mxu0 0.0
          %5308 = vmatpush2.msra.mxu0 0.0
          %5309 = vmatprep.subr.mxu0 0.0
          %5310 = vmatpush2.msra.mxu0 0.0
          %5311 = vmatprep.subr.mxu0 0.0
          %5312 = vmatpush2.msra.mxu0 0.0
          %5313 = vmatprep.subr.mxu0 0.0
          %5314 = vmatpush2.msra.mxu0 0.0
          %5315 = vmatprep.subr.mxu0 0.0
          %5316 = vmatpush2.msra.mxu0 0.0
          %5317 = vmatprep.subr.mxu0 0.0
          %5318 = vmatpush2.msra.mxu0 0.0
          %5319 = vmatprep.subr.mxu0 0.0
          %5320 = vmatpush2.msra.mxu0 0.0
          %5321 = vmatprep.subr.mxu0 0.0
          %5322 = vmatpush2.msra.mxu0 0.0
          %5323 = vmatprep.subr.mxu0 0.0
          %5324 = vmatpush2.msra.mxu0 0.0
          %5325 = vmatprep.subr.mxu0 0.0
          %5326 = vmatpush2.msra.mxu0 0.0
          %5327 = vmatprep.subr.mxu0 0.0
          %5328 = vmatpush2.msra.mxu0 0.0
          %5329 = vmatprep.subr.mxu0 0.0
          %5330 = vmatpush2.msra.mxu0 0.0
          %5331 = vmatprep.subr.mxu0 0.0
          %5332 = vmatpush2.msra.mxu0 0.0
          %5333 = vmatprep.subr.mxu0 0.0
          %5334 = vmatpush2.msra.mxu0 0.0
          %5335 = vmatprep.mubr.f32.mxu0 0.0
          %5336 = vmatmul.mubr.f32.gmra.mxu0 %v5266
          %v5337 = vpop.f32.mrf.mxu0
          %v5338 = vadd.f32 0.0, %v5337
          %v5339 = vpop.f32.mrf.mxu0
          %5340 = vdwg.mxu0
          %vm5341 = vcmask 287744
          %5342 = vst.msk [vmem:[#allocation4] sm:$0x3] %vm5341, %v5338
        $region124: #{tpu_custom_call.1} parent=107 // pred_fallthru
          _
        // Predicated region
        $region125: #{tpu_custom_call.1} parent=107 // pred_check
          %p5343 = pneg %p576
        $region126: #{tpu_custom_call.1} parent=107 // pred_check_branch
          %5345 = sbr.rel (%p5343) target = $region128
        $region127: #{tpu_custom_call.1} parent=107 // pred_region
          %s5347 = ssub.s32 32, 32
          %5348 = vsyncadd [#allocation5], %s5347
          %s5350 = sshll.u32 [#allocation4], 4
          %s5351 = int_to_ptr.vmem [resolvable:$true] %s5350
          %5353 = dma.vmem_to_hbm [thread:$0]  %s5351, 32, %s22, [#allocation5]
        $region128: #{tpu_custom_call.1} parent=107 // pred_fallthru
          _
        // Predicated region
        $region129: #{tpu_custom_call.1} parent=107 // pred_check
          %p5354 = pneg %p576
        $region130: #{tpu_custom_call.1} parent=107 // pred_check_branch
          %5356 = sbr.rel (%p5354) target = $region132
        $region131: #{tpu_custom_call.1} parent=107 // pred_region
          %5357 = dma.done [#allocation5], 32
        $region132: #{tpu_custom_call.1} parent=107 // pred_fallthru
          _
      $region108: #{tpu_custom_call.1} parent=5 // pred_fallthru
        _
      %p5358 = scmp.le.s32.totalorder 2, %s29
      // Predicated region
      $region133: #{tpu_custom_call.1} parent=5 // pred_check
        %p5359 = pneg %p5358
      $region134: #{tpu_custom_call.1} parent=5 // pred_check_branch
        %5361 = sbr.rel (%p5359) target = $region136
      $region135: #{tpu_custom_call.1} parent=5 // pred_region
        %s5362 = ssub.s32 %s29, 2
      $region136: #{tpu_custom_call.1} parent=5 // pred_fallthru
        _
    $region6: #{tpu_custom_call.1} parent=1 // loop_footer
      %s33 = sadd.s32 1, %s29
    $region7: #{tpu_custom_call.1} parent=1 // loop_footer_branch
      %28 = sbr.rel target = $region3
    $region8: #{tpu_custom_call.1} parent=1 // loop_exit
      _
    %5363 = vsyncpa [#allocation5], 1
    %s5364 = scalar_lea.sflag [#allocation5], 1
    %5365 = vsyncpa %s5364, 1

</llo_original>
